<compile_context>
chip_gen: v7x
topology: tpu7x:2x2x1
jax: 0.10.0
libtpu: 0.0.40
codegen_flags: <defaults>
</compile_context>

<pallas_src>
import functools

import jax
import jax.numpy as jnp
from jax.experimental import pallas as pl
from jax.experimental.pallas import tpu as pltpu


# ------------------------------ fused kernel --------------------------------

def _fused_conv_block_kernel(*refs, kh, kw, stride, ho, wo, hq, wq,
                             cin, cout, rate, apply_dropout):
    if apply_dropout:
        seed_ref, x_ref, w_ref, b_ref, out_ref, y_scr = refs
    else:
        x_ref, w_ref, b_ref, out_ref, y_scr = refs
        seed_ref = None

    # --- Conv as a sum over KH*KW taps (no im2col in HBM) -------------------
    # x_ref: (Hp, Wp, Cin) padded NHWC image, w_ref: (KH*KW, Cin, Cout).
    acc = jnp.zeros((ho * wo, cout), jnp.float32)
    for t in range(kh * kw):
        i, j = t // kw, t % kw
        if stride == 1:
            tap = x_ref[i:i + ho, j:j + wo, :]                  # (Ho, Wo, Cin)
        else:
            # TODO(synk): stride > 1 path uses strided ref reads.
            tap = x_ref[pl.ds(i, ho, stride), pl.ds(j, wo, stride), :]
        acc += jnp.dot(tap.reshape(ho * wo, cin), w_ref[t],
                       preferred_element_type=jnp.float32)

    # --- bias + ReLU (f32 epilogue) ------------------------------------------
    y = jnp.maximum(acc + b_ref[...], 0.0)                      # (Ho*Wo, Cout)

    # --- MaxPool2d(2): W-pool via strided VMEM reads, H-pool via reshape -----
    y_scr[...] = y.reshape(ho, wo, cout)
    z = jnp.maximum(y_scr[:, pl.ds(0, wq, 2), :],               # even columns
                    y_scr[:, pl.ds(1, wq, 2), :])               # odd  columns
    if ho != 2 * hq:                                            # odd Ho: drop last row
        z = z[:2 * hq]
    z4 = z.reshape(hq, 2, wq, cout)
    pooled = jnp.maximum(z4[:, 0], z4[:, 1])                    # (Hq, Wq, Cout)

    # --- Dropout (inverted, TPU hardware PRNG), only when training -----------
    if apply_dropout:
        pltpu.prng_seed(seed_ref[0] + pl.program_id(0))         # per-tile stream
        bits = pltpu.prng_random_bits(pooled.shape)
        u = (pltpu.bitcast(bits, jnp.uint32) >> jnp.uint32(9)).astype(jnp.float32)
        u = u * (1.0 / float(1 << 23))                          # uniform [0, 1)
        keep = u >= jnp.float32(rate)
        pooled = jnp.where(keep, pooled * jnp.float32(1.0 / (1.0 - rate)), 0.0)

    out_ref[...] = pooled.astype(out_ref.dtype)


# -------------------------------- wrapper ------------------------------------

def conv_block_forward(x_nchw, weight, bias, *, stride, padding,
                       dropout=0.0, train=False, seed=0):
    """Equivalent of ConvBlock.forward.  x_nchw: (N, Cin, H, W) float32."""
    N, Cin, H, W = x_nchw.shape
    Cout, _, KH, KW = weight.shape

    # NCHW -> NHWC + spatial padding (cheap XLA glue).
    x = jnp.transpose(x_nchw, (0, 2, 3, 1))
    x = jnp.pad(x, ((0, 0), (padding, padding), (padding, padding), (0, 0)))
    Hp, Wp = x.shape[1], x.shape[2]
    Ho = (Hp - KH) // stride + 1
    Wo = (Wp - KW) // stride + 1
    Hq, Wq = Ho // 2, Wo // 2

    # PyTorch weight (Cout, Cin, KH, KW) -> (KH*KW, Cin, Cout).
    w = jnp.transpose(weight, (2, 3, 1, 0)).reshape(KH * KW, Cin, Cout)
    b = bias.reshape(1, Cout)

    apply_dropout = (dropout != 0.0) and train

    kernel = functools.partial(
        _fused_conv_block_kernel, kh=KH, kw=KW, stride=stride,
        ho=Ho, wo=Wo, hq=Hq, wq=Wq, cin=Cin, cout=Cout,
        rate=float(dropout), apply_dropout=apply_dropout)

    in_specs = [
        # one padded image per grid step (batch dim squeezed)
        pl.BlockSpec((None, Hp, Wp, Cin), lambda n, *_: (n, 0, 0, 0)),
        # weights / bias: tiny, fully resident every step
        pl.BlockSpec((KH * KW, Cin, Cout), lambda n, *_: (0, 0, 0)),
        pl.BlockSpec((1, Cout), lambda n, *_: (0, 0)),
    ]
    out_spec = pl.BlockSpec((None, Hq, Wq, Cout), lambda n, *_: (n, 0, 0, 0))

    grid_spec = pltpu.PrefetchScalarGridSpec(
        num_scalar_prefetch=1 if apply_dropout else 0,
        grid=(N,),
        in_specs=in_specs,
        out_specs=out_spec,
        scratch_shapes=[pltpu.VMEM((Ho, Wo, Cout), jnp.float32)],
    )

    flops = 2 * N * Ho * Wo * KH * KW * Cin * Cout
    bytes_accessed = 4 * (x.size + w.size + b.size + N * Hq * Wq * Cout)
    cost = pl.CostEstimate(flops=flops, transcendentals=0,
                           bytes_accessed=bytes_accessed)

    call = pl.pallas_call(
        kernel,
        out_shape=jax.ShapeDtypeStruct((N, Hq, Wq, Cout), jnp.float32),
        grid_spec=grid_spec,
        compiler_params=pltpu.CompilerParams(
            dimension_semantics=("parallel",)),   # v7x: shard batch over 2 TCs
        cost_estimate=cost,
    )

    if apply_dropout:
        seed_arr = jnp.array([seed], dtype=jnp.int32)
        out_nhwc = call(seed_arr, x, w, b)
    else:
        out_nhwc = call(x, w, b)

    return jnp.transpose(out_nhwc, (0, 3, 1, 2))            # back to NCHW


# ------------------------------ reference -----------------------------------

def _reference(x_nchw, weight, bias, stride, padding):
    y = jax.lax.conv_general_dilated(
        x_nchw, weight, window_strides=(stride, stride),
        padding=[(padding, padding), (padding, padding)],
        dimension_numbers=("NCHW", "OIHW", "NCHW"))
    y = y + bias.reshape(1, -1, 1, 1)
    y = jnp.maximum(y, 0.0)
    y = jax.lax.reduce_window(y, -jnp.inf, jax.lax.max,
                              (1, 1, 2, 2), (1, 1, 2, 2), "VALID")
    return y


# --------------------------------- main --------------------------------------

if __name__ == "__main__":
    # ConvBlock(c_in=4, c_out=8, kernel_size=3, stride=1, padding=1, dropout=0)
    N, C_IN, H, W = 2, 4, 16, 16
    C_OUT, K, STRIDE, PAD, DROPOUT = 8, 3, 1, 1, 0.0

    key = jax.random.PRNGKey(0)
    kx, kw, kb = jax.random.split(key, 3)

    x = jax.random.normal(kx, (N, C_IN, H, W), dtype=jnp.float32)

    # Deterministic parameter init (PyTorch-style uniform(-1/sqrt(fan_in), ..)).
    fan_in = C_IN * K * K
    bound = 1.0 / (fan_in ** 0.5)
    weight = jax.random.uniform(kw, (C_OUT, C_IN, K, K),
                                minval=-bound, maxval=bound, dtype=jnp.float32)
    bias = jax.random.uniform(kb, (C_OUT,),
                              minval=-bound, maxval=bound, dtype=jnp.float32)

    out = conv_block_forward(x, weight, bias, stride=STRIDE, padding=PAD,
                             dropout=DROPOUT, train=False)
    out = jax.block_until_ready(out)

    ref = _reference(x, weight, bias, STRIDE, PAD)
    assert out.shape == ref.shape == (N, C_OUT, H // 2, W // 2), out.shape
    assert jnp.allclose(out, ref, rtol=1e-4, atol=1e-4), \
        float(jnp.max(jnp.abs(out - ref)))

    print("KERNEL_OK")
</pallas_src>

<mosaic_0001>
module attributes {stable_mosaic.version = 11 : i64} {
  func.func @_fused_conv_block_kernel(%arg0: i32, %arg1: memref<1x18x18x4xf32, #tpu.memory_space<vmem>>, %arg2: memref<9x4x8xf32, #tpu.memory_space<vmem>>, %arg3: memref<1x8xf32, #tpu.memory_space<vmem>>, %arg4: memref<1x8x8x8xf32, #tpu.memory_space<vmem>>, %arg5: memref<16x16x8xf32, #tpu.memory_space<vmem>>) attributes {dimension_semantics = [#tpu.dimension_semantics<parallel>], iteration_bounds = array<i64: 2>, scalar_prefetch = 0 : i64, scratch_operands = 1 : i64, tpu.core_type = #tpu.core_type<tc>, window_params = [{transform_indices = @transform_0, window_bounds = array<i64: 1, 18, 18, 4>}, {pipeline_mode = #tpu.pipeline_mode<synchronous>, transform_indices = @transform_1, window_bounds = array<i64: 9, 4, 8>}, {pipeline_mode = #tpu.pipeline_mode<synchronous>, transform_indices = @transform_2, window_bounds = array<i64: 1, 8>}, {transform_indices = @transform_3, window_bounds = array<i64: 1, 8, 8, 8>}]} {
    %cst = arith.constant 0.000000e+00 : f32
    %0 = vector.broadcast %cst : f32 to vector<256x8xf32>
    %c0 = arith.constant 0 : index
    %c0_0 = arith.constant 0 : index
    %c0_1 = arith.constant 0 : index
    %c0_2 = arith.constant 0 : index
    %1 = vector.load %arg1[%c0, %c0_0, %c0_1, %c0_2] : memref<1x18x18x4xf32, #tpu.memory_space<vmem>>, vector<1x16x16x4xf32>
    %2 = vector.shape_cast %1 : vector<1x16x16x4xf32> to vector<16x16x4xf32>
    %3 = vector.shape_cast %2 : vector<16x16x4xf32> to vector<256x4xf32>
    %c0_3 = arith.constant 0 : index
    %c0_4 = arith.constant 0 : index
    %c0_5 = arith.constant 0 : index
    %4 = vector.load %arg2[%c0_3, %c0_4, %c0_5] : memref<9x4x8xf32, #tpu.memory_space<vmem>>, vector<1x4x8xf32>
    %5 = vector.shape_cast %4 : vector<1x4x8xf32> to vector<4x8xf32>
    %cst_6 = arith.constant dense<0.000000e+00> : vector<256x8xf32>
    %6 = tpu.matmul %3, %5, %cst_6 {dimension_numbers = #tpu.dot_dimension_numbers<[1], [0], [0], [1], [0, 0, 1, 1], [], []>} : vector<256x4xf32>, vector<4x8xf32>, vector<256x8xf32> -> vector<256x8xf32>
    %7 = arith.addf %0, %6 : vector<256x8xf32>
    %c0_7 = arith.constant 0 : index
    %c0_8 = arith.constant 0 : index
    %c1 = arith.constant 1 : index
    %c0_9 = arith.constant 0 : index
    %8 = vector.load %arg1[%c0_7, %c0_8, %c1, %c0_9] : memref<1x18x18x4xf32, #tpu.memory_space<vmem>>, vector<1x16x16x4xf32>
    %9 = vector.shape_cast %8 : vector<1x16x16x4xf32> to vector<16x16x4xf32>
    %10 = vector.shape_cast %9 : vector<16x16x4xf32> to vector<256x4xf32>
    %c1_10 = arith.constant 1 : index
    %c0_11 = arith.constant 0 : index
    %c0_12 = arith.constant 0 : index
    %11 = vector.load %arg2[%c1_10, %c0_11, %c0_12] : memref<9x4x8xf32, #tpu.memory_space<vmem>>, vector<1x4x8xf32>
    %12 = vector.shape_cast %11 : vector<1x4x8xf32> to vector<4x8xf32>
    %cst_13 = arith.constant dense<0.000000e+00> : vector<256x8xf32>
    %13 = tpu.matmul %10, %12, %cst_13 {dimension_numbers = #tpu.dot_dimension_numbers<[1], [0], [0], [1], [0, 0, 1, 1], [], []>} : vector<256x4xf32>, vector<4x8xf32>, vector<256x8xf32> -> vector<256x8xf32>
    %14 = arith.addf %7, %13 : vector<256x8xf32>
    %c0_14 = arith.constant 0 : index
    %c0_15 = arith.constant 0 : index
    %c2 = arith.constant 2 : index
    %c0_16 = arith.constant 0 : index
    %15 = vector.load %arg1[%c0_14, %c0_15, %c2, %c0_16] : memref<1x18x18x4xf32, #tpu.memory_space<vmem>>, vector<1x16x16x4xf32>
    %16 = vector.shape_cast %15 : vector<1x16x16x4xf32> to vector<16x16x4xf32>
    %17 = vector.shape_cast %16 : vector<16x16x4xf32> to vector<256x4xf32>
    %c2_17 = arith.constant 2 : index
    %c0_18 = arith.constant 0 : index
    %c0_19 = arith.constant 0 : index
    %18 = vector.load %arg2[%c2_17, %c0_18, %c0_19] : memref<9x4x8xf32, #tpu.memory_space<vmem>>, vector<1x4x8xf32>
    %19 = vector.shape_cast %18 : vector<1x4x8xf32> to vector<4x8xf32>
    %cst_20 = arith.constant dense<0.000000e+00> : vector<256x8xf32>
    %20 = tpu.matmul %17, %19, %cst_20 {dimension_numbers = #tpu.dot_dimension_numbers<[1], [0], [0], [1], [0, 0, 1, 1], [], []>} : vector<256x4xf32>, vector<4x8xf32>, vector<256x8xf32> -> vector<256x8xf32>
    %21 = arith.addf %14, %20 : vector<256x8xf32>
    %c0_21 = arith.constant 0 : index
    %c1_22 = arith.constant 1 : index
    %c0_23 = arith.constant 0 : index
    %c0_24 = arith.constant 0 : index
    %22 = vector.load %arg1[%c0_21, %c1_22, %c0_23, %c0_24] : memref<1x18x18x4xf32, #tpu.memory_space<vmem>>, vector<1x16x16x4xf32>
    %23 = vector.shape_cast %22 : vector<1x16x16x4xf32> to vector<16x16x4xf32>
    %24 = vector.shape_cast %23 : vector<16x16x4xf32> to vector<256x4xf32>
    %c3 = arith.constant 3 : index
    %c0_25 = arith.constant 0 : index
    %c0_26 = arith.constant 0 : index
    %25 = vector.load %arg2[%c3, %c0_25, %c0_26] : memref<9x4x8xf32, #tpu.memory_space<vmem>>, vector<1x4x8xf32>
    %26 = vector.shape_cast %25 : vector<1x4x8xf32> to vector<4x8xf32>
    %cst_27 = arith.constant dense<0.000000e+00> : vector<256x8xf32>
    %27 = tpu.matmul %24, %26, %cst_27 {dimension_numbers = #tpu.dot_dimension_numbers<[1], [0], [0], [1], [0, 0, 1, 1], [], []>} : vector<256x4xf32>, vector<4x8xf32>, vector<256x8xf32> -> vector<256x8xf32>
    %28 = arith.addf %21, %27 : vector<256x8xf32>
    %c0_28 = arith.constant 0 : index
    %c1_29 = arith.constant 1 : index
    %c1_30 = arith.constant 1 : index
    %c0_31 = arith.constant 0 : index
    %29 = vector.load %arg1[%c0_28, %c1_29, %c1_30, %c0_31] : memref<1x18x18x4xf32, #tpu.memory_space<vmem>>, vector<1x16x16x4xf32>
    %30 = vector.shape_cast %29 : vector<1x16x16x4xf32> to vector<16x16x4xf32>
    %31 = vector.shape_cast %30 : vector<16x16x4xf32> to vector<256x4xf32>
    %c4 = arith.constant 4 : index
    %c0_32 = arith.constant 0 : index
    %c0_33 = arith.constant 0 : index
    %32 = vector.load %arg2[%c4, %c0_32, %c0_33] : memref<9x4x8xf32, #tpu.memory_space<vmem>>, vector<1x4x8xf32>
    %33 = vector.shape_cast %32 : vector<1x4x8xf32> to vector<4x8xf32>
    %cst_34 = arith.constant dense<0.000000e+00> : vector<256x8xf32>
    %34 = tpu.matmul %31, %33, %cst_34 {dimension_numbers = #tpu.dot_dimension_numbers<[1], [0], [0], [1], [0, 0, 1, 1], [], []>} : vector<256x4xf32>, vector<4x8xf32>, vector<256x8xf32> -> vector<256x8xf32>
    %35 = arith.addf %28, %34 : vector<256x8xf32>
    %c0_35 = arith.constant 0 : index
    %c1_36 = arith.constant 1 : index
    %c2_37 = arith.constant 2 : index
    %c0_38 = arith.constant 0 : index
    %36 = vector.load %arg1[%c0_35, %c1_36, %c2_37, %c0_38] : memref<1x18x18x4xf32, #tpu.memory_space<vmem>>, vector<1x16x16x4xf32>
    %37 = vector.shape_cast %36 : vector<1x16x16x4xf32> to vector<16x16x4xf32>
    %38 = vector.shape_cast %37 : vector<16x16x4xf32> to vector<256x4xf32>
    %c5 = arith.constant 5 : index
    %c0_39 = arith.constant 0 : index
    %c0_40 = arith.constant 0 : index
    %39 = vector.load %arg2[%c5, %c0_39, %c0_40] : memref<9x4x8xf32, #tpu.memory_space<vmem>>, vector<1x4x8xf32>
    %40 = vector.shape_cast %39 : vector<1x4x8xf32> to vector<4x8xf32>
    %cst_41 = arith.constant dense<0.000000e+00> : vector<256x8xf32>
    %41 = tpu.matmul %38, %40, %cst_41 {dimension_numbers = #tpu.dot_dimension_numbers<[1], [0], [0], [1], [0, 0, 1, 1], [], []>} : vector<256x4xf32>, vector<4x8xf32>, vector<256x8xf32> -> vector<256x8xf32>
    %42 = arith.addf %35, %41 : vector<256x8xf32>
    %c0_42 = arith.constant 0 : index
    %c2_43 = arith.constant 2 : index
    %c0_44 = arith.constant 0 : index
    %c0_45 = arith.constant 0 : index
    %43 = vector.load %arg1[%c0_42, %c2_43, %c0_44, %c0_45] : memref<1x18x18x4xf32, #tpu.memory_space<vmem>>, vector<1x16x16x4xf32>
    %44 = vector.shape_cast %43 : vector<1x16x16x4xf32> to vector<16x16x4xf32>
    %45 = vector.shape_cast %44 : vector<16x16x4xf32> to vector<256x4xf32>
    %c6 = arith.constant 6 : index
    %c0_46 = arith.constant 0 : index
    %c0_47 = arith.constant 0 : index
    %46 = vector.load %arg2[%c6, %c0_46, %c0_47] : memref<9x4x8xf32, #tpu.memory_space<vmem>>, vector<1x4x8xf32>
    %47 = vector.shape_cast %46 : vector<1x4x8xf32> to vector<4x8xf32>
    %cst_48 = arith.constant dense<0.000000e+00> : vector<256x8xf32>
    %48 = tpu.matmul %45, %47, %cst_48 {dimension_numbers = #tpu.dot_dimension_numbers<[1], [0], [0], [1], [0, 0, 1, 1], [], []>} : vector<256x4xf32>, vector<4x8xf32>, vector<256x8xf32> -> vector<256x8xf32>
    %49 = arith.addf %42, %48 : vector<256x8xf32>
    %c0_49 = arith.constant 0 : index
    %c2_50 = arith.constant 2 : index
    %c1_51 = arith.constant 1 : index
    %c0_52 = arith.constant 0 : index
    %50 = vector.load %arg1[%c0_49, %c2_50, %c1_51, %c0_52] : memref<1x18x18x4xf32, #tpu.memory_space<vmem>>, vector<1x16x16x4xf32>
    %51 = vector.shape_cast %50 : vector<1x16x16x4xf32> to vector<16x16x4xf32>
    %52 = vector.shape_cast %51 : vector<16x16x4xf32> to vector<256x4xf32>
    %c7 = arith.constant 7 : index
    %c0_53 = arith.constant 0 : index
    %c0_54 = arith.constant 0 : index
    %53 = vector.load %arg2[%c7, %c0_53, %c0_54] : memref<9x4x8xf32, #tpu.memory_space<vmem>>, vector<1x4x8xf32>
    %54 = vector.shape_cast %53 : vector<1x4x8xf32> to vector<4x8xf32>
    %cst_55 = arith.constant dense<0.000000e+00> : vector<256x8xf32>
    %55 = tpu.matmul %52, %54, %cst_55 {dimension_numbers = #tpu.dot_dimension_numbers<[1], [0], [0], [1], [0, 0, 1, 1], [], []>} : vector<256x4xf32>, vector<4x8xf32>, vector<256x8xf32> -> vector<256x8xf32>
    %56 = arith.addf %49, %55 : vector<256x8xf32>
    %c0_56 = arith.constant 0 : index
    %c2_57 = arith.constant 2 : index
    %c2_58 = arith.constant 2 : index
    %c0_59 = arith.constant 0 : index
    %57 = vector.load %arg1[%c0_56, %c2_57, %c2_58, %c0_59] : memref<1x18x18x4xf32, #tpu.memory_space<vmem>>, vector<1x16x16x4xf32>
    %58 = vector.shape_cast %57 : vector<1x16x16x4xf32> to vector<16x16x4xf32>
    %59 = vector.shape_cast %58 : vector<16x16x4xf32> to vector<256x4xf32>
    %c8 = arith.constant 8 : index
    %c0_60 = arith.constant 0 : index
    %c0_61 = arith.constant 0 : index
    %60 = vector.load %arg2[%c8, %c0_60, %c0_61] : memref<9x4x8xf32, #tpu.memory_space<vmem>>, vector<1x4x8xf32>
    %61 = vector.shape_cast %60 : vector<1x4x8xf32> to vector<4x8xf32>
    %cst_62 = arith.constant dense<0.000000e+00> : vector<256x8xf32>
    %62 = tpu.matmul %59, %61, %cst_62 {dimension_numbers = #tpu.dot_dimension_numbers<[1], [0], [0], [1], [0, 0, 1, 1], [], []>} : vector<256x4xf32>, vector<4x8xf32>, vector<256x8xf32> -> vector<256x8xf32>
    %63 = arith.addf %56, %62 : vector<256x8xf32>
    %c0_63 = arith.constant 0 : index
    %c0_64 = arith.constant 0 : index
    %64 = vector.load %arg3[%c0_63, %c0_64] : memref<1x8xf32, #tpu.memory_space<vmem>>, vector<1x8xf32>
    %65 = vector.broadcast %64 : vector<1x8xf32> to vector<256x8xf32>
    %66 = arith.addf %63, %65 : vector<256x8xf32>
    %cst_65 = arith.constant 0.000000e+00 : f32
    %67 = vector.broadcast %cst_65 : f32 to vector<256x8xf32>
    %68 = arith.maximumf %66, %67 : vector<256x8xf32>
    %69 = vector.shape_cast %68 : vector<256x8xf32> to vector<16x16x8xf32>
    %c0_66 = arith.constant 0 : index
    %c0_67 = arith.constant 0 : index
    %c0_68 = arith.constant 0 : index
    %70 = vector.load %arg5[%c0_66, %c0_67, %c0_68] : memref<16x16x8xf32, #tpu.memory_space<vmem>>, vector<16x16x8xf32>
    tpu.vector_store %arg5[%c0_66, %c0_67, %c0_68], %69 {strides = array<i32>} : memref<16x16x8xf32, #tpu.memory_space<vmem>>, vector<16x16x8xf32>,
    %c0_69 = arith.constant 0 : index
    %c0_70 = arith.constant 0 : index
    %c0_71 = arith.constant 0 : index
    %71 = tpu.strided_load %arg5[%c0_69, %c0_70, %c0_71] {strides = array<i32: 1, 2, 1>} : memref<16x16x8xf32, #tpu.memory_space<vmem>>, vector<16x8x8xf32>
    %c0_72 = arith.constant 0 : index
    %c1_73 = arith.constant 1 : index
    %c0_74 = arith.constant 0 : index
    %72 = tpu.strided_load %arg5[%c0_72, %c1_73, %c0_74] {strides = array<i32: 1, 2, 1>} : memref<16x16x8xf32, #tpu.memory_space<vmem>>, vector<16x8x8xf32>
    %73 = arith.maximumf %71, %72 : vector<16x8x8xf32>
    %74 = vector.shape_cast %73 : vector<16x8x8xf32> to vector<8x2x8x8xf32>
    %75 = vector.extract_strided_slice %74 {offsets = [0, 0, 0, 0], sizes = [8, 1, 8, 8], strides = [1, 1, 1, 1]} : vector<8x2x8x8xf32> to vector<8x1x8x8xf32>
    %76 = vector.shape_cast %75 : vector<8x1x8x8xf32> to vector<8x8x8xf32>
    %77 = vector.extract_strided_slice %74 {offsets = [0, 1, 0, 0], sizes = [8, 1, 8, 8], strides = [1, 1, 1, 1]} : vector<8x2x8x8xf32> to vector<8x1x8x8xf32>
    %78 = vector.shape_cast %77 : vector<8x1x8x8xf32> to vector<8x8x8xf32>
    %79 = arith.maximumf %76, %78 : vector<8x8x8xf32>
    %c0_75 = arith.constant 0 : index
    %c0_76 = arith.constant 0 : index
    %c0_77 = arith.constant 0 : index
    %c0_78 = arith.constant 0 : index
    %80 = vector.load %arg4[%c0_75, %c0_76, %c0_77, %c0_78] : memref<1x8x8x8xf32, #tpu.memory_space<vmem>>, vector<1x8x8x8xf32>
    %81 = vector.shape_cast %80 : vector<1x8x8x8xf32> to vector<8x8x8xf32>
    %82 = vector.shape_cast %79 : vector<8x8x8xf32> to vector<1x8x8x8xf32>
    tpu.vector_store %arg4[%c0_75, %c0_76, %c0_77, %c0_78], %82 {strides = array<i32>} : memref<1x8x8x8xf32, #tpu.memory_space<vmem>>, vector<1x8x8x8xf32>,
    return
  }
  func.func @transform_0(%arg0: i32) -> (i32, i32, i32, i32) {
    %c0_i32 = arith.constant 0 : i32
    %c0_i32_0 = arith.constant 0 : i32
    %c0_i32_1 = arith.constant 0 : i32
    %c0_i32_2 = arith.constant 0 : i32
    return %arg0, %c0_i32, %c0_i32_0, %c0_i32_1 : i32, i32, i32, i32
  }
  func.func @transform_1(%arg0: i32) -> (i32, i32, i32) {
    %c0_i32 = arith.constant 0 : i32
    %c0_i32_0 = arith.constant 0 : i32
    %c0_i32_1 = arith.constant 0 : i32
    %c0_i32_2 = arith.constant 0 : i32
    return %c0_i32, %c0_i32_0, %c0_i32_1 : i32, i32, i32
  }
  func.func @transform_2(%arg0: i32) -> (i32, i32) {
    %c0_i32 = arith.constant 0 : i32
    %c0_i32_0 = arith.constant 0 : i32
    %c0_i32_1 = arith.constant 0 : i32
    return %c0_i32, %c0_i32_0 : i32, i32
  }
  func.func @transform_3(%arg0: i32) -> (i32, i32, i32, i32) {
    %c0_i32 = arith.constant 0 : i32
    %c0_i32_0 = arith.constant 0 : i32
    %c0_i32_1 = arith.constant 0 : i32
    %c0_i32_2 = arith.constant 0 : i32
    return %arg0, %c0_i32, %c0_i32_0, %c0_i32_1 : i32, i32, i32, i32
  }
}

</mosaic_0001>

<llo_original>
// kernel: tpu_custom_call.1
$region0: #{tpu_custom_call.1}
  #allocation0 [shape = 'u32[]', space=smem, size = 0x4, offset = 0x4, fixed_abs, tag = 'smem constant byte address 0x4 - core index']
  #allocation1 [shape = 'u32[144,128]{1,0:T(1,128)}', space=vmem, size = 0x12000, scoped, tag = 'internal scratch']
  #allocation2 [shape = 'f32[16,16,8]{2,1,0:T(8,128)}', space=vmem, size = 0x20000, scoped, tag = 'scratch operand']
  %s0 = inlined_call_operand.vmem [shape: f32[2,18,18,4], index: 0, kind: input, shape index: {}]
  %s1 = inlined_call_operand.vmem [shape: f32[9,4,8], index: 1, kind: input, shape index: {}]
  %s2 = inlined_call_operand.vmem [shape: f32[1,8], index: 2, kind: input, shape index: {}]
  %s3 = inlined_call_operand.hbm [shape: f32[2,8,8,8], index: 3, kind: output, shape index: {}]
  %s4 = sld [smem:[#allocation0]]
  $region45: #{tpu_custom_call.1} parent=0
    _
  %s6 = ssub.s32 1, %s4
  %s7 = scalar_select 0, %s6, %s4
  $region1: #{tpu_custom_call.1} parent=0
    #allocation3 [shape = 'u8[65536]{0}', space=vmem, size = 0x10000, scoped, tag = 'output window, operand 0']
    #allocation4 [shape = 's32[2]{0}', space=sflag, size = 0x8, scoped, tag = 'scoped memory for tpu_custom_call.1']
    %8 = vsyncpa [#allocation4], 0
    %s9 = scalar_lea.sflag [#allocation4], 1
    %10 = vsyncpa %s9, 0
    loop: start=0, step=1, limit=4
    $region2: #{tpu_custom_call.1} parent=1 // loop_pre_header
      _
    $region3: #{tpu_custom_call.1} parent=1 // loop_header
      %s12 = sphi 0, %s16
      %p13 = scmp.ge.s32.totalorder %s12, 4
      %s22 = sphi 0, %s24
      %s25 = sphi 0, %s22
      %s26 = sphi 0, %s25
      %s42 = sphi 0, %s26
      %s46 = sphi 0, %s46
      %s48 = sphi 0, %s46
      %s49 = sphi 0, %s48
      %s63 = sphi 0, %s49
      %s67 = sphi 0, %s67
      %s69 = sphi 0, %s67
      %s70 = sphi 0, %s69
      %s84 = sphi 0, %s70
      %s90 = sphi 0, %s92
      %s93 = sphi 0, %s90
      %s94 = sphi 0, %s93
      %s110 = sphi 0, %s94
    $region4: #{tpu_custom_call.1} parent=1 // loop_header_branch
      %15 = sbr.rel (%p13) target = $region8
    $region5: #{tpu_custom_call.1} parent=1 // loop_body
      %s17 = ssub.s32 %s12, 1
      %s18 = ssub.s32 %s12, 2
      %s19 = sadd.s32 %s12, 1
      %s20 = ssub.s32 %s12, %s19
      %p21 = scmp.eq.s32.totalorder %s20, 0
      %s23 = sadd.s32 %s22, 1
      %s24 = scalar_select %p21, %s22, %s23
      %p27 = pneg %p21
      %p28 = scmp.eq.s32.totalorder %s12, 1
      %p29 = por %p27, %p28
      %p30 = scmp.ne.s32.totalorder %s22, %s25
      %p31 = scmp.eq.s32.totalorder %s12, 0
      %p32 = por %p30, %p31
      %p33 = scmp.ne.s32.totalorder %s22, %s25
      %p34 = scmp.eq.s32.totalorder %s17, 1
      %p35 = por %p33, %p34
      %p36 = scmp.ne.s32.totalorder %s25, %s26
      %p37 = scmp.eq.s32.totalorder %s17, 0
      %p38 = por %p36, %p37
      %p39 = scmp.ne.s32.totalorder %s25, %s26
      %p40 = scmp.eq.s32.totalorder %s18, 1
      %p41 = por %p39, %p40
      %p43 = scmp.ne.s32.totalorder %s26, %s42
      %p44 = scmp.eq.s32.totalorder %s18, 0
      %p45 = por %p43, %p44
      %s47 = sadd.s32 %s46, 1
      %p50 = scmp.eq.s32.totalorder %s12, 1
      %p51 = scmp.ne.s32.totalorder %s46, %s48
      %p52 = scmp.eq.s32.totalorder %s12, 0
      %p53 = por %p51, %p52
      %p54 = scmp.ne.s32.totalorder %s46, %s48
      %p55 = scmp.eq.s32.totalorder %s17, 1
      %p56 = por %p54, %p55
      %p57 = scmp.ne.s32.totalorder %s48, %s49
      %p58 = scmp.eq.s32.totalorder %s17, 0
      %p59 = por %p57, %p58
      %p60 = scmp.ne.s32.totalorder %s48, %s49
      %p61 = scmp.eq.s32.totalorder %s18, 1
      %p62 = por %p60, %p61
      %p64 = scmp.ne.s32.totalorder %s49, %s63
      %p65 = scmp.eq.s32.totalorder %s18, 0
      %p66 = por %p64, %p65
      %s68 = sadd.s32 %s67, 1
      %p71 = scmp.eq.s32.totalorder %s12, 1
      %p72 = scmp.ne.s32.totalorder %s67, %s69
      %p73 = scmp.eq.s32.totalorder %s12, 0
      %p74 = por %p72, %p73
      %p75 = scmp.ne.s32.totalorder %s67, %s69
      %p76 = scmp.eq.s32.totalorder %s17, 1
      %p77 = por %p75, %p76
      %p78 = scmp.ne.s32.totalorder %s69, %s70
      %p79 = scmp.eq.s32.totalorder %s17, 0
      %p80 = por %p78, %p79
      %p81 = scmp.ne.s32.totalorder %s69, %s70
      %p82 = scmp.eq.s32.totalorder %s18, 1
      %p83 = por %p81, %p82
      %p85 = scmp.ne.s32.totalorder %s70, %s84
      %p86 = scmp.eq.s32.totalorder %s18, 0
      %p87 = por %p85, %p86
      %s88 = ssub.s32 %s12, %s19
      %p89 = scmp.eq.s32.totalorder %s88, 0
      %s91 = sadd.s32 %s90, 1
      %s92 = scalar_select %p89, %s90, %s91
      %p95 = pneg %p89
      %p96 = scmp.eq.s32.totalorder %s12, 1
      %p97 = por %p95, %p96
      %p98 = scmp.ne.s32.totalorder %s90, %s93
      %p99 = scmp.eq.s32.totalorder %s12, 0
      %p100 = por %p98, %p99
      %p101 = scmp.ne.s32.totalorder %s90, %s93
      %p102 = scmp.eq.s32.totalorder %s17, 1
      %p103 = por %p101, %p102
      %p104 = scmp.ne.s32.totalorder %s93, %s94
      %p105 = scmp.eq.s32.totalorder %s17, 0
      %p106 = por %p104, %p105
      %p107 = scmp.ne.s32.totalorder %s93, %s94
      %p108 = scmp.eq.s32.totalorder %s18, 1
      %p109 = por %p107, %p108
      %p111 = scmp.ne.s32.totalorder %s94, %s110
      %p112 = scmp.eq.s32.totalorder %s18, 0
      %p113 = por %p111, %p112
      %p114 = scmp.le.s32.totalorder 1, %s12
      %p115 = scmp.lt.s32.totalorder %s12, 3
      %p116 = pnand %p114, %p115
      %p117 = pneg %p116
      // Predicated region
      $region9: #{tpu_custom_call.1} parent=5 // pred_check
        _
      $region10: #{tpu_custom_call.1} parent=5 // pred_check_branch
        %119 = sbr.rel (%p116) target = $region12
      $region11: #{tpu_custom_call.1} parent=5 // pred_region
        %s120 = ssub.s32 %s12, 1
        // Predicated region
        $region13: #{tpu_custom_call.1} parent=11 // pred_check
          %p121 = pneg %p59
        $region14: #{tpu_custom_call.1} parent=11 // pred_check_branch
          %123 = sbr.rel (%p121) target = $region16
        $region15: #{tpu_custom_call.1} parent=11 // pred_region
          _
        $region16: #{tpu_custom_call.1} parent=11 // pred_fallthru
          _
        // Predicated region
        $region17: #{tpu_custom_call.1} parent=11 // pred_check
          %p124 = pneg %p80
        $region18: #{tpu_custom_call.1} parent=11 // pred_check_branch
          %126 = sbr.rel (%p124) target = $region20
        $region19: #{tpu_custom_call.1} parent=11 // pred_region
          _
        $region20: #{tpu_custom_call.1} parent=11 // pred_fallthru
          _
      $region12: #{tpu_custom_call.1} parent=5 // pred_fallthru
        _
      %p127 = scmp.lt.s32.totalorder %s12, 2
      // Predicated region
      $region21: #{tpu_custom_call.1} parent=5 // pred_check
        %p128 = pneg %p127
      $region22: #{tpu_custom_call.1} parent=5 // pred_check_branch
        %130 = sbr.rel (%p128) target = $region24
      $region23: #{tpu_custom_call.1} parent=5 // pred_region
        // Predicated region
        $region25: #{tpu_custom_call.1} parent=23 // pred_check
          %p131 = pneg %p32
        $region26: #{tpu_custom_call.1} parent=23 // pred_check_branch
          %133 = sbr.rel (%p131) target = $region28
        $region27: #{tpu_custom_call.1} parent=23 // pred_region
          %p134 = scmp.lt.s32.totalorder %s12, 1
          %s135 = scalar_select %p134, %s12, 1
          %s136 = smul.addr %s135, 54
          %s137 = smul.addr %s136, 8
          %s138 = scalar_lea.vmem %s0, %s137
        $region28: #{tpu_custom_call.1} parent=23 // pred_fallthru
          _
      $region24: #{tpu_custom_call.1} parent=5 // pred_fallthru
        _
      %p139 = scmp.le.s32.totalorder 1, %s12
      %p140 = scmp.lt.s32.totalorder %s12, 3
      %p141 = pnand %p139, %p140
      %p142 = pneg %p141
      // Predicated region
      $region29: #{tpu_custom_call.1} parent=5 // pred_check
        _
      $region30: #{tpu_custom_call.1} parent=5 // pred_check_branch
        %144 = sbr.rel (%p141) target = $region32
      $region31: #{tpu_custom_call.1} parent=5 // pred_region
        %s145 = ssub.s32 %s12, 1
        %p146 = scmp.lt.s32.totalorder %s17, 1
        %s147 = scalar_select %p146, %s17, 1
        %s148 = smul.addr %s147, 54
        %s149 = smul.addr %s148, 8
        %s150 = scalar_lea.vmem %s0, %s149
        %p151 = pneg %p38
        %p152 = pneg %p35
        %p153 = pneg %p59
        %p154 = pneg %p56
        %p155 = pneg %p80
        %p156 = pneg %p77
        %p157 = pneg %p106
        %p158 = pneg %p103
        %s159 = sand.u32 %s93, 1
        %s160 = scalar_lea.sflag [#allocation4], %s159
        %s161 = sand.u32 %s93, 1
        %s162 = smul.addr %s161, 64
        %s163 = scalar_lea.vmem [#allocation3], %s162
        %p164 = scmp.lt.s32.totalorder %s17, 1
        %s165 = scalar_select %p164, %s17, 1
        %s166 = smul.addr %s165, 54
        %s167 = smul.addr %s166, 8
        %s168 = scalar_lea.vmem %s0, %s167
        %v169 = vld [vmem:[%s168] sm:$0xff]
        %v170 = vld [vmem:[%s168 + $0x8] sm:$0xff]
        %v171 = vld [vmem:[%s168 + $0x18] sm:$0xff]
        %v172 = vld [vmem:[%s168 + $0x20] sm:$0xff]
        %v173 = vld [vmem:[%s168 + $0x30] sm:$0xff]
        %v174 = vld [vmem:[%s168 + $0x38] sm:$0xff]
        %v175 = vld [vmem:[%s168 + $0x48] sm:$0xff]
        %v176 = vld [vmem:[%s168 + $0x50] sm:$0xff]
        %v177 = vld [vmem:[%s168 + $0x60] sm:$0xff]
        %v178 = vld [vmem:[%s168 + $0x68] sm:$0xff]
        %v179 = vld [vmem:[%s168 + $0x78] sm:$0xff]
        %v180 = vld [vmem:[%s168 + $0x80] sm:$0xff]
        %v181 = vld [vmem:[%s168 + $0x90] sm:$0xff]
        %v182 = vld [vmem:[%s168 + $0x98] sm:$0xff]
        %v183 = vld [vmem:[%s168 + $0xa8] sm:$0xff]
        %v184 = vld [vmem:[%s168 + $0xb0] sm:$0xff]
        %v185 = vld [vmem:[%s168 + $0xc0] sm:$0xff]
        %v186 = vld [vmem:[%s168 + $0xc8] sm:$0xff]
        %v187 = vld [vmem:[%s168 + $0xd8] sm:$0xff]
        %v188 = vld [vmem:[%s168 + $0xe0] sm:$0xff]
        %v189 = vld [vmem:[%s168 + $0xf0] sm:$0xff]
        %v190 = vld [vmem:[%s168 + $0xf8] sm:$0xff]
        %v191 = vld [vmem:[%s168 + $0x108] sm:$0xff]
        %v192 = vld [vmem:[%s168 + $0x110] sm:$0xff]
        %v193 = vld [vmem:[%s168 + $0x120] sm:$0xff]
        %v194 = vld [vmem:[%s168 + $0x128] sm:$0xff]
        %v195 = vld [vmem:[%s168 + $0x138] sm:$0xff]
        %v196 = vld [vmem:[%s168 + $0x140] sm:$0xff]
        %v197 = vld [vmem:[%s168 + $0x150] sm:$0xff]
        %v198 = vld [vmem:[%s168 + $0x158] sm:$0xff]
        %v199 = vld [vmem:[%s168 + $0x168] sm:$0xff]
        %v200 = vld [vmem:[%s168 + $0x170] sm:$0xff]
        %v201 = vld [vmem:[%s1] sm:$0xf]
        %v202 = vld [vmem:[%s168 + $0x1] sm:$0xff]
        %v203 = vld [vmem:[%s168 + $0x9] sm:$0xff]
        %v204 = vld [vmem:[%s168 + $0x19] sm:$0xff]
        %v205 = vld [vmem:[%s168 + $0x21] sm:$0xff]
        %v206 = vld [vmem:[%s168 + $0x31] sm:$0xff]
        %v207 = vld [vmem:[%s168 + $0x39] sm:$0xff]
        %v208 = vld [vmem:[%s168 + $0x49] sm:$0xff]
        %v209 = vld [vmem:[%s168 + $0x51] sm:$0xff]
        %v210 = vld [vmem:[%s168 + $0x61] sm:$0xff]
        %v211 = vld [vmem:[%s168 + $0x69] sm:$0xff]
        %v212 = vld [vmem:[%s168 + $0x79] sm:$0xff]
        %v213 = vld [vmem:[%s168 + $0x81] sm:$0xff]
        %v214 = vld [vmem:[%s168 + $0x91] sm:$0xff]
        %v215 = vld [vmem:[%s168 + $0x99] sm:$0xff]
        %v216 = vld [vmem:[%s168 + $0xa9] sm:$0xff]
        %v217 = vld [vmem:[%s168 + $0xb1] sm:$0xff]
        %v218 = vld [vmem:[%s168 + $0xc1] sm:$0xff]
        %v219 = vld [vmem:[%s168 + $0xc9] sm:$0xff]
        %v220 = vld [vmem:[%s168 + $0xd9] sm:$0xff]
        %v221 = vld [vmem:[%s168 + $0xe1] sm:$0xff]
        %v222 = vld [vmem:[%s168 + $0xf1] sm:$0xff]
        %v223 = vld [vmem:[%s168 + $0xf9] sm:$0xff]
        %v224 = vld [vmem:[%s168 + $0x109] sm:$0xff]
        %v225 = vld [vmem:[%s168 + $0x111] sm:$0xff]
        %v226 = vld [vmem:[%s168 + $0x121] sm:$0xff]
        %v227 = vld [vmem:[%s168 + $0x129] sm:$0xff]
        %v228 = vld [vmem:[%s168 + $0x139] sm:$0xff]
        %v229 = vld [vmem:[%s168 + $0x141] sm:$0xff]
        %v230 = vld [vmem:[%s168 + $0x151] sm:$0xff]
        %v231 = vld [vmem:[%s168 + $0x159] sm:$0xff]
        %v232 = vld [vmem:[%s168 + $0x169] sm:$0xff]
        %v233 = vld [vmem:[%s168 + $0x171] sm:$0xff]
        %s234 = scalar_lea.vmem %s1, 4
        %v235 = vld [vmem:[%s234] sm:$0xf]
        %vm236 = vcmask 31744
        %v238 = vsel %vm236, %v202, 0
        %v241 = vsel %vm236, %v203, 0
        %v244 = vsel %vm236, %v204, 0
        %v247 = vsel %vm236, %v205, 0
        %v250 = vsel %vm236, %v206, 0
        %v253 = vsel %vm236, %v207, 0
        %v256 = vsel %vm236, %v208, 0
        %v259 = vsel %vm236, %v209, 0
        %v262 = vsel %vm236, %v210, 0
        %v265 = vsel %vm236, %v211, 0
        %v268 = vsel %vm236, %v212, 0
        %v271 = vsel %vm236, %v213, 0
        %v274 = vsel %vm236, %v214, 0
        %v277 = vsel %vm236, %v215, 0
        %v280 = vsel %vm236, %v216, 0
        %v283 = vsel %vm236, %v217, 0
        %v286 = vsel %vm236, %v218, 0
        %v289 = vsel %vm236, %v219, 0
        %v292 = vsel %vm236, %v220, 0
        %v295 = vsel %vm236, %v221, 0
        %v298 = vsel %vm236, %v222, 0
        %v301 = vsel %vm236, %v223, 0
        %v304 = vsel %vm236, %v224, 0
        %v307 = vsel %vm236, %v225, 0
        %v310 = vsel %vm236, %v226, 0
        %v313 = vsel %vm236, %v227, 0
        %v316 = vsel %vm236, %v228, 0
        %v319 = vsel %vm236, %v229, 0
        %v322 = vsel %vm236, %v230, 0
        %v325 = vsel %vm236, %v231, 0
        %v328 = vsel %vm236, %v232, 0
        %v331 = vsel %vm236, %v233, 0
        %vm333 = vcmask 1043456
        %v335 = vsel %vm333, %v235, 0
        %337 = vmatprep.subr.mxu0 0.0
        %338 = vmatpush1.msra.mxu0 %v335
        %339 = vmatprep.subr.mxu0 0.0
        %340 = vmatpush1.msra.mxu0 0.0
        %341 = vmatprep.subr.mxu0 0.0
        %342 = vmatpush1.msra.mxu0 0.0
        %343 = vmatprep.subr.mxu0 0.0
        %344 = vmatpush1.msra.mxu0 0.0
        %345 = vmatprep.subr.mxu0 0.0
        %346 = vmatpush1.msra.mxu0 0.0
        %347 = vmatprep.subr.mxu0 0.0
        %348 = vmatpush1.msra.mxu0 0.0
        %349 = vmatprep.subr.mxu0 0.0
        %350 = vmatpush1.msra.mxu0 0.0
        %351 = vmatprep.subr.mxu0 0.0
        %352 = vmatpush1.msra.mxu0 0.0
        %353 = vmatprep.subr.mxu0 0.0
        %354 = vmatpush1.msra.mxu0 0.0
        %355 = vmatprep.subr.mxu0 0.0
        %356 = vmatpush1.msra.mxu0 0.0
        %357 = vmatprep.subr.mxu0 0.0
        %358 = vmatpush1.msra.mxu0 0.0
        %359 = vmatprep.subr.mxu0 0.0
        %360 = vmatpush1.msra.mxu0 0.0
        %361 = vmatprep.subr.mxu0 0.0
        %362 = vmatpush1.msra.mxu0 0.0
        %363 = vmatprep.subr.mxu0 0.0
        %364 = vmatpush1.msra.mxu0 0.0
        %365 = vmatprep.subr.mxu0 0.0
        %366 = vmatpush1.msra.mxu0 0.0
        %367 = vmatprep.subr.mxu0 0.0
        %368 = vmatpush1.msra.mxu0 0.0
        %369 = vmatprep.subr.mxu0 0.0
        %370 = vmatpush1.msra.mxu0 0.0
        %371 = vmatprep.subr.mxu0 0.0
        %372 = vmatpush1.msra.mxu0 0.0
        %373 = vmatprep.subr.mxu0 0.0
        %374 = vmatpush1.msra.mxu0 0.0
        %375 = vmatprep.subr.mxu0 0.0
        %376 = vmatpush1.msra.mxu0 0.0
        %377 = vmatprep.subr.mxu0 0.0
        %378 = vmatpush1.msra.mxu0 0.0
        %379 = vmatprep.subr.mxu0 0.0
        %380 = vmatpush1.msra.mxu0 0.0
        %381 = vmatprep.subr.mxu0 0.0
        %382 = vmatpush1.msra.mxu0 0.0
        %383 = vmatprep.subr.mxu0 0.0
        %384 = vmatpush1.msra.mxu0 0.0
        %385 = vmatprep.subr.mxu0 0.0
        %386 = vmatpush1.msra.mxu0 0.0
        %387 = vmatprep.subr.mxu0 0.0
        %388 = vmatpush1.msra.mxu0 0.0
        %389 = vmatprep.subr.mxu0 0.0
        %390 = vmatpush1.msra.mxu0 0.0
        %391 = vmatprep.subr.mxu0 0.0
        %392 = vmatpush1.msra.mxu0 0.0
        %393 = vmatprep.subr.mxu0 0.0
        %394 = vmatpush1.msra.mxu0 0.0
        %395 = vmatprep.subr.mxu0 0.0
        %396 = vmatpush1.msra.mxu0 0.0
        %397 = vmatprep.subr.mxu0 0.0
        %398 = vmatpush1.msra.mxu0 0.0
        %399 = vmatprep.subr.mxu0 0.0
        %400 = vmatpush1.msra.mxu0 0.0
        %401 = vmatprep.mubr.f32.mxu0 0.0
        %402 = vmatmul.mubr.f32.gmra.mrb[0].mxu0 %v238
        %v403 = vpop.f32.mrb[0].mxu0
        %v404 = vadd.f32 0.0, %v403
        %v405 = vpop.f32.mrb[0].mxu0
        %406 = vmatprep.mubr.f32.mxu0 0.0
        %407 = vmatmul.mubr.f32.gmra.mrb[0].mxu0 %v241
        %v408 = vpop.f32.mrb[0].mxu0
        %v409 = vadd.f32 0.0, %v408
        %v410 = vpop.f32.mrb[0].mxu0
        %411 = vmatprep.mubr.f32.mxu0 0.0
        %412 = vmatmul.mubr.f32.gmra.mrb[0].mxu0 %v244
        %v413 = vpop.f32.mrb[0].mxu0
        %v414 = vadd.f32 0.0, %v413
        %v415 = vpop.f32.mrb[0].mxu0
        %416 = vmatprep.mubr.f32.mxu0 0.0
        %417 = vmatmul.mubr.f32.gmra.mrb[0].mxu0 %v247
        %v418 = vpop.f32.mrb[0].mxu0
        %v419 = vadd.f32 0.0, %v418
        %v420 = vpop.f32.mrb[0].mxu0
        %421 = vmatprep.mubr.f32.mxu0 0.0
        %422 = vmatmul.mubr.f32.gmra.mrb[0].mxu0 %v250
        %v423 = vpop.f32.mrb[0].mxu0
        %v424 = vadd.f32 0.0, %v423
        %v425 = vpop.f32.mrb[0].mxu0
        %426 = vmatprep.mubr.f32.mxu0 0.0
        %427 = vmatmul.mubr.f32.gmra.mrb[0].mxu0 %v253
        %v428 = vpop.f32.mrb[0].mxu0
        %v429 = vadd.f32 0.0, %v428
        %v430 = vpop.f32.mrb[0].mxu0
        %431 = vmatprep.mubr.f32.mxu0 0.0
        %432 = vmatmul.mubr.f32.gmra.mrb[0].mxu0 %v256
        %v433 = vpop.f32.mrb[0].mxu0
        %v434 = vadd.f32 0.0, %v433
        %v435 = vpop.f32.mrb[0].mxu0
        %436 = vmatprep.mubr.f32.mxu0 0.0
        %437 = vmatmul.mubr.f32.gmra.mrb[0].mxu0 %v259
        %v438 = vpop.f32.mrb[0].mxu0
        %v439 = vadd.f32 0.0, %v438
        %v440 = vpop.f32.mrb[0].mxu0
        %441 = vmatprep.mubr.f32.mxu0 0.0
        %442 = vmatmul.mubr.f32.gmra.mrb[0].mxu0 %v262
        %v443 = vpop.f32.mrb[0].mxu0
        %v444 = vadd.f32 0.0, %v443
        %v445 = vpop.f32.mrb[0].mxu0
        %446 = vmatprep.mubr.f32.mxu0 0.0
        %447 = vmatmul.mubr.f32.gmra.mrb[0].mxu0 %v265
        %v448 = vpop.f32.mrb[0].mxu0
        %v449 = vadd.f32 0.0, %v448
        %v450 = vpop.f32.mrb[0].mxu0
        %451 = vmatprep.mubr.f32.mxu0 0.0
        %452 = vmatmul.mubr.f32.gmra.mrb[0].mxu0 %v268
        %v453 = vpop.f32.mrb[0].mxu0
        %v454 = vadd.f32 0.0, %v453
        %v455 = vpop.f32.mrb[0].mxu0
        %456 = vmatprep.mubr.f32.mxu0 0.0
        %457 = vmatmul.mubr.f32.gmra.mrb[0].mxu0 %v271
        %v458 = vpop.f32.mrb[0].mxu0
        %v459 = vadd.f32 0.0, %v458
        %v460 = vpop.f32.mrb[0].mxu0
        %461 = vmatprep.mubr.f32.mxu0 0.0
        %462 = vmatmul.mubr.f32.gmra.mrb[0].mxu0 %v274
        %v463 = vpop.f32.mrb[0].mxu0
        %v464 = vadd.f32 0.0, %v463
        %v465 = vpop.f32.mrb[0].mxu0
        %466 = vmatprep.mubr.f32.mxu0 0.0
        %467 = vmatmul.mubr.f32.gmra.mrb[0].mxu0 %v277
        %v468 = vpop.f32.mrb[0].mxu0
        %v469 = vadd.f32 0.0, %v468
        %v470 = vpop.f32.mrb[0].mxu0
        %471 = vmatprep.mubr.f32.mxu0 0.0
        %472 = vmatmul.mubr.f32.gmra.mrb[0].mxu0 %v280
        %v473 = vpop.f32.mrb[0].mxu0
        %v474 = vadd.f32 0.0, %v473
        %v475 = vpop.f32.mrb[0].mxu0
        %476 = vmatprep.mubr.f32.mxu0 0.0
        %477 = vmatmul.mubr.f32.gmra.mrb[0].mxu0 %v283
        %v478 = vpop.f32.mrb[0].mxu0
        %v479 = vadd.f32 0.0, %v478
        %v480 = vpop.f32.mrb[0].mxu0
        %481 = vmatprep.mubr.f32.mxu0 0.0
        %482 = vmatmul.mubr.f32.gmra.mrb[0].mxu0 %v286
        %v483 = vpop.f32.mrb[0].mxu0
        %v484 = vadd.f32 0.0, %v483
        %v485 = vpop.f32.mrb[0].mxu0
        %486 = vmatprep.mubr.f32.mxu0 0.0
        %487 = vmatmul.mubr.f32.gmra.mrb[0].mxu0 %v289
        %v488 = vpop.f32.mrb[0].mxu0
        %v489 = vadd.f32 0.0, %v488
        %v490 = vpop.f32.mrb[0].mxu0
        %491 = vmatprep.mubr.f32.mxu0 0.0
        %492 = vmatmul.mubr.f32.gmra.mrb[0].mxu0 %v292
        %v493 = vpop.f32.mrb[0].mxu0
        %v494 = vadd.f32 0.0, %v493
        %v495 = vpop.f32.mrb[0].mxu0
        %496 = vmatprep.mubr.f32.mxu0 0.0
        %497 = vmatmul.mubr.f32.gmra.mrb[0].mxu0 %v295
        %v498 = vpop.f32.mrb[0].mxu0
        %v499 = vadd.f32 0.0, %v498
        %v500 = vpop.f32.mrb[0].mxu0
        %501 = vmatprep.mubr.f32.mxu0 0.0
        %502 = vmatmul.mubr.f32.gmra.mrb[0].mxu0 %v298
        %v503 = vpop.f32.mrb[0].mxu0
        %v504 = vadd.f32 0.0, %v503
        %v505 = vpop.f32.mrb[0].mxu0
        %506 = vmatprep.mubr.f32.mxu0 0.0
        %507 = vmatmul.mubr.f32.gmra.mrb[0].mxu0 %v301
        %v508 = vpop.f32.mrb[0].mxu0
        %v509 = vadd.f32 0.0, %v508
        %v510 = vpop.f32.mrb[0].mxu0
        %511 = vmatprep.mubr.f32.mxu0 0.0
        %512 = vmatmul.mubr.f32.gmra.mrb[0].mxu0 %v304
        %v513 = vpop.f32.mrb[0].mxu0
        %v514 = vadd.f32 0.0, %v513
        %v515 = vpop.f32.mrb[0].mxu0
        %516 = vmatprep.mubr.f32.mxu0 0.0
        %517 = vmatmul.mubr.f32.gmra.mrb[0].mxu0 %v307
        %v518 = vpop.f32.mrb[0].mxu0
        %v519 = vadd.f32 0.0, %v518
        %v520 = vpop.f32.mrb[0].mxu0
        %521 = vmatprep.mubr.f32.mxu0 0.0
        %522 = vmatmul.mubr.f32.gmra.mrb[0].mxu0 %v310
        %v523 = vpop.f32.mrb[0].mxu0
        %v524 = vadd.f32 0.0, %v523
        %v525 = vpop.f32.mrb[0].mxu0
        %526 = vmatprep.mubr.f32.mxu0 0.0
        %527 = vmatmul.mubr.f32.gmra.mrb[0].mxu0 %v313
        %v528 = vpop.f32.mrb[0].mxu0
        %v529 = vadd.f32 0.0, %v528
        %v530 = vpop.f32.mrb[0].mxu0
        %531 = vmatprep.mubr.f32.mxu0 0.0
        %532 = vmatmul.mubr.f32.gmra.mrb[0].mxu0 %v316
        %v533 = vpop.f32.mrb[0].mxu0
        %v534 = vadd.f32 0.0, %v533
        %v535 = vpop.f32.mrb[0].mxu0
        %536 = vmatprep.mubr.f32.mxu0 0.0
        %537 = vmatmul.mubr.f32.gmra.mrb[0].mxu0 %v319
        %v538 = vpop.f32.mrb[0].mxu0
        %v539 = vadd.f32 0.0, %v538
        %v540 = vpop.f32.mrb[0].mxu0
        %541 = vmatprep.mubr.f32.mxu0 0.0
        %542 = vmatmul.mubr.f32.gmra.mrb[0].mxu0 %v322
        %v543 = vpop.f32.mrb[0].mxu0
        %v544 = vadd.f32 0.0, %v543
        %v545 = vpop.f32.mrb[0].mxu0
        %546 = vmatprep.mubr.f32.mxu0 0.0
        %547 = vmatmul.mubr.f32.gmra.mrb[0].mxu0 %v325
        %v548 = vpop.f32.mrb[0].mxu0
        %v549 = vadd.f32 0.0, %v548
        %v550 = vpop.f32.mrb[0].mxu0
        %551 = vmatprep.mubr.f32.mxu0 0.0
        %552 = vmatmul.mubr.f32.gmra.mrb[0].mxu0 %v328
        %v553 = vpop.f32.mrb[0].mxu0
        %v554 = vadd.f32 0.0, %v553
        %v555 = vpop.f32.mrb[0].mxu0
        %556 = vmatprep.mubr.f32.mxu0 0.0
        %557 = vmatmul.mubr.f32.gmra.mrb[0].mxu0 %v331
        %v558 = vpop.f32.mrb[0].mxu0
        %v559 = vadd.f32 0.0, %v558
        %v560 = vpop.f32.mrb[0].mxu0
        %561 = vdwg.mxu0
        %v563 = vsel %vm236, %v169, 0
        %v566 = vsel %vm236, %v170, 0
        %v569 = vsel %vm236, %v171, 0
        %v572 = vsel %vm236, %v172, 0
        %v575 = vsel %vm236, %v173, 0
        %v578 = vsel %vm236, %v174, 0
        %v581 = vsel %vm236, %v175, 0
        %v584 = vsel %vm236, %v176, 0
        %v587 = vsel %vm236, %v177, 0
        %v590 = vsel %vm236, %v178, 0
        %v593 = vsel %vm236, %v179, 0
        %v596 = vsel %vm236, %v180, 0
        %v599 = vsel %vm236, %v181, 0
        %v602 = vsel %vm236, %v182, 0
        %v605 = vsel %vm236, %v183, 0
        %v608 = vsel %vm236, %v184, 0
        %v611 = vsel %vm236, %v185, 0
        %v614 = vsel %vm236, %v186, 0
        %v617 = vsel %vm236, %v187, 0
        %v620 = vsel %vm236, %v188, 0
        %v623 = vsel %vm236, %v189, 0
        %v626 = vsel %vm236, %v190, 0
        %v629 = vsel %vm236, %v191, 0
        %v632 = vsel %vm236, %v192, 0
        %v635 = vsel %vm236, %v193, 0
        %v638 = vsel %vm236, %v194, 0
        %v641 = vsel %vm236, %v195, 0
        %v644 = vsel %vm236, %v196, 0
        %v647 = vsel %vm236, %v197, 0
        %v650 = vsel %vm236, %v198, 0
        %v653 = vsel %vm236, %v199, 0
        %v656 = vsel %vm236, %v200, 0
        %v659 = vsel %vm333, %v201, 0
        %661 = vmatprep.subr.mxu0 0.0
        %662 = vmatpush1.msra.mxu0 %v659
        %663 = vmatprep.subr.mxu0 0.0
        %664 = vmatpush1.msra.mxu0 0.0
        %665 = vmatprep.subr.mxu0 0.0
        %666 = vmatpush1.msra.mxu0 0.0
        %667 = vmatprep.subr.mxu0 0.0
        %668 = vmatpush1.msra.mxu0 0.0
        %669 = vmatprep.subr.mxu0 0.0
        %670 = vmatpush1.msra.mxu0 0.0
        %671 = vmatprep.subr.mxu0 0.0
        %672 = vmatpush1.msra.mxu0 0.0
        %673 = vmatprep.subr.mxu0 0.0
        %674 = vmatpush1.msra.mxu0 0.0
        %675 = vmatprep.subr.mxu0 0.0
        %676 = vmatpush1.msra.mxu0 0.0
        %677 = vmatprep.subr.mxu0 0.0
        %678 = vmatpush1.msra.mxu0 0.0
        %679 = vmatprep.subr.mxu0 0.0
        %680 = vmatpush1.msra.mxu0 0.0
        %681 = vmatprep.subr.mxu0 0.0
        %682 = vmatpush1.msra.mxu0 0.0
        %683 = vmatprep.subr.mxu0 0.0
        %684 = vmatpush1.msra.mxu0 0.0
        %685 = vmatprep.subr.mxu0 0.0
        %686 = vmatpush1.msra.mxu0 0.0
        %687 = vmatprep.subr.mxu0 0.0
        %688 = vmatpush1.msra.mxu0 0.0
        %689 = vmatprep.subr.mxu0 0.0
        %690 = vmatpush1.msra.mxu0 0.0
        %691 = vmatprep.subr.mxu0 0.0
        %692 = vmatpush1.msra.mxu0 0.0
        %693 = vmatprep.subr.mxu0 0.0
        %694 = vmatpush1.msra.mxu0 0.0
        %695 = vmatprep.subr.mxu0 0.0
        %696 = vmatpush1.msra.mxu0 0.0
        %697 = vmatprep.subr.mxu0 0.0
        %698 = vmatpush1.msra.mxu0 0.0
        %699 = vmatprep.subr.mxu0 0.0
        %700 = vmatpush1.msra.mxu0 0.0
        %701 = vmatprep.subr.mxu0 0.0
        %702 = vmatpush1.msra.mxu0 0.0
        %703 = vmatprep.subr.mxu0 0.0
        %704 = vmatpush1.msra.mxu0 0.0
        %705 = vmatprep.subr.mxu0 0.0
        %706 = vmatpush1.msra.mxu0 0.0
        %707 = vmatprep.subr.mxu0 0.0
        %708 = vmatpush1.msra.mxu0 0.0
        %709 = vmatprep.subr.mxu0 0.0
        %710 = vmatpush1.msra.mxu0 0.0
        %711 = vmatprep.subr.mxu0 0.0
        %712 = vmatpush1.msra.mxu0 0.0
        %713 = vmatprep.subr.mxu0 0.0
        %714 = vmatpush1.msra.mxu0 0.0
        %715 = vmatprep.subr.mxu0 0.0
        %716 = vmatpush1.msra.mxu0 0.0
        %717 = vmatprep.subr.mxu0 0.0
        %718 = vmatpush1.msra.mxu0 0.0
        %719 = vmatprep.subr.mxu0 0.0
        %720 = vmatpush1.msra.mxu0 0.0
        %721 = vmatprep.subr.mxu0 0.0
        %722 = vmatpush1.msra.mxu0 0.0
        %723 = vmatprep.subr.mxu0 0.0
        %724 = vmatpush1.msra.mxu0 0.0
        %725 = vmatprep.mubr.f32.mxu0 0.0
        %726 = vmatmul.mubr.f32.gmra.mrb[0].mxu0 %v563
        %v727 = vpop.f32.mrb[0].mxu0
        %v728 = vadd.f32 %v404, %v727
        %v729 = vpop.f32.mrb[0].mxu0
        %730 = vmatprep.mubr.f32.mxu0 0.0
        %731 = vmatmul.mubr.f32.gmra.mrb[0].mxu0 %v566
        %v732 = vpop.f32.mrb[0].mxu0
        %v733 = vadd.f32 %v409, %v732
        %v734 = vpop.f32.mrb[0].mxu0
        %735 = vmatprep.mubr.f32.mxu0 0.0
        %736 = vmatmul.mubr.f32.gmra.mrb[0].mxu0 %v569
        %v737 = vpop.f32.mrb[0].mxu0
        %v738 = vadd.f32 %v414, %v737
        %v739 = vpop.f32.mrb[0].mxu0
        %740 = vmatprep.mubr.f32.mxu0 0.0
        %741 = vmatmul.mubr.f32.gmra.mrb[0].mxu0 %v572
        %v742 = vpop.f32.mrb[0].mxu0
        %v743 = vadd.f32 %v419, %v742
        %v744 = vpop.f32.mrb[0].mxu0
        %745 = vmatprep.mubr.f32.mxu0 0.0
        %746 = vmatmul.mubr.f32.gmra.mrb[0].mxu0 %v575
        %v747 = vpop.f32.mrb[0].mxu0
        %v748 = vadd.f32 %v424, %v747
        %v749 = vpop.f32.mrb[0].mxu0
        %750 = vmatprep.mubr.f32.mxu0 0.0
        %751 = vmatmul.mubr.f32.gmra.mrb[0].mxu0 %v578
        %v752 = vpop.f32.mrb[0].mxu0
        %v753 = vadd.f32 %v429, %v752
        %v754 = vpop.f32.mrb[0].mxu0
        %755 = vmatprep.mubr.f32.mxu0 0.0
        %756 = vmatmul.mubr.f32.gmra.mrb[0].mxu0 %v581
        %v757 = vpop.f32.mrb[0].mxu0
        %v758 = vadd.f32 %v434, %v757
        %v759 = vpop.f32.mrb[0].mxu0
        %760 = vmatprep.mubr.f32.mxu0 0.0
        %761 = vmatmul.mubr.f32.gmra.mrb[0].mxu0 %v584
        %v762 = vpop.f32.mrb[0].mxu0
        %v763 = vadd.f32 %v439, %v762
        %v764 = vpop.f32.mrb[0].mxu0
        %765 = vmatprep.mubr.f32.mxu0 0.0
        %766 = vmatmul.mubr.f32.gmra.mrb[0].mxu0 %v587
        %v767 = vpop.f32.mrb[0].mxu0
        %v768 = vadd.f32 %v444, %v767
        %v769 = vpop.f32.mrb[0].mxu0
        %770 = vmatprep.mubr.f32.mxu0 0.0
        %771 = vmatmul.mubr.f32.gmra.mrb[0].mxu0 %v590
        %v772 = vpop.f32.mrb[0].mxu0
        %v773 = vadd.f32 %v449, %v772
        %v774 = vpop.f32.mrb[0].mxu0
        %775 = vmatprep.mubr.f32.mxu0 0.0
        %776 = vmatmul.mubr.f32.gmra.mrb[0].mxu0 %v593
        %v777 = vpop.f32.mrb[0].mxu0
        %v778 = vadd.f32 %v454, %v777
        %v779 = vpop.f32.mrb[0].mxu0
        %780 = vmatprep.mubr.f32.mxu0 0.0
        %781 = vmatmul.mubr.f32.gmra.mrb[0].mxu0 %v596
        %v782 = vpop.f32.mrb[0].mxu0
        %v783 = vadd.f32 %v459, %v782
        %v784 = vpop.f32.mrb[0].mxu0
        %785 = vmatprep.mubr.f32.mxu0 0.0
        %786 = vmatmul.mubr.f32.gmra.mrb[0].mxu0 %v599
        %v787 = vpop.f32.mrb[0].mxu0
        %v788 = vadd.f32 %v464, %v787
        %v789 = vpop.f32.mrb[0].mxu0
        %790 = vmatprep.mubr.f32.mxu0 0.0
        %791 = vmatmul.mubr.f32.gmra.mrb[0].mxu0 %v602
        %v792 = vpop.f32.mrb[0].mxu0
        %v793 = vadd.f32 %v469, %v792
        %v794 = vpop.f32.mrb[0].mxu0
        %795 = vmatprep.mubr.f32.mxu0 0.0
        %796 = vmatmul.mubr.f32.gmra.mrb[0].mxu0 %v605
        %v797 = vpop.f32.mrb[0].mxu0
        %v798 = vadd.f32 %v474, %v797
        %v799 = vpop.f32.mrb[0].mxu0
        %800 = vmatprep.mubr.f32.mxu0 0.0
        %801 = vmatmul.mubr.f32.gmra.mrb[0].mxu0 %v608
        %v802 = vpop.f32.mrb[0].mxu0
        %v803 = vadd.f32 %v479, %v802
        %v804 = vpop.f32.mrb[0].mxu0
        %805 = vmatprep.mubr.f32.mxu0 0.0
        %806 = vmatmul.mubr.f32.gmra.mrb[0].mxu0 %v611
        %v807 = vpop.f32.mrb[0].mxu0
        %v808 = vadd.f32 %v484, %v807
        %v809 = vpop.f32.mrb[0].mxu0
        %810 = vmatprep.mubr.f32.mxu0 0.0
        %811 = vmatmul.mubr.f32.gmra.mrb[0].mxu0 %v614
        %v812 = vpop.f32.mrb[0].mxu0
        %v813 = vadd.f32 %v489, %v812
        %v814 = vpop.f32.mrb[0].mxu0
        %815 = vmatprep.mubr.f32.mxu0 0.0
        %816 = vmatmul.mubr.f32.gmra.mrb[0].mxu0 %v617
        %v817 = vpop.f32.mrb[0].mxu0
        %v818 = vadd.f32 %v494, %v817
        %v819 = vpop.f32.mrb[0].mxu0
        %820 = vmatprep.mubr.f32.mxu0 0.0
        %821 = vmatmul.mubr.f32.gmra.mrb[0].mxu0 %v620
        %v822 = vpop.f32.mrb[0].mxu0
        %v823 = vadd.f32 %v499, %v822
        %v824 = vpop.f32.mrb[0].mxu0
        %825 = vmatprep.mubr.f32.mxu0 0.0
        %826 = vmatmul.mubr.f32.gmra.mrb[0].mxu0 %v623
        %v827 = vpop.f32.mrb[0].mxu0
        %v828 = vadd.f32 %v504, %v827
        %v829 = vpop.f32.mrb[0].mxu0
        %830 = vmatprep.mubr.f32.mxu0 0.0
        %831 = vmatmul.mubr.f32.gmra.mrb[0].mxu0 %v626
        %v832 = vpop.f32.mrb[0].mxu0
        %v833 = vadd.f32 %v509, %v832
        %v834 = vpop.f32.mrb[0].mxu0
        %835 = vmatprep.mubr.f32.mxu0 0.0
        %836 = vmatmul.mubr.f32.gmra.mrb[0].mxu0 %v629
        %v837 = vpop.f32.mrb[0].mxu0
        %v838 = vadd.f32 %v514, %v837
        %v839 = vpop.f32.mrb[0].mxu0
        %840 = vmatprep.mubr.f32.mxu0 0.0
        %841 = vmatmul.mubr.f32.gmra.mrb[0].mxu0 %v632
        %v842 = vpop.f32.mrb[0].mxu0
        %v843 = vadd.f32 %v519, %v842
        %v844 = vpop.f32.mrb[0].mxu0
        %845 = vmatprep.mubr.f32.mxu0 0.0
        %846 = vmatmul.mubr.f32.gmra.mrb[0].mxu0 %v635
        %v847 = vpop.f32.mrb[0].mxu0
        %v848 = vadd.f32 %v524, %v847
        %v849 = vpop.f32.mrb[0].mxu0
        %850 = vmatprep.mubr.f32.mxu0 0.0
        %851 = vmatmul.mubr.f32.gmra.mrb[0].mxu0 %v638
        %v852 = vpop.f32.mrb[0].mxu0
        %v853 = vadd.f32 %v529, %v852
        %v854 = vpop.f32.mrb[0].mxu0
        %855 = vmatprep.mubr.f32.mxu0 0.0
        %856 = vmatmul.mubr.f32.gmra.mrb[0].mxu0 %v641
        %v857 = vpop.f32.mrb[0].mxu0
        %v858 = vadd.f32 %v534, %v857
        %v859 = vpop.f32.mrb[0].mxu0
        %860 = vmatprep.mubr.f32.mxu0 0.0
        %861 = vmatmul.mubr.f32.gmra.mrb[0].mxu0 %v644
        %v862 = vpop.f32.mrb[0].mxu0
        %v863 = vadd.f32 %v539, %v862
        %v864 = vpop.f32.mrb[0].mxu0
        %865 = vmatprep.mubr.f32.mxu0 0.0
        %866 = vmatmul.mubr.f32.gmra.mrb[0].mxu0 %v647
        %v867 = vpop.f32.mrb[0].mxu0
        %v868 = vadd.f32 %v544, %v867
        %v869 = vpop.f32.mrb[0].mxu0
        %870 = vmatprep.mubr.f32.mxu0 0.0
        %871 = vmatmul.mubr.f32.gmra.mrb[0].mxu0 %v650
        %v872 = vpop.f32.mrb[0].mxu0
        %v873 = vadd.f32 %v549, %v872
        %v874 = vpop.f32.mrb[0].mxu0
        %875 = vmatprep.mubr.f32.mxu0 0.0
        %876 = vmatmul.mubr.f32.gmra.mrb[0].mxu0 %v653
        %v877 = vpop.f32.mrb[0].mxu0
        %v878 = vadd.f32 %v554, %v877
        %v879 = vpop.f32.mrb[0].mxu0
        %880 = vmatprep.mubr.f32.mxu0 0.0
        %881 = vmatmul.mubr.f32.gmra.mrb[0].mxu0 %v656
        %v882 = vpop.f32.mrb[0].mxu0
        %v883 = vadd.f32 %v559, %v882
        %v884 = vpop.f32.mrb[0].mxu0
        %885 = vdwg.mxu0
        %v886 = vld [vmem:[%s168 + $0x2] sm:$0xff]
        %v887 = vld [vmem:[%s168 + $0xa] sm:$0xff]
        %v888 = vld [vmem:[%s168 + $0x1a] sm:$0xff]
        %v889 = vld [vmem:[%s168 + $0x22] sm:$0xff]
        %v890 = vld [vmem:[%s168 + $0x32] sm:$0xff]
        %v891 = vld [vmem:[%s168 + $0x3a] sm:$0xff]
        %v892 = vld [vmem:[%s168 + $0x4a] sm:$0xff]
        %v893 = vld [vmem:[%s168 + $0x52] sm:$0xff]
        %v894 = vld [vmem:[%s168 + $0x62] sm:$0xff]
        %v895 = vld [vmem:[%s168 + $0x6a] sm:$0xff]
        %v896 = vld [vmem:[%s168 + $0x7a] sm:$0xff]
        %v897 = vld [vmem:[%s168 + $0x82] sm:$0xff]
        %v898 = vld [vmem:[%s168 + $0x92] sm:$0xff]
        %v899 = vld [vmem:[%s168 + $0x9a] sm:$0xff]
        %v900 = vld [vmem:[%s168 + $0xaa] sm:$0xff]
        %v901 = vld [vmem:[%s168 + $0xb2] sm:$0xff]
        %v902 = vld [vmem:[%s168 + $0xc2] sm:$0xff]
        %v903 = vld [vmem:[%s168 + $0xca] sm:$0xff]
        %v904 = vld [vmem:[%s168 + $0xda] sm:$0xff]
        %v905 = vld [vmem:[%s168 + $0xe2] sm:$0xff]
        %v906 = vld [vmem:[%s168 + $0xf2] sm:$0xff]
        %v907 = vld [vmem:[%s168 + $0xfa] sm:$0xff]
        %v908 = vld [vmem:[%s168 + $0x10a] sm:$0xff]
        %v909 = vld [vmem:[%s168 + $0x112] sm:$0xff]
        %v910 = vld [vmem:[%s168 + $0x122] sm:$0xff]
        %v911 = vld [vmem:[%s168 + $0x12a] sm:$0xff]
        %v912 = vld [vmem:[%s168 + $0x13a] sm:$0xff]
        %v913 = vld [vmem:[%s168 + $0x142] sm:$0xff]
        %v914 = vld [vmem:[%s168 + $0x152] sm:$0xff]
        %v915 = vld [vmem:[%s168 + $0x15a] sm:$0xff]
        %v916 = vld [vmem:[%s168 + $0x16a] sm:$0xff]
        %v917 = vld [vmem:[%s168 + $0x172] sm:$0xff]
        %s918 = scalar_lea.vmem %s1, 8
        %v919 = vld [vmem:[%s918] sm:$0xf]
        %v921 = vsel %vm236, %v886, 0
        %v924 = vsel %vm236, %v887, 0
        %v927 = vsel %vm236, %v888, 0
        %v930 = vsel %vm236, %v889, 0
        %v933 = vsel %vm236, %v890, 0
        %v936 = vsel %vm236, %v891, 0
        %v939 = vsel %vm236, %v892, 0
        %v942 = vsel %vm236, %v893, 0
        %v945 = vsel %vm236, %v894, 0
        %v948 = vsel %vm236, %v895, 0
        %v951 = vsel %vm236, %v896, 0
        %v954 = vsel %vm236, %v897, 0
        %v957 = vsel %vm236, %v898, 0
        %v960 = vsel %vm236, %v899, 0
        %v963 = vsel %vm236, %v900, 0
        %v966 = vsel %vm236, %v901, 0
        %v969 = vsel %vm236, %v902, 0
        %v972 = vsel %vm236, %v903, 0
        %v975 = vsel %vm236, %v904, 0
        %v978 = vsel %vm236, %v905, 0
        %v981 = vsel %vm236, %v906, 0
        %v984 = vsel %vm236, %v907, 0
        %v987 = vsel %vm236, %v908, 0
        %v990 = vsel %vm236, %v909, 0
        %v993 = vsel %vm236, %v910, 0
        %v996 = vsel %vm236, %v911, 0
        %v999 = vsel %vm236, %v912, 0
        %v1002 = vsel %vm236, %v913, 0
        %v1005 = vsel %vm236, %v914, 0
        %v1008 = vsel %vm236, %v915, 0
        %v1011 = vsel %vm236, %v916, 0
        %v1014 = vsel %vm236, %v917, 0
        %v1017 = vsel %vm333, %v919, 0
        %1019 = vmatprep.subr.mxu0 0.0
        %1020 = vmatpush1.msra.mxu0 %v1017
        %1021 = vmatprep.subr.mxu0 0.0
        %1022 = vmatpush1.msra.mxu0 0.0
        %1023 = vmatprep.subr.mxu0 0.0
        %1024 = vmatpush1.msra.mxu0 0.0
        %1025 = vmatprep.subr.mxu0 0.0
        %1026 = vmatpush1.msra.mxu0 0.0
        %1027 = vmatprep.subr.mxu0 0.0
        %1028 = vmatpush1.msra.mxu0 0.0
        %1029 = vmatprep.subr.mxu0 0.0
        %1030 = vmatpush1.msra.mxu0 0.0
        %1031 = vmatprep.subr.mxu0 0.0
        %1032 = vmatpush1.msra.mxu0 0.0
        %1033 = vmatprep.subr.mxu0 0.0
        %1034 = vmatpush1.msra.mxu0 0.0
        %1035 = vmatprep.subr.mxu0 0.0
        %1036 = vmatpush1.msra.mxu0 0.0
        %1037 = vmatprep.subr.mxu0 0.0
        %1038 = vmatpush1.msra.mxu0 0.0
        %1039 = vmatprep.subr.mxu0 0.0
        %1040 = vmatpush1.msra.mxu0 0.0
        %1041 = vmatprep.subr.mxu0 0.0
        %1042 = vmatpush1.msra.mxu0 0.0
        %1043 = vmatprep.subr.mxu0 0.0
        %1044 = vmatpush1.msra.mxu0 0.0
        %1045 = vmatprep.subr.mxu0 0.0
        %1046 = vmatpush1.msra.mxu0 0.0
        %1047 = vmatprep.subr.mxu0 0.0
        %1048 = vmatpush1.msra.mxu0 0.0
        %1049 = vmatprep.subr.mxu0 0.0
        %1050 = vmatpush1.msra.mxu0 0.0
        %1051 = vmatprep.subr.mxu0 0.0
        %1052 = vmatpush1.msra.mxu0 0.0
        %1053 = vmatprep.subr.mxu0 0.0
        %1054 = vmatpush1.msra.mxu0 0.0
        %1055 = vmatprep.subr.mxu0 0.0
        %1056 = vmatpush1.msra.mxu0 0.0
        %1057 = vmatprep.subr.mxu0 0.0
        %1058 = vmatpush1.msra.mxu0 0.0
        %1059 = vmatprep.subr.mxu0 0.0
        %1060 = vmatpush1.msra.mxu0 0.0
        %1061 = vmatprep.subr.mxu0 0.0
        %1062 = vmatpush1.msra.mxu0 0.0
        %1063 = vmatprep.subr.mxu0 0.0
        %1064 = vmatpush1.msra.mxu0 0.0
        %1065 = vmatprep.subr.mxu0 0.0
        %1066 = vmatpush1.msra.mxu0 0.0
        %1067 = vmatprep.subr.mxu0 0.0
        %1068 = vmatpush1.msra.mxu0 0.0
        %1069 = vmatprep.subr.mxu0 0.0
        %1070 = vmatpush1.msra.mxu0 0.0
        %1071 = vmatprep.subr.mxu0 0.0
        %1072 = vmatpush1.msra.mxu0 0.0
        %1073 = vmatprep.subr.mxu0 0.0
        %1074 = vmatpush1.msra.mxu0 0.0
        %1075 = vmatprep.subr.mxu0 0.0
        %1076 = vmatpush1.msra.mxu0 0.0
        %1077 = vmatprep.subr.mxu0 0.0
        %1078 = vmatpush1.msra.mxu0 0.0
        %1079 = vmatprep.subr.mxu0 0.0
        %1080 = vmatpush1.msra.mxu0 0.0
        %1081 = vmatprep.subr.mxu0 0.0
        %1082 = vmatpush1.msra.mxu0 0.0
        %1083 = vmatprep.mubr.f32.mxu0 0.0
        %1084 = vmatmul.mubr.f32.gmra.mrb[0].mxu0 %v921
        %v1085 = vpop.f32.mrb[0].mxu0
        %v1086 = vadd.f32 0.0, %v1085
        %v1087 = vpop.f32.mrb[0].mxu0
        %1088 = vmatprep.mubr.f32.mxu0 0.0
        %1089 = vmatmul.mubr.f32.gmra.mrb[0].mxu0 %v924
        %v1090 = vpop.f32.mrb[0].mxu0
        %v1091 = vadd.f32 0.0, %v1090
        %v1092 = vpop.f32.mrb[0].mxu0
        %1093 = vmatprep.mubr.f32.mxu0 0.0
        %1094 = vmatmul.mubr.f32.gmra.mrb[0].mxu0 %v927
        %v1095 = vpop.f32.mrb[0].mxu0
        %v1096 = vadd.f32 0.0, %v1095
        %v1097 = vpop.f32.mrb[0].mxu0
        %1098 = vmatprep.mubr.f32.mxu0 0.0
        %1099 = vmatmul.mubr.f32.gmra.mrb[0].mxu0 %v930
        %v1100 = vpop.f32.mrb[0].mxu0
        %v1101 = vadd.f32 0.0, %v1100
        %v1102 = vpop.f32.mrb[0].mxu0
        %1103 = vmatprep.mubr.f32.mxu0 0.0
        %1104 = vmatmul.mubr.f32.gmra.mrb[0].mxu0 %v933
        %v1105 = vpop.f32.mrb[0].mxu0
        %v1106 = vadd.f32 0.0, %v1105
        %v1107 = vpop.f32.mrb[0].mxu0
        %1108 = vmatprep.mubr.f32.mxu0 0.0
        %1109 = vmatmul.mubr.f32.gmra.mrb[0].mxu0 %v936
        %v1110 = vpop.f32.mrb[0].mxu0
        %v1111 = vadd.f32 0.0, %v1110
        %v1112 = vpop.f32.mrb[0].mxu0
        %1113 = vmatprep.mubr.f32.mxu0 0.0
        %1114 = vmatmul.mubr.f32.gmra.mrb[0].mxu0 %v939
        %v1115 = vpop.f32.mrb[0].mxu0
        %v1116 = vadd.f32 0.0, %v1115
        %v1117 = vpop.f32.mrb[0].mxu0
        %1118 = vmatprep.mubr.f32.mxu0 0.0
        %1119 = vmatmul.mubr.f32.gmra.mrb[0].mxu0 %v942
        %v1120 = vpop.f32.mrb[0].mxu0
        %v1121 = vadd.f32 0.0, %v1120
        %v1122 = vpop.f32.mrb[0].mxu0
        %1123 = vmatprep.mubr.f32.mxu0 0.0
        %1124 = vmatmul.mubr.f32.gmra.mrb[0].mxu0 %v945
        %v1125 = vpop.f32.mrb[0].mxu0
        %v1126 = vadd.f32 0.0, %v1125
        %v1127 = vpop.f32.mrb[0].mxu0
        %1128 = vmatprep.mubr.f32.mxu0 0.0
        %1129 = vmatmul.mubr.f32.gmra.mrb[0].mxu0 %v948
        %v1130 = vpop.f32.mrb[0].mxu0
        %v1131 = vadd.f32 0.0, %v1130
        %v1132 = vpop.f32.mrb[0].mxu0
        %1133 = vmatprep.mubr.f32.mxu0 0.0
        %1134 = vmatmul.mubr.f32.gmra.mrb[0].mxu0 %v951
        %v1135 = vpop.f32.mrb[0].mxu0
        %v1136 = vadd.f32 0.0, %v1135
        %v1137 = vpop.f32.mrb[0].mxu0
        %1138 = vmatprep.mubr.f32.mxu0 0.0
        %1139 = vmatmul.mubr.f32.gmra.mrb[0].mxu0 %v954
        %v1140 = vpop.f32.mrb[0].mxu0
        %v1141 = vadd.f32 0.0, %v1140
        %v1142 = vpop.f32.mrb[0].mxu0
        %1143 = vmatprep.mubr.f32.mxu0 0.0
        %1144 = vmatmul.mubr.f32.gmra.mrb[0].mxu0 %v957
        %v1145 = vpop.f32.mrb[0].mxu0
        %v1146 = vadd.f32 0.0, %v1145
        %v1147 = vpop.f32.mrb[0].mxu0
        %1148 = vmatprep.mubr.f32.mxu0 0.0
        %1149 = vmatmul.mubr.f32.gmra.mrb[0].mxu0 %v960
        %v1150 = vpop.f32.mrb[0].mxu0
        %v1151 = vadd.f32 0.0, %v1150
        %v1152 = vpop.f32.mrb[0].mxu0
        %1153 = vmatprep.mubr.f32.mxu0 0.0
        %1154 = vmatmul.mubr.f32.gmra.mrb[0].mxu0 %v963
        %v1155 = vpop.f32.mrb[0].mxu0
        %v1156 = vadd.f32 0.0, %v1155
        %v1157 = vpop.f32.mrb[0].mxu0
        %1158 = vmatprep.mubr.f32.mxu0 0.0
        %1159 = vmatmul.mubr.f32.gmra.mrb[0].mxu0 %v966
        %v1160 = vpop.f32.mrb[0].mxu0
        %v1161 = vadd.f32 0.0, %v1160
        %v1162 = vpop.f32.mrb[0].mxu0
        %1163 = vmatprep.mubr.f32.mxu0 0.0
        %1164 = vmatmul.mubr.f32.gmra.mrb[0].mxu0 %v969
        %v1165 = vpop.f32.mrb[0].mxu0
        %v1166 = vadd.f32 0.0, %v1165
        %v1167 = vpop.f32.mrb[0].mxu0
        %1168 = vmatprep.mubr.f32.mxu0 0.0
        %1169 = vmatmul.mubr.f32.gmra.mrb[0].mxu0 %v972
        %v1170 = vpop.f32.mrb[0].mxu0
        %v1171 = vadd.f32 0.0, %v1170
        %v1172 = vpop.f32.mrb[0].mxu0
        %1173 = vmatprep.mubr.f32.mxu0 0.0
        %1174 = vmatmul.mubr.f32.gmra.mrb[0].mxu0 %v975
        %v1175 = vpop.f32.mrb[0].mxu0
        %v1176 = vadd.f32 0.0, %v1175
        %v1177 = vpop.f32.mrb[0].mxu0
        %1178 = vmatprep.mubr.f32.mxu0 0.0
        %1179 = vmatmul.mubr.f32.gmra.mrb[0].mxu0 %v978
        %v1180 = vpop.f32.mrb[0].mxu0
        %v1181 = vadd.f32 0.0, %v1180
        %v1182 = vpop.f32.mrb[0].mxu0
        %1183 = vmatprep.mubr.f32.mxu0 0.0
        %1184 = vmatmul.mubr.f32.gmra.mrb[0].mxu0 %v981
        %v1185 = vpop.f32.mrb[0].mxu0
        %v1186 = vadd.f32 0.0, %v1185
        %v1187 = vpop.f32.mrb[0].mxu0
        %1188 = vmatprep.mubr.f32.mxu0 0.0
        %1189 = vmatmul.mubr.f32.gmra.mrb[0].mxu0 %v984
        %v1190 = vpop.f32.mrb[0].mxu0
        %v1191 = vadd.f32 0.0, %v1190
        %v1192 = vpop.f32.mrb[0].mxu0
        %1193 = vmatprep.mubr.f32.mxu0 0.0
        %1194 = vmatmul.mubr.f32.gmra.mrb[0].mxu0 %v987
        %v1195 = vpop.f32.mrb[0].mxu0
        %v1196 = vadd.f32 0.0, %v1195
        %v1197 = vpop.f32.mrb[0].mxu0
        %1198 = vmatprep.mubr.f32.mxu0 0.0
        %1199 = vmatmul.mubr.f32.gmra.mrb[0].mxu0 %v990
        %v1200 = vpop.f32.mrb[0].mxu0
        %v1201 = vadd.f32 0.0, %v1200
        %v1202 = vpop.f32.mrb[0].mxu0
        %1203 = vmatprep.mubr.f32.mxu0 0.0
        %1204 = vmatmul.mubr.f32.gmra.mrb[0].mxu0 %v993
        %v1205 = vpop.f32.mrb[0].mxu0
        %v1206 = vadd.f32 0.0, %v1205
        %v1207 = vpop.f32.mrb[0].mxu0
        %1208 = vmatprep.mubr.f32.mxu0 0.0
        %1209 = vmatmul.mubr.f32.gmra.mrb[0].mxu0 %v996
        %v1210 = vpop.f32.mrb[0].mxu0
        %v1211 = vadd.f32 0.0, %v1210
        %v1212 = vpop.f32.mrb[0].mxu0
        %1213 = vmatprep.mubr.f32.mxu0 0.0
        %1214 = vmatmul.mubr.f32.gmra.mrb[0].mxu0 %v999
        %v1215 = vpop.f32.mrb[0].mxu0
        %v1216 = vadd.f32 0.0, %v1215
        %v1217 = vpop.f32.mrb[0].mxu0
        %1218 = vmatprep.mubr.f32.mxu0 0.0
        %1219 = vmatmul.mubr.f32.gmra.mrb[0].mxu0 %v1002
        %v1220 = vpop.f32.mrb[0].mxu0
        %v1221 = vadd.f32 0.0, %v1220
        %v1222 = vpop.f32.mrb[0].mxu0
        %1223 = vmatprep.mubr.f32.mxu0 0.0
        %1224 = vmatmul.mubr.f32.gmra.mrb[0].mxu0 %v1005
        %v1225 = vpop.f32.mrb[0].mxu0
        %v1226 = vadd.f32 0.0, %v1225
        %v1227 = vpop.f32.mrb[0].mxu0
        %1228 = vmatprep.mubr.f32.mxu0 0.0
        %1229 = vmatmul.mubr.f32.gmra.mrb[0].mxu0 %v1008
        %v1230 = vpop.f32.mrb[0].mxu0
        %v1231 = vadd.f32 0.0, %v1230
        %v1232 = vpop.f32.mrb[0].mxu0
        %1233 = vmatprep.mubr.f32.mxu0 0.0
        %1234 = vmatmul.mubr.f32.gmra.mrb[0].mxu0 %v1011
        %v1235 = vpop.f32.mrb[0].mxu0
        %v1236 = vadd.f32 0.0, %v1235
        %v1237 = vpop.f32.mrb[0].mxu0
        %1238 = vmatprep.mubr.f32.mxu0 0.0
        %1239 = vmatmul.mubr.f32.gmra.mrb[0].mxu0 %v1014
        %v1240 = vpop.f32.mrb[0].mxu0
        %v1241 = vadd.f32 0.0, %v1240
        %v1242 = vpop.f32.mrb[0].mxu0
        %1243 = vdwg.mxu0
        %v1244 = vadd.f32 %v728, %v1086
        %v1245 = vadd.f32 %v733, %v1091
        %v1246 = vadd.f32 %v738, %v1096
        %v1247 = vadd.f32 %v743, %v1101
        %v1248 = vadd.f32 %v748, %v1106
        %v1249 = vadd.f32 %v753, %v1111
        %v1250 = vadd.f32 %v758, %v1116
        %v1251 = vadd.f32 %v763, %v1121
        %v1252 = vadd.f32 %v768, %v1126
        %v1253 = vadd.f32 %v773, %v1131
        %v1254 = vadd.f32 %v778, %v1136
        %v1255 = vadd.f32 %v783, %v1141
        %v1256 = vadd.f32 %v788, %v1146
        %v1257 = vadd.f32 %v793, %v1151
        %v1258 = vadd.f32 %v798, %v1156
        %v1259 = vadd.f32 %v803, %v1161
        %v1260 = vadd.f32 %v808, %v1166
        %v1261 = vadd.f32 %v813, %v1171
        %v1262 = vadd.f32 %v818, %v1176
        %v1263 = vadd.f32 %v823, %v1181
        %v1264 = vadd.f32 %v828, %v1186
        %v1265 = vadd.f32 %v833, %v1191
        %v1266 = vadd.f32 %v838, %v1196
        %v1267 = vadd.f32 %v843, %v1201
        %v1268 = vadd.f32 %v848, %v1206
        %v1269 = vadd.f32 %v853, %v1211
        %v1270 = vadd.f32 %v858, %v1216
        %v1271 = vadd.f32 %v863, %v1221
        %v1272 = vadd.f32 %v868, %v1226
        %v1273 = vadd.f32 %v873, %v1231
        %v1274 = vadd.f32 %v878, %v1236
        %v1275 = vadd.f32 %v883, %v1241
        %s1276 = scalar_lea.vmem %s168, 24
        %v1277 = vld [vmem:[%s1276] sm:$0xff]
        %v1278 = vld [vmem:[%s1276 + $0x8] sm:$0xff]
        %v1279 = vld [vmem:[%s1276 + $0x18] sm:$0xff]
        %v1280 = vld [vmem:[%s1276 + $0x20] sm:$0xff]
        %v1281 = vld [vmem:[%s1276 + $0x30] sm:$0xff]
        %v1282 = vld [vmem:[%s1276 + $0x38] sm:$0xff]
        %v1283 = vld [vmem:[%s1276 + $0x48] sm:$0xff]
        %v1284 = vld [vmem:[%s1276 + $0x50] sm:$0xff]
        %v1285 = vld [vmem:[%s1276 + $0x60] sm:$0xff]
        %v1286 = vld [vmem:[%s1276 + $0x68] sm:$0xff]
        %v1287 = vld [vmem:[%s1276 + $0x78] sm:$0xff]
        %v1288 = vld [vmem:[%s1276 + $0x80] sm:$0xff]
        %v1289 = vld [vmem:[%s1276 + $0x90] sm:$0xff]
        %v1290 = vld [vmem:[%s1276 + $0x98] sm:$0xff]
        %v1291 = vld [vmem:[%s1276 + $0xa8] sm:$0xff]
        %v1292 = vld [vmem:[%s1276 + $0xb0] sm:$0xff]
        %v1293 = vld [vmem:[%s1276 + $0xc0] sm:$0xff]
        %v1294 = vld [vmem:[%s1276 + $0xc8] sm:$0xff]
        %v1295 = vld [vmem:[%s1276 + $0xd8] sm:$0xff]
        %v1296 = vld [vmem:[%s1276 + $0xe0] sm:$0xff]
        %v1297 = vld [vmem:[%s1276 + $0xf0] sm:$0xff]
        %v1298 = vld [vmem:[%s1276 + $0xf8] sm:$0xff]
        %v1299 = vld [vmem:[%s1276 + $0x108] sm:$0xff]
        %v1300 = vld [vmem:[%s1276 + $0x110] sm:$0xff]
        %v1301 = vld [vmem:[%s1276 + $0x120] sm:$0xff]
        %v1302 = vld [vmem:[%s1276 + $0x128] sm:$0xff]
        %v1303 = vld [vmem:[%s1276 + $0x138] sm:$0xff]
        %v1304 = vld [vmem:[%s1276 + $0x140] sm:$0xff]
        %v1305 = vld [vmem:[%s1276 + $0x150] sm:$0xff]
        %v1306 = vld [vmem:[%s1276 + $0x158] sm:$0xff]
        %v1307 = vld [vmem:[%s1276 + $0x168] sm:$0xff]
        %v1308 = vld [vmem:[%s1276 + $0x170] sm:$0xff]
        %s1309 = scalar_lea.vmem %s1, 12
        %v1310 = vld [vmem:[%s1309] sm:$0xf]
        %v1312 = vsel %vm236, %v1277, 0
        %v1315 = vsel %vm236, %v1278, 0
        %v1318 = vsel %vm236, %v1279, 0
        %v1321 = vsel %vm236, %v1280, 0
        %v1324 = vsel %vm236, %v1281, 0
        %v1327 = vsel %vm236, %v1282, 0
        %v1330 = vsel %vm236, %v1283, 0
        %v1333 = vsel %vm236, %v1284, 0
        %v1336 = vsel %vm236, %v1285, 0
        %v1339 = vsel %vm236, %v1286, 0
        %v1342 = vsel %vm236, %v1287, 0
        %v1345 = vsel %vm236, %v1288, 0
        %v1348 = vsel %vm236, %v1289, 0
        %v1351 = vsel %vm236, %v1290, 0
        %v1354 = vsel %vm236, %v1291, 0
        %v1357 = vsel %vm236, %v1292, 0
        %v1360 = vsel %vm236, %v1293, 0
        %v1363 = vsel %vm236, %v1294, 0
        %v1366 = vsel %vm236, %v1295, 0
        %v1369 = vsel %vm236, %v1296, 0
        %v1372 = vsel %vm236, %v1297, 0
        %v1375 = vsel %vm236, %v1298, 0
        %v1378 = vsel %vm236, %v1299, 0
        %v1381 = vsel %vm236, %v1300, 0
        %v1384 = vsel %vm236, %v1301, 0
        %v1387 = vsel %vm236, %v1302, 0
        %v1390 = vsel %vm236, %v1303, 0
        %v1393 = vsel %vm236, %v1304, 0
        %v1396 = vsel %vm236, %v1305, 0
        %v1399 = vsel %vm236, %v1306, 0
        %v1402 = vsel %vm236, %v1307, 0
        %v1405 = vsel %vm236, %v1308, 0
        %v1408 = vsel %vm333, %v1310, 0
        %1410 = vmatprep.subr.mxu0 0.0
        %1411 = vmatpush1.msra.mxu0 %v1408
        %1412 = vmatprep.subr.mxu0 0.0
        %1413 = vmatpush1.msra.mxu0 0.0
        %1414 = vmatprep.subr.mxu0 0.0
        %1415 = vmatpush1.msra.mxu0 0.0
        %1416 = vmatprep.subr.mxu0 0.0
        %1417 = vmatpush1.msra.mxu0 0.0
        %1418 = vmatprep.subr.mxu0 0.0
        %1419 = vmatpush1.msra.mxu0 0.0
        %1420 = vmatprep.subr.mxu0 0.0
        %1421 = vmatpush1.msra.mxu0 0.0
        %1422 = vmatprep.subr.mxu0 0.0
        %1423 = vmatpush1.msra.mxu0 0.0
        %1424 = vmatprep.subr.mxu0 0.0
        %1425 = vmatpush1.msra.mxu0 0.0
        %1426 = vmatprep.subr.mxu0 0.0
        %1427 = vmatpush1.msra.mxu0 0.0
        %1428 = vmatprep.subr.mxu0 0.0
        %1429 = vmatpush1.msra.mxu0 0.0
        %1430 = vmatprep.subr.mxu0 0.0
        %1431 = vmatpush1.msra.mxu0 0.0
        %1432 = vmatprep.subr.mxu0 0.0
        %1433 = vmatpush1.msra.mxu0 0.0
        %1434 = vmatprep.subr.mxu0 0.0
        %1435 = vmatpush1.msra.mxu0 0.0
        %1436 = vmatprep.subr.mxu0 0.0
        %1437 = vmatpush1.msra.mxu0 0.0
        %1438 = vmatprep.subr.mxu0 0.0
        %1439 = vmatpush1.msra.mxu0 0.0
        %1440 = vmatprep.subr.mxu0 0.0
        %1441 = vmatpush1.msra.mxu0 0.0
        %1442 = vmatprep.subr.mxu0 0.0
        %1443 = vmatpush1.msra.mxu0 0.0
        %1444 = vmatprep.subr.mxu0 0.0
        %1445 = vmatpush1.msra.mxu0 0.0
        %1446 = vmatprep.subr.mxu0 0.0
        %1447 = vmatpush1.msra.mxu0 0.0
        %1448 = vmatprep.subr.mxu0 0.0
        %1449 = vmatpush1.msra.mxu0 0.0
        %1450 = vmatprep.subr.mxu0 0.0
        %1451 = vmatpush1.msra.mxu0 0.0
        %1452 = vmatprep.subr.mxu0 0.0
        %1453 = vmatpush1.msra.mxu0 0.0
        %1454 = vmatprep.subr.mxu0 0.0
        %1455 = vmatpush1.msra.mxu0 0.0
        %1456 = vmatprep.subr.mxu0 0.0
        %1457 = vmatpush1.msra.mxu0 0.0
        %1458 = vmatprep.subr.mxu0 0.0
        %1459 = vmatpush1.msra.mxu0 0.0
        %1460 = vmatprep.subr.mxu0 0.0
        %1461 = vmatpush1.msra.mxu0 0.0
        %1462 = vmatprep.subr.mxu0 0.0
        %1463 = vmatpush1.msra.mxu0 0.0
        %1464 = vmatprep.subr.mxu0 0.0
        %1465 = vmatpush1.msra.mxu0 0.0
        %1466 = vmatprep.subr.mxu0 0.0
        %1467 = vmatpush1.msra.mxu0 0.0
        %1468 = vmatprep.subr.mxu0 0.0
        %1469 = vmatpush1.msra.mxu0 0.0
        %1470 = vmatprep.subr.mxu0 0.0
        %1471 = vmatpush1.msra.mxu0 0.0
        %1472 = vmatprep.subr.mxu0 0.0
        %1473 = vmatpush1.msra.mxu0 0.0
        %1474 = vmatprep.mubr.f32.mxu0 0.0
        %1475 = vmatmul.mubr.f32.gmra.mrb[0].mxu0 %v1312
        %v1476 = vpop.f32.mrb[0].mxu0
        %v1477 = vadd.f32 0.0, %v1476
        %v1478 = vpop.f32.mrb[0].mxu0
        %1479 = vmatprep.mubr.f32.mxu0 0.0
        %1480 = vmatmul.mubr.f32.gmra.mrb[0].mxu0 %v1315
        %v1481 = vpop.f32.mrb[0].mxu0
        %v1482 = vadd.f32 0.0, %v1481
        %v1483 = vpop.f32.mrb[0].mxu0
        %1484 = vmatprep.mubr.f32.mxu0 0.0
        %1485 = vmatmul.mubr.f32.gmra.mrb[0].mxu0 %v1318
        %v1486 = vpop.f32.mrb[0].mxu0
        %v1487 = vadd.f32 0.0, %v1486
        %v1488 = vpop.f32.mrb[0].mxu0
        %1489 = vmatprep.mubr.f32.mxu0 0.0
        %1490 = vmatmul.mubr.f32.gmra.mrb[0].mxu0 %v1321
        %v1491 = vpop.f32.mrb[0].mxu0
        %v1492 = vadd.f32 0.0, %v1491
        %v1493 = vpop.f32.mrb[0].mxu0
        %1494 = vmatprep.mubr.f32.mxu0 0.0
        %1495 = vmatmul.mubr.f32.gmra.mrb[0].mxu0 %v1324
        %v1496 = vpop.f32.mrb[0].mxu0
        %v1497 = vadd.f32 0.0, %v1496
        %v1498 = vpop.f32.mrb[0].mxu0
        %1499 = vmatprep.mubr.f32.mxu0 0.0
        %1500 = vmatmul.mubr.f32.gmra.mrb[0].mxu0 %v1327
        %v1501 = vpop.f32.mrb[0].mxu0
        %v1502 = vadd.f32 0.0, %v1501
        %v1503 = vpop.f32.mrb[0].mxu0
        %1504 = vmatprep.mubr.f32.mxu0 0.0
        %1505 = vmatmul.mubr.f32.gmra.mrb[0].mxu0 %v1330
        %v1506 = vpop.f32.mrb[0].mxu0
        %v1507 = vadd.f32 0.0, %v1506
        %v1508 = vpop.f32.mrb[0].mxu0
        %1509 = vmatprep.mubr.f32.mxu0 0.0
        %1510 = vmatmul.mubr.f32.gmra.mrb[0].mxu0 %v1333
        %v1511 = vpop.f32.mrb[0].mxu0
        %v1512 = vadd.f32 0.0, %v1511
        %v1513 = vpop.f32.mrb[0].mxu0
        %1514 = vmatprep.mubr.f32.mxu0 0.0
        %1515 = vmatmul.mubr.f32.gmra.mrb[0].mxu0 %v1336
        %v1516 = vpop.f32.mrb[0].mxu0
        %v1517 = vadd.f32 0.0, %v1516
        %v1518 = vpop.f32.mrb[0].mxu0
        %1519 = vmatprep.mubr.f32.mxu0 0.0
        %1520 = vmatmul.mubr.f32.gmra.mrb[0].mxu0 %v1339
        %v1521 = vpop.f32.mrb[0].mxu0
        %v1522 = vadd.f32 0.0, %v1521
        %v1523 = vpop.f32.mrb[0].mxu0
        %1524 = vmatprep.mubr.f32.mxu0 0.0
        %1525 = vmatmul.mubr.f32.gmra.mrb[0].mxu0 %v1342
        %v1526 = vpop.f32.mrb[0].mxu0
        %v1527 = vadd.f32 0.0, %v1526
        %v1528 = vpop.f32.mrb[0].mxu0
        %1529 = vmatprep.mubr.f32.mxu0 0.0
        %1530 = vmatmul.mubr.f32.gmra.mrb[0].mxu0 %v1345
        %v1531 = vpop.f32.mrb[0].mxu0
        %v1532 = vadd.f32 0.0, %v1531
        %v1533 = vpop.f32.mrb[0].mxu0
        %1534 = vmatprep.mubr.f32.mxu0 0.0
        %1535 = vmatmul.mubr.f32.gmra.mrb[0].mxu0 %v1348
        %v1536 = vpop.f32.mrb[0].mxu0
        %v1537 = vadd.f32 0.0, %v1536
        %v1538 = vpop.f32.mrb[0].mxu0
        %1539 = vmatprep.mubr.f32.mxu0 0.0
        %1540 = vmatmul.mubr.f32.gmra.mrb[0].mxu0 %v1351
        %v1541 = vpop.f32.mrb[0].mxu0
        %v1542 = vadd.f32 0.0, %v1541
        %v1543 = vpop.f32.mrb[0].mxu0
        %1544 = vmatprep.mubr.f32.mxu0 0.0
        %1545 = vmatmul.mubr.f32.gmra.mrb[0].mxu0 %v1354
        %v1546 = vpop.f32.mrb[0].mxu0
        %v1547 = vadd.f32 0.0, %v1546
        %v1548 = vpop.f32.mrb[0].mxu0
        %1549 = vmatprep.mubr.f32.mxu0 0.0
        %1550 = vmatmul.mubr.f32.gmra.mrb[0].mxu0 %v1357
        %v1551 = vpop.f32.mrb[0].mxu0
        %v1552 = vadd.f32 0.0, %v1551
        %v1553 = vpop.f32.mrb[0].mxu0
        %1554 = vmatprep.mubr.f32.mxu0 0.0
        %1555 = vmatmul.mubr.f32.gmra.mrb[0].mxu0 %v1360
        %v1556 = vpop.f32.mrb[0].mxu0
        %v1557 = vadd.f32 0.0, %v1556
        %v1558 = vpop.f32.mrb[0].mxu0
        %1559 = vmatprep.mubr.f32.mxu0 0.0
        %1560 = vmatmul.mubr.f32.gmra.mrb[0].mxu0 %v1363
        %v1561 = vpop.f32.mrb[0].mxu0
        %v1562 = vadd.f32 0.0, %v1561
        %v1563 = vpop.f32.mrb[0].mxu0
        %1564 = vmatprep.mubr.f32.mxu0 0.0
        %1565 = vmatmul.mubr.f32.gmra.mrb[0].mxu0 %v1366
        %v1566 = vpop.f32.mrb[0].mxu0
        %v1567 = vadd.f32 0.0, %v1566
        %v1568 = vpop.f32.mrb[0].mxu0
        %1569 = vmatprep.mubr.f32.mxu0 0.0
        %1570 = vmatmul.mubr.f32.gmra.mrb[0].mxu0 %v1369
        %v1571 = vpop.f32.mrb[0].mxu0
        %v1572 = vadd.f32 0.0, %v1571
        %v1573 = vpop.f32.mrb[0].mxu0
        %1574 = vmatprep.mubr.f32.mxu0 0.0
        %1575 = vmatmul.mubr.f32.gmra.mrb[0].mxu0 %v1372
        %v1576 = vpop.f32.mrb[0].mxu0
        %v1577 = vadd.f32 0.0, %v1576
        %v1578 = vpop.f32.mrb[0].mxu0
        %1579 = vmatprep.mubr.f32.mxu0 0.0
        %1580 = vmatmul.mubr.f32.gmra.mrb[0].mxu0 %v1375
        %v1581 = vpop.f32.mrb[0].mxu0
        %v1582 = vadd.f32 0.0, %v1581
        %v1583 = vpop.f32.mrb[0].mxu0
        %1584 = vmatprep.mubr.f32.mxu0 0.0
        %1585 = vmatmul.mubr.f32.gmra.mrb[0].mxu0 %v1378
        %v1586 = vpop.f32.mrb[0].mxu0
        %v1587 = vadd.f32 0.0, %v1586
        %v1588 = vpop.f32.mrb[0].mxu0
        %1589 = vmatprep.mubr.f32.mxu0 0.0
        %1590 = vmatmul.mubr.f32.gmra.mrb[0].mxu0 %v1381
        %v1591 = vpop.f32.mrb[0].mxu0
        %v1592 = vadd.f32 0.0, %v1591
        %v1593 = vpop.f32.mrb[0].mxu0
        %1594 = vmatprep.mubr.f32.mxu0 0.0
        %1595 = vmatmul.mubr.f32.gmra.mrb[0].mxu0 %v1384
        %v1596 = vpop.f32.mrb[0].mxu0
        %v1597 = vadd.f32 0.0, %v1596
        %v1598 = vpop.f32.mrb[0].mxu0
        %1599 = vmatprep.mubr.f32.mxu0 0.0
        %1600 = vmatmul.mubr.f32.gmra.mrb[0].mxu0 %v1387
        %v1601 = vpop.f32.mrb[0].mxu0
        %v1602 = vadd.f32 0.0, %v1601
        %v1603 = vpop.f32.mrb[0].mxu0
        %1604 = vmatprep.mubr.f32.mxu0 0.0
        %1605 = vmatmul.mubr.f32.gmra.mrb[0].mxu0 %v1390
        %v1606 = vpop.f32.mrb[0].mxu0
        %v1607 = vadd.f32 0.0, %v1606
        %v1608 = vpop.f32.mrb[0].mxu0
        %1609 = vmatprep.mubr.f32.mxu0 0.0
        %1610 = vmatmul.mubr.f32.gmra.mrb[0].mxu0 %v1393
        %v1611 = vpop.f32.mrb[0].mxu0
        %v1612 = vadd.f32 0.0, %v1611
        %v1613 = vpop.f32.mrb[0].mxu0
        %1614 = vmatprep.mubr.f32.mxu0 0.0
        %1615 = vmatmul.mubr.f32.gmra.mrb[0].mxu0 %v1396
        %v1616 = vpop.f32.mrb[0].mxu0
        %v1617 = vadd.f32 0.0, %v1616
        %v1618 = vpop.f32.mrb[0].mxu0
        %1619 = vmatprep.mubr.f32.mxu0 0.0
        %1620 = vmatmul.mubr.f32.gmra.mrb[0].mxu0 %v1399
        %v1621 = vpop.f32.mrb[0].mxu0
        %v1622 = vadd.f32 0.0, %v1621
        %v1623 = vpop.f32.mrb[0].mxu0
        %1624 = vmatprep.mubr.f32.mxu0 0.0
        %1625 = vmatmul.mubr.f32.gmra.mrb[0].mxu0 %v1402
        %v1626 = vpop.f32.mrb[0].mxu0
        %v1627 = vadd.f32 0.0, %v1626
        %v1628 = vpop.f32.mrb[0].mxu0
        %1629 = vmatprep.mubr.f32.mxu0 0.0
        %1630 = vmatmul.mubr.f32.gmra.mrb[0].mxu0 %v1405
        %v1631 = vpop.f32.mrb[0].mxu0
        %v1632 = vadd.f32 0.0, %v1631
        %v1633 = vpop.f32.mrb[0].mxu0
        %1634 = vdwg.mxu0
        %v1635 = vadd.f32 %v1244, %v1477
        %v1636 = vadd.f32 %v1245, %v1482
        %v1637 = vadd.f32 %v1246, %v1487
        %v1638 = vadd.f32 %v1247, %v1492
        %v1639 = vadd.f32 %v1248, %v1497
        %v1640 = vadd.f32 %v1249, %v1502
        %v1641 = vadd.f32 %v1250, %v1507
        %v1642 = vadd.f32 %v1251, %v1512
        %v1643 = vadd.f32 %v1252, %v1517
        %v1644 = vadd.f32 %v1253, %v1522
        %v1645 = vadd.f32 %v1254, %v1527
        %v1646 = vadd.f32 %v1255, %v1532
        %v1647 = vadd.f32 %v1256, %v1537
        %v1648 = vadd.f32 %v1257, %v1542
        %v1649 = vadd.f32 %v1258, %v1547
        %v1650 = vadd.f32 %v1259, %v1552
        %v1651 = vadd.f32 %v1260, %v1557
        %v1652 = vadd.f32 %v1261, %v1562
        %v1653 = vadd.f32 %v1262, %v1567
        %v1654 = vadd.f32 %v1263, %v1572
        %v1655 = vadd.f32 %v1264, %v1577
        %v1656 = vadd.f32 %v1265, %v1582
        %v1657 = vadd.f32 %v1266, %v1587
        %v1658 = vadd.f32 %v1267, %v1592
        %v1659 = vadd.f32 %v1268, %v1597
        %v1660 = vadd.f32 %v1269, %v1602
        %v1661 = vadd.f32 %v1270, %v1607
        %v1662 = vadd.f32 %v1271, %v1612
        %v1663 = vadd.f32 %v1272, %v1617
        %v1664 = vadd.f32 %v1273, %v1622
        %v1665 = vadd.f32 %v1274, %v1627
        %v1666 = vadd.f32 %v1275, %v1632
        %v1667 = vld [vmem:[%s1276 + $0x1] sm:$0xff]
        %v1668 = vld [vmem:[%s1276 + $0x9] sm:$0xff]
        %v1669 = vld [vmem:[%s1276 + $0x19] sm:$0xff]
        %v1670 = vld [vmem:[%s1276 + $0x21] sm:$0xff]
        %v1671 = vld [vmem:[%s1276 + $0x31] sm:$0xff]
        %v1672 = vld [vmem:[%s1276 + $0x39] sm:$0xff]
        %v1673 = vld [vmem:[%s1276 + $0x49] sm:$0xff]
        %v1674 = vld [vmem:[%s1276 + $0x51] sm:$0xff]
        %v1675 = vld [vmem:[%s1276 + $0x61] sm:$0xff]
        %v1676 = vld [vmem:[%s1276 + $0x69] sm:$0xff]
        %v1677 = vld [vmem:[%s1276 + $0x79] sm:$0xff]
        %v1678 = vld [vmem:[%s1276 + $0x81] sm:$0xff]
        %v1679 = vld [vmem:[%s1276 + $0x91] sm:$0xff]
        %v1680 = vld [vmem:[%s1276 + $0x99] sm:$0xff]
        %v1681 = vld [vmem:[%s1276 + $0xa9] sm:$0xff]
        %v1682 = vld [vmem:[%s1276 + $0xb1] sm:$0xff]
        %v1683 = vld [vmem:[%s1276 + $0xc1] sm:$0xff]
        %v1684 = vld [vmem:[%s1276 + $0xc9] sm:$0xff]
        %v1685 = vld [vmem:[%s1276 + $0xd9] sm:$0xff]
        %v1686 = vld [vmem:[%s1276 + $0xe1] sm:$0xff]
        %v1687 = vld [vmem:[%s1276 + $0xf1] sm:$0xff]
        %v1688 = vld [vmem:[%s1276 + $0xf9] sm:$0xff]
        %v1689 = vld [vmem:[%s1276 + $0x109] sm:$0xff]
        %v1690 = vld [vmem:[%s1276 + $0x111] sm:$0xff]
        %v1691 = vld [vmem:[%s1276 + $0x121] sm:$0xff]
        %v1692 = vld [vmem:[%s1276 + $0x129] sm:$0xff]
        %v1693 = vld [vmem:[%s1276 + $0x139] sm:$0xff]
        %v1694 = vld [vmem:[%s1276 + $0x141] sm:$0xff]
        %v1695 = vld [vmem:[%s1276 + $0x151] sm:$0xff]
        %v1696 = vld [vmem:[%s1276 + $0x159] sm:$0xff]
        %v1697 = vld [vmem:[%s1276 + $0x169] sm:$0xff]
        %v1698 = vld [vmem:[%s1276 + $0x171] sm:$0xff]
        %s1699 = scalar_lea.vmem %s1, 16
        %v1700 = vld [vmem:[%s1699] sm:$0xf]
        %v1702 = vsel %vm236, %v1667, 0
        %v1705 = vsel %vm236, %v1668, 0
        %v1708 = vsel %vm236, %v1669, 0
        %v1711 = vsel %vm236, %v1670, 0
        %v1714 = vsel %vm236, %v1671, 0
        %v1717 = vsel %vm236, %v1672, 0
        %v1720 = vsel %vm236, %v1673, 0
        %v1723 = vsel %vm236, %v1674, 0
        %v1726 = vsel %vm236, %v1675, 0
        %v1729 = vsel %vm236, %v1676, 0
        %v1732 = vsel %vm236, %v1677, 0
        %v1735 = vsel %vm236, %v1678, 0
        %v1738 = vsel %vm236, %v1679, 0
        %v1741 = vsel %vm236, %v1680, 0
        %v1744 = vsel %vm236, %v1681, 0
        %v1747 = vsel %vm236, %v1682, 0
        %v1750 = vsel %vm236, %v1683, 0
        %v1753 = vsel %vm236, %v1684, 0
        %v1756 = vsel %vm236, %v1685, 0
        %v1759 = vsel %vm236, %v1686, 0
        %v1762 = vsel %vm236, %v1687, 0
        %v1765 = vsel %vm236, %v1688, 0
        %v1768 = vsel %vm236, %v1689, 0
        %v1771 = vsel %vm236, %v1690, 0
        %v1774 = vsel %vm236, %v1691, 0
        %v1777 = vsel %vm236, %v1692, 0
        %v1780 = vsel %vm236, %v1693, 0
        %v1783 = vsel %vm236, %v1694, 0
        %v1786 = vsel %vm236, %v1695, 0
        %v1789 = vsel %vm236, %v1696, 0
        %v1792 = vsel %vm236, %v1697, 0
        %v1795 = vsel %vm236, %v1698, 0
        %v1798 = vsel %vm333, %v1700, 0
        %1800 = vmatprep.subr.mxu0 0.0
        %1801 = vmatpush1.msra.mxu0 %v1798
        %1802 = vmatprep.subr.mxu0 0.0
        %1803 = vmatpush1.msra.mxu0 0.0
        %1804 = vmatprep.subr.mxu0 0.0
        %1805 = vmatpush1.msra.mxu0 0.0
        %1806 = vmatprep.subr.mxu0 0.0
        %1807 = vmatpush1.msra.mxu0 0.0
        %1808 = vmatprep.subr.mxu0 0.0
        %1809 = vmatpush1.msra.mxu0 0.0
        %1810 = vmatprep.subr.mxu0 0.0
        %1811 = vmatpush1.msra.mxu0 0.0
        %1812 = vmatprep.subr.mxu0 0.0
        %1813 = vmatpush1.msra.mxu0 0.0
        %1814 = vmatprep.subr.mxu0 0.0
        %1815 = vmatpush1.msra.mxu0 0.0
        %1816 = vmatprep.subr.mxu0 0.0
        %1817 = vmatpush1.msra.mxu0 0.0
        %1818 = vmatprep.subr.mxu0 0.0
        %1819 = vmatpush1.msra.mxu0 0.0
        %1820 = vmatprep.subr.mxu0 0.0
        %1821 = vmatpush1.msra.mxu0 0.0
        %1822 = vmatprep.subr.mxu0 0.0
        %1823 = vmatpush1.msra.mxu0 0.0
        %1824 = vmatprep.subr.mxu0 0.0
        %1825 = vmatpush1.msra.mxu0 0.0
        %1826 = vmatprep.subr.mxu0 0.0
        %1827 = vmatpush1.msra.mxu0 0.0
        %1828 = vmatprep.subr.mxu0 0.0
        %1829 = vmatpush1.msra.mxu0 0.0
        %1830 = vmatprep.subr.mxu0 0.0
        %1831 = vmatpush1.msra.mxu0 0.0
        %1832 = vmatprep.subr.mxu0 0.0
        %1833 = vmatpush1.msra.mxu0 0.0
        %1834 = vmatprep.subr.mxu0 0.0
        %1835 = vmatpush1.msra.mxu0 0.0
        %1836 = vmatprep.subr.mxu0 0.0
        %1837 = vmatpush1.msra.mxu0 0.0
        %1838 = vmatprep.subr.mxu0 0.0
        %1839 = vmatpush1.msra.mxu0 0.0
        %1840 = vmatprep.subr.mxu0 0.0
        %1841 = vmatpush1.msra.mxu0 0.0
        %1842 = vmatprep.subr.mxu0 0.0
        %1843 = vmatpush1.msra.mxu0 0.0
        %1844 = vmatprep.subr.mxu0 0.0
        %1845 = vmatpush1.msra.mxu0 0.0
        %1846 = vmatprep.subr.mxu0 0.0
        %1847 = vmatpush1.msra.mxu0 0.0
        %1848 = vmatprep.subr.mxu0 0.0
        %1849 = vmatpush1.msra.mxu0 0.0
        %1850 = vmatprep.subr.mxu0 0.0
        %1851 = vmatpush1.msra.mxu0 0.0
        %1852 = vmatprep.subr.mxu0 0.0
        %1853 = vmatpush1.msra.mxu0 0.0
        %1854 = vmatprep.subr.mxu0 0.0
        %1855 = vmatpush1.msra.mxu0 0.0
        %1856 = vmatprep.subr.mxu0 0.0
        %1857 = vmatpush1.msra.mxu0 0.0
        %1858 = vmatprep.subr.mxu0 0.0
        %1859 = vmatpush1.msra.mxu0 0.0
        %1860 = vmatprep.subr.mxu0 0.0
        %1861 = vmatpush1.msra.mxu0 0.0
        %1862 = vmatprep.subr.mxu0 0.0
        %1863 = vmatpush1.msra.mxu0 0.0
        %1864 = vmatprep.mubr.f32.mxu0 0.0
        %1865 = vmatmul.mubr.f32.gmra.mrb[0].mxu0 %v1702
        %v1866 = vpop.f32.mrb[0].mxu0
        %v1867 = vadd.f32 0.0, %v1866
        %v1868 = vpop.f32.mrb[0].mxu0
        %1869 = vmatprep.mubr.f32.mxu0 0.0
        %1870 = vmatmul.mubr.f32.gmra.mrb[0].mxu0 %v1705
        %v1871 = vpop.f32.mrb[0].mxu0
        %v1872 = vadd.f32 0.0, %v1871
        %v1873 = vpop.f32.mrb[0].mxu0
        %1874 = vmatprep.mubr.f32.mxu0 0.0
        %1875 = vmatmul.mubr.f32.gmra.mrb[0].mxu0 %v1708
        %v1876 = vpop.f32.mrb[0].mxu0
        %v1877 = vadd.f32 0.0, %v1876
        %v1878 = vpop.f32.mrb[0].mxu0
        %1879 = vmatprep.mubr.f32.mxu0 0.0
        %1880 = vmatmul.mubr.f32.gmra.mrb[0].mxu0 %v1711
        %v1881 = vpop.f32.mrb[0].mxu0
        %v1882 = vadd.f32 0.0, %v1881
        %v1883 = vpop.f32.mrb[0].mxu0
        %1884 = vmatprep.mubr.f32.mxu0 0.0
        %1885 = vmatmul.mubr.f32.gmra.mrb[0].mxu0 %v1714
        %v1886 = vpop.f32.mrb[0].mxu0
        %v1887 = vadd.f32 0.0, %v1886
        %v1888 = vpop.f32.mrb[0].mxu0
        %1889 = vmatprep.mubr.f32.mxu0 0.0
        %1890 = vmatmul.mubr.f32.gmra.mrb[0].mxu0 %v1717
        %v1891 = vpop.f32.mrb[0].mxu0
        %v1892 = vadd.f32 0.0, %v1891
        %v1893 = vpop.f32.mrb[0].mxu0
        %1894 = vmatprep.mubr.f32.mxu0 0.0
        %1895 = vmatmul.mubr.f32.gmra.mrb[0].mxu0 %v1720
        %v1896 = vpop.f32.mrb[0].mxu0
        %v1897 = vadd.f32 0.0, %v1896
        %v1898 = vpop.f32.mrb[0].mxu0
        %1899 = vmatprep.mubr.f32.mxu0 0.0
        %1900 = vmatmul.mubr.f32.gmra.mrb[0].mxu0 %v1723
        %v1901 = vpop.f32.mrb[0].mxu0
        %v1902 = vadd.f32 0.0, %v1901
        %v1903 = vpop.f32.mrb[0].mxu0
        %1904 = vmatprep.mubr.f32.mxu0 0.0
        %1905 = vmatmul.mubr.f32.gmra.mrb[0].mxu0 %v1726
        %v1906 = vpop.f32.mrb[0].mxu0
        %v1907 = vadd.f32 0.0, %v1906
        %v1908 = vpop.f32.mrb[0].mxu0
        %1909 = vmatprep.mubr.f32.mxu0 0.0
        %1910 = vmatmul.mubr.f32.gmra.mrb[0].mxu0 %v1729
        %v1911 = vpop.f32.mrb[0].mxu0
        %v1912 = vadd.f32 0.0, %v1911
        %v1913 = vpop.f32.mrb[0].mxu0
        %1914 = vmatprep.mubr.f32.mxu0 0.0
        %1915 = vmatmul.mubr.f32.gmra.mrb[0].mxu0 %v1732
        %v1916 = vpop.f32.mrb[0].mxu0
        %v1917 = vadd.f32 0.0, %v1916
        %v1918 = vpop.f32.mrb[0].mxu0
        %1919 = vmatprep.mubr.f32.mxu0 0.0
        %1920 = vmatmul.mubr.f32.gmra.mrb[0].mxu0 %v1735
        %v1921 = vpop.f32.mrb[0].mxu0
        %v1922 = vadd.f32 0.0, %v1921
        %v1923 = vpop.f32.mrb[0].mxu0
        %1924 = vmatprep.mubr.f32.mxu0 0.0
        %1925 = vmatmul.mubr.f32.gmra.mrb[0].mxu0 %v1738
        %v1926 = vpop.f32.mrb[0].mxu0
        %v1927 = vadd.f32 0.0, %v1926
        %v1928 = vpop.f32.mrb[0].mxu0
        %1929 = vmatprep.mubr.f32.mxu0 0.0
        %1930 = vmatmul.mubr.f32.gmra.mrb[0].mxu0 %v1741
        %v1931 = vpop.f32.mrb[0].mxu0
        %v1932 = vadd.f32 0.0, %v1931
        %v1933 = vpop.f32.mrb[0].mxu0
        %1934 = vmatprep.mubr.f32.mxu0 0.0
        %1935 = vmatmul.mubr.f32.gmra.mrb[0].mxu0 %v1744
        %v1936 = vpop.f32.mrb[0].mxu0
        %v1937 = vadd.f32 0.0, %v1936
        %v1938 = vpop.f32.mrb[0].mxu0
        %1939 = vmatprep.mubr.f32.mxu0 0.0
        %1940 = vmatmul.mubr.f32.gmra.mrb[0].mxu0 %v1747
        %v1941 = vpop.f32.mrb[0].mxu0
        %v1942 = vadd.f32 0.0, %v1941
        %v1943 = vpop.f32.mrb[0].mxu0
        %1944 = vmatprep.mubr.f32.mxu0 0.0
        %1945 = vmatmul.mubr.f32.gmra.mrb[0].mxu0 %v1750
        %v1946 = vpop.f32.mrb[0].mxu0
        %v1947 = vadd.f32 0.0, %v1946
        %v1948 = vpop.f32.mrb[0].mxu0
        %1949 = vmatprep.mubr.f32.mxu0 0.0
        %1950 = vmatmul.mubr.f32.gmra.mrb[0].mxu0 %v1753
        %v1951 = vpop.f32.mrb[0].mxu0
        %v1952 = vadd.f32 0.0, %v1951
        %v1953 = vpop.f32.mrb[0].mxu0
        %1954 = vmatprep.mubr.f32.mxu0 0.0
        %1955 = vmatmul.mubr.f32.gmra.mrb[0].mxu0 %v1756
        %v1956 = vpop.f32.mrb[0].mxu0
        %v1957 = vadd.f32 0.0, %v1956
        %v1958 = vpop.f32.mrb[0].mxu0
        %1959 = vmatprep.mubr.f32.mxu0 0.0
        %1960 = vmatmul.mubr.f32.gmra.mrb[0].mxu0 %v1759
        %v1961 = vpop.f32.mrb[0].mxu0
        %v1962 = vadd.f32 0.0, %v1961
        %v1963 = vpop.f32.mrb[0].mxu0
        %1964 = vmatprep.mubr.f32.mxu0 0.0
        %1965 = vmatmul.mubr.f32.gmra.mrb[0].mxu0 %v1762
        %v1966 = vpop.f32.mrb[0].mxu0
        %v1967 = vadd.f32 0.0, %v1966
        %v1968 = vpop.f32.mrb[0].mxu0
        %1969 = vmatprep.mubr.f32.mxu0 0.0
        %1970 = vmatmul.mubr.f32.gmra.mrb[0].mxu0 %v1765
        %v1971 = vpop.f32.mrb[0].mxu0
        %v1972 = vadd.f32 0.0, %v1971
        %v1973 = vpop.f32.mrb[0].mxu0
        %1974 = vmatprep.mubr.f32.mxu0 0.0
        %1975 = vmatmul.mubr.f32.gmra.mrb[0].mxu0 %v1768
        %v1976 = vpop.f32.mrb[0].mxu0
        %v1977 = vadd.f32 0.0, %v1976
        %v1978 = vpop.f32.mrb[0].mxu0
        %1979 = vmatprep.mubr.f32.mxu0 0.0
        %1980 = vmatmul.mubr.f32.gmra.mrb[0].mxu0 %v1771
        %v1981 = vpop.f32.mrb[0].mxu0
        %v1982 = vadd.f32 0.0, %v1981
        %v1983 = vpop.f32.mrb[0].mxu0
        %1984 = vmatprep.mubr.f32.mxu0 0.0
        %1985 = vmatmul.mubr.f32.gmra.mrb[0].mxu0 %v1774
        %v1986 = vpop.f32.mrb[0].mxu0
        %v1987 = vadd.f32 0.0, %v1986
        %v1988 = vpop.f32.mrb[0].mxu0
        %1989 = vmatprep.mubr.f32.mxu0 0.0
        %1990 = vmatmul.mubr.f32.gmra.mrb[0].mxu0 %v1777
        %v1991 = vpop.f32.mrb[0].mxu0
        %v1992 = vadd.f32 0.0, %v1991
        %v1993 = vpop.f32.mrb[0].mxu0
        %1994 = vmatprep.mubr.f32.mxu0 0.0
        %1995 = vmatmul.mubr.f32.gmra.mrb[0].mxu0 %v1780
        %v1996 = vpop.f32.mrb[0].mxu0
        %v1997 = vadd.f32 0.0, %v1996
        %v1998 = vpop.f32.mrb[0].mxu0
        %1999 = vmatprep.mubr.f32.mxu0 0.0
        %2000 = vmatmul.mubr.f32.gmra.mrb[0].mxu0 %v1783
        %v2001 = vpop.f32.mrb[0].mxu0
        %v2002 = vadd.f32 0.0, %v2001
        %v2003 = vpop.f32.mrb[0].mxu0
        %2004 = vmatprep.mubr.f32.mxu0 0.0
        %2005 = vmatmul.mubr.f32.gmra.mrb[0].mxu0 %v1786
        %v2006 = vpop.f32.mrb[0].mxu0
        %v2007 = vadd.f32 0.0, %v2006
        %v2008 = vpop.f32.mrb[0].mxu0
        %2009 = vmatprep.mubr.f32.mxu0 0.0
        %2010 = vmatmul.mubr.f32.gmra.mrb[0].mxu0 %v1789
        %v2011 = vpop.f32.mrb[0].mxu0
        %v2012 = vadd.f32 0.0, %v2011
        %v2013 = vpop.f32.mrb[0].mxu0
        %2014 = vmatprep.mubr.f32.mxu0 0.0
        %2015 = vmatmul.mubr.f32.gmra.mrb[0].mxu0 %v1792
        %v2016 = vpop.f32.mrb[0].mxu0
        %v2017 = vadd.f32 0.0, %v2016
        %v2018 = vpop.f32.mrb[0].mxu0
        %2019 = vmatprep.mubr.f32.mxu0 0.0
        %2020 = vmatmul.mubr.f32.gmra.mrb[0].mxu0 %v1795
        %v2021 = vpop.f32.mrb[0].mxu0
        %v2022 = vadd.f32 0.0, %v2021
        %v2023 = vpop.f32.mrb[0].mxu0
        %2024 = vdwg.mxu0
        %v2025 = vadd.f32 %v1635, %v1867
        %v2026 = vadd.f32 %v1636, %v1872
        %v2027 = vadd.f32 %v1637, %v1877
        %v2028 = vadd.f32 %v1638, %v1882
        %v2029 = vadd.f32 %v1639, %v1887
        %v2030 = vadd.f32 %v1640, %v1892
        %v2031 = vadd.f32 %v1641, %v1897
        %v2032 = vadd.f32 %v1642, %v1902
        %v2033 = vadd.f32 %v1643, %v1907
        %v2034 = vadd.f32 %v1644, %v1912
        %v2035 = vadd.f32 %v1645, %v1917
        %v2036 = vadd.f32 %v1646, %v1922
        %v2037 = vadd.f32 %v1647, %v1927
        %v2038 = vadd.f32 %v1648, %v1932
        %v2039 = vadd.f32 %v1649, %v1937
        %v2040 = vadd.f32 %v1650, %v1942
        %v2041 = vadd.f32 %v1651, %v1947
        %v2042 = vadd.f32 %v1652, %v1952
        %v2043 = vadd.f32 %v1653, %v1957
        %v2044 = vadd.f32 %v1654, %v1962
        %v2045 = vadd.f32 %v1655, %v1967
        %v2046 = vadd.f32 %v1656, %v1972
        %v2047 = vadd.f32 %v1657, %v1977
        %v2048 = vadd.f32 %v1658, %v1982
        %v2049 = vadd.f32 %v1659, %v1987
        %v2050 = vadd.f32 %v1660, %v1992
        %v2051 = vadd.f32 %v1661, %v1997
        %v2052 = vadd.f32 %v1662, %v2002
        %v2053 = vadd.f32 %v1663, %v2007
        %v2054 = vadd.f32 %v1664, %v2012
        %v2055 = vadd.f32 %v1665, %v2017
        %v2056 = vadd.f32 %v1666, %v2022
        %v2057 = vld [vmem:[%s1276 + $0x2] sm:$0xff]
        %v2058 = vld [vmem:[%s1276 + $0xa] sm:$0xff]
        %v2059 = vld [vmem:[%s1276 + $0x1a] sm:$0xff]
        %v2060 = vld [vmem:[%s1276 + $0x22] sm:$0xff]
        %v2061 = vld [vmem:[%s1276 + $0x32] sm:$0xff]
        %v2062 = vld [vmem:[%s1276 + $0x3a] sm:$0xff]
        %v2063 = vld [vmem:[%s1276 + $0x4a] sm:$0xff]
        %v2064 = vld [vmem:[%s1276 + $0x52] sm:$0xff]
        %v2065 = vld [vmem:[%s1276 + $0x62] sm:$0xff]
        %v2066 = vld [vmem:[%s1276 + $0x6a] sm:$0xff]
        %v2067 = vld [vmem:[%s1276 + $0x7a] sm:$0xff]
        %v2068 = vld [vmem:[%s1276 + $0x82] sm:$0xff]
        %v2069 = vld [vmem:[%s1276 + $0x92] sm:$0xff]
        %v2070 = vld [vmem:[%s1276 + $0x9a] sm:$0xff]
        %v2071 = vld [vmem:[%s1276 + $0xaa] sm:$0xff]
        %v2072 = vld [vmem:[%s1276 + $0xb2] sm:$0xff]
        %v2073 = vld [vmem:[%s1276 + $0xc2] sm:$0xff]
        %v2074 = vld [vmem:[%s1276 + $0xca] sm:$0xff]
        %v2075 = vld [vmem:[%s1276 + $0xda] sm:$0xff]
        %v2076 = vld [vmem:[%s1276 + $0xe2] sm:$0xff]
        %v2077 = vld [vmem:[%s1276 + $0xf2] sm:$0xff]
        %v2078 = vld [vmem:[%s1276 + $0xfa] sm:$0xff]
        %v2079 = vld [vmem:[%s1276 + $0x10a] sm:$0xff]
        %v2080 = vld [vmem:[%s1276 + $0x112] sm:$0xff]
        %v2081 = vld [vmem:[%s1276 + $0x122] sm:$0xff]
        %v2082 = vld [vmem:[%s1276 + $0x12a] sm:$0xff]
        %v2083 = vld [vmem:[%s1276 + $0x13a] sm:$0xff]
        %v2084 = vld [vmem:[%s1276 + $0x142] sm:$0xff]
        %v2085 = vld [vmem:[%s1276 + $0x152] sm:$0xff]
        %v2086 = vld [vmem:[%s1276 + $0x15a] sm:$0xff]
        %v2087 = vld [vmem:[%s1276 + $0x16a] sm:$0xff]
        %v2088 = vld [vmem:[%s1276 + $0x172] sm:$0xff]
        %s2089 = scalar_lea.vmem %s1, 20
        %v2090 = vld [vmem:[%s2089] sm:$0xf]
        %v2092 = vsel %vm236, %v2057, 0
        %v2095 = vsel %vm236, %v2058, 0
        %v2098 = vsel %vm236, %v2059, 0
        %v2101 = vsel %vm236, %v2060, 0
        %v2104 = vsel %vm236, %v2061, 0
        %v2107 = vsel %vm236, %v2062, 0
        %v2110 = vsel %vm236, %v2063, 0
        %v2113 = vsel %vm236, %v2064, 0
        %v2116 = vsel %vm236, %v2065, 0
        %v2119 = vsel %vm236, %v2066, 0
        %v2122 = vsel %vm236, %v2067, 0
        %v2125 = vsel %vm236, %v2068, 0
        %v2128 = vsel %vm236, %v2069, 0
        %v2131 = vsel %vm236, %v2070, 0
        %v2134 = vsel %vm236, %v2071, 0
        %v2137 = vsel %vm236, %v2072, 0
        %v2140 = vsel %vm236, %v2073, 0
        %v2143 = vsel %vm236, %v2074, 0
        %v2146 = vsel %vm236, %v2075, 0
        %v2149 = vsel %vm236, %v2076, 0
        %v2152 = vsel %vm236, %v2077, 0
        %v2155 = vsel %vm236, %v2078, 0
        %v2158 = vsel %vm236, %v2079, 0
        %v2161 = vsel %vm236, %v2080, 0
        %v2164 = vsel %vm236, %v2081, 0
        %v2167 = vsel %vm236, %v2082, 0
        %v2170 = vsel %vm236, %v2083, 0
        %v2173 = vsel %vm236, %v2084, 0
        %v2176 = vsel %vm236, %v2085, 0
        %v2179 = vsel %vm236, %v2086, 0
        %v2182 = vsel %vm236, %v2087, 0
        %v2185 = vsel %vm236, %v2088, 0
        %v2188 = vsel %vm333, %v2090, 0
        %2190 = vmatprep.subr.mxu0 0.0
        %2191 = vmatpush1.msra.mxu0 %v2188
        %2192 = vmatprep.subr.mxu0 0.0
        %2193 = vmatpush1.msra.mxu0 0.0
        %2194 = vmatprep.subr.mxu0 0.0
        %2195 = vmatpush1.msra.mxu0 0.0
        %2196 = vmatprep.subr.mxu0 0.0
        %2197 = vmatpush1.msra.mxu0 0.0
        %2198 = vmatprep.subr.mxu0 0.0
        %2199 = vmatpush1.msra.mxu0 0.0
        %2200 = vmatprep.subr.mxu0 0.0
        %2201 = vmatpush1.msra.mxu0 0.0
        %2202 = vmatprep.subr.mxu0 0.0
        %2203 = vmatpush1.msra.mxu0 0.0
        %2204 = vmatprep.subr.mxu0 0.0
        %2205 = vmatpush1.msra.mxu0 0.0
        %2206 = vmatprep.subr.mxu0 0.0
        %2207 = vmatpush1.msra.mxu0 0.0
        %2208 = vmatprep.subr.mxu0 0.0
        %2209 = vmatpush1.msra.mxu0 0.0
        %2210 = vmatprep.subr.mxu0 0.0
        %2211 = vmatpush1.msra.mxu0 0.0
        %2212 = vmatprep.subr.mxu0 0.0
        %2213 = vmatpush1.msra.mxu0 0.0
        %2214 = vmatprep.subr.mxu0 0.0
        %2215 = vmatpush1.msra.mxu0 0.0
        %2216 = vmatprep.subr.mxu0 0.0
        %2217 = vmatpush1.msra.mxu0 0.0
        %2218 = vmatprep.subr.mxu0 0.0
        %2219 = vmatpush1.msra.mxu0 0.0
        %2220 = vmatprep.subr.mxu0 0.0
        %2221 = vmatpush1.msra.mxu0 0.0
        %2222 = vmatprep.subr.mxu0 0.0
        %2223 = vmatpush1.msra.mxu0 0.0
        %2224 = vmatprep.subr.mxu0 0.0
        %2225 = vmatpush1.msra.mxu0 0.0
        %2226 = vmatprep.subr.mxu0 0.0
        %2227 = vmatpush1.msra.mxu0 0.0
        %2228 = vmatprep.subr.mxu0 0.0
        %2229 = vmatpush1.msra.mxu0 0.0
        %2230 = vmatprep.subr.mxu0 0.0
        %2231 = vmatpush1.msra.mxu0 0.0
        %2232 = vmatprep.subr.mxu0 0.0
        %2233 = vmatpush1.msra.mxu0 0.0
        %2234 = vmatprep.subr.mxu0 0.0
        %2235 = vmatpush1.msra.mxu0 0.0
        %2236 = vmatprep.subr.mxu0 0.0
        %2237 = vmatpush1.msra.mxu0 0.0
        %2238 = vmatprep.subr.mxu0 0.0
        %2239 = vmatpush1.msra.mxu0 0.0
        %2240 = vmatprep.subr.mxu0 0.0
        %2241 = vmatpush1.msra.mxu0 0.0
        %2242 = vmatprep.subr.mxu0 0.0
        %2243 = vmatpush1.msra.mxu0 0.0
        %2244 = vmatprep.subr.mxu0 0.0
        %2245 = vmatpush1.msra.mxu0 0.0
        %2246 = vmatprep.subr.mxu0 0.0
        %2247 = vmatpush1.msra.mxu0 0.0
        %2248 = vmatprep.subr.mxu0 0.0
        %2249 = vmatpush1.msra.mxu0 0.0
        %2250 = vmatprep.subr.mxu0 0.0
        %2251 = vmatpush1.msra.mxu0 0.0
        %2252 = vmatprep.subr.mxu0 0.0
        %2253 = vmatpush1.msra.mxu0 0.0
        %2254 = vmatprep.mubr.f32.mxu0 0.0
        %2255 = vmatmul.mubr.f32.gmra.mrb[0].mxu0 %v2092
        %v2256 = vpop.f32.mrb[0].mxu0
        %v2257 = vadd.f32 0.0, %v2256
        %v2258 = vpop.f32.mrb[0].mxu0
        %2259 = vmatprep.mubr.f32.mxu0 0.0
        %2260 = vmatmul.mubr.f32.gmra.mrb[0].mxu0 %v2095
        %v2261 = vpop.f32.mrb[0].mxu0
        %v2262 = vadd.f32 0.0, %v2261
        %v2263 = vpop.f32.mrb[0].mxu0
        %2264 = vmatprep.mubr.f32.mxu0 0.0
        %2265 = vmatmul.mubr.f32.gmra.mrb[0].mxu0 %v2098
        %v2266 = vpop.f32.mrb[0].mxu0
        %v2267 = vadd.f32 0.0, %v2266
        %v2268 = vpop.f32.mrb[0].mxu0
        %2269 = vmatprep.mubr.f32.mxu0 0.0
        %2270 = vmatmul.mubr.f32.gmra.mrb[0].mxu0 %v2101
        %v2271 = vpop.f32.mrb[0].mxu0
        %v2272 = vadd.f32 0.0, %v2271
        %v2273 = vpop.f32.mrb[0].mxu0
        %2274 = vmatprep.mubr.f32.mxu0 0.0
        %2275 = vmatmul.mubr.f32.gmra.mrb[0].mxu0 %v2104
        %v2276 = vpop.f32.mrb[0].mxu0
        %v2277 = vadd.f32 0.0, %v2276
        %v2278 = vpop.f32.mrb[0].mxu0
        %2279 = vmatprep.mubr.f32.mxu0 0.0
        %2280 = vmatmul.mubr.f32.gmra.mrb[0].mxu0 %v2107
        %v2281 = vpop.f32.mrb[0].mxu0
        %v2282 = vadd.f32 0.0, %v2281
        %v2283 = vpop.f32.mrb[0].mxu0
        %2284 = vmatprep.mubr.f32.mxu0 0.0
        %2285 = vmatmul.mubr.f32.gmra.mrb[0].mxu0 %v2110
        %v2286 = vpop.f32.mrb[0].mxu0
        %v2287 = vadd.f32 0.0, %v2286
        %v2288 = vpop.f32.mrb[0].mxu0
        %2289 = vmatprep.mubr.f32.mxu0 0.0
        %2290 = vmatmul.mubr.f32.gmra.mrb[0].mxu0 %v2113
        %v2291 = vpop.f32.mrb[0].mxu0
        %v2292 = vadd.f32 0.0, %v2291
        %v2293 = vpop.f32.mrb[0].mxu0
        %2294 = vmatprep.mubr.f32.mxu0 0.0
        %2295 = vmatmul.mubr.f32.gmra.mrb[0].mxu0 %v2116
        %v2296 = vpop.f32.mrb[0].mxu0
        %v2297 = vadd.f32 0.0, %v2296
        %v2298 = vpop.f32.mrb[0].mxu0
        %2299 = vmatprep.mubr.f32.mxu0 0.0
        %2300 = vmatmul.mubr.f32.gmra.mrb[0].mxu0 %v2119
        %v2301 = vpop.f32.mrb[0].mxu0
        %v2302 = vadd.f32 0.0, %v2301
        %v2303 = vpop.f32.mrb[0].mxu0
        %2304 = vmatprep.mubr.f32.mxu0 0.0
        %2305 = vmatmul.mubr.f32.gmra.mrb[0].mxu0 %v2122
        %v2306 = vpop.f32.mrb[0].mxu0
        %v2307 = vadd.f32 0.0, %v2306
        %v2308 = vpop.f32.mrb[0].mxu0
        %2309 = vmatprep.mubr.f32.mxu0 0.0
        %2310 = vmatmul.mubr.f32.gmra.mrb[0].mxu0 %v2125
        %v2311 = vpop.f32.mrb[0].mxu0
        %v2312 = vadd.f32 0.0, %v2311
        %v2313 = vpop.f32.mrb[0].mxu0
        %2314 = vmatprep.mubr.f32.mxu0 0.0
        %2315 = vmatmul.mubr.f32.gmra.mrb[0].mxu0 %v2128
        %v2316 = vpop.f32.mrb[0].mxu0
        %v2317 = vadd.f32 0.0, %v2316
        %v2318 = vpop.f32.mrb[0].mxu0
        %2319 = vmatprep.mubr.f32.mxu0 0.0
        %2320 = vmatmul.mubr.f32.gmra.mrb[0].mxu0 %v2131
        %v2321 = vpop.f32.mrb[0].mxu0
        %v2322 = vadd.f32 0.0, %v2321
        %v2323 = vpop.f32.mrb[0].mxu0
        %2324 = vmatprep.mubr.f32.mxu0 0.0
        %2325 = vmatmul.mubr.f32.gmra.mrb[0].mxu0 %v2134
        %v2326 = vpop.f32.mrb[0].mxu0
        %v2327 = vadd.f32 0.0, %v2326
        %v2328 = vpop.f32.mrb[0].mxu0
        %2329 = vmatprep.mubr.f32.mxu0 0.0
        %2330 = vmatmul.mubr.f32.gmra.mrb[0].mxu0 %v2137
        %v2331 = vpop.f32.mrb[0].mxu0
        %v2332 = vadd.f32 0.0, %v2331
        %v2333 = vpop.f32.mrb[0].mxu0
        %2334 = vmatprep.mubr.f32.mxu0 0.0
        %2335 = vmatmul.mubr.f32.gmra.mrb[0].mxu0 %v2140
        %v2336 = vpop.f32.mrb[0].mxu0
        %v2337 = vadd.f32 0.0, %v2336
        %v2338 = vpop.f32.mrb[0].mxu0
        %2339 = vmatprep.mubr.f32.mxu0 0.0
        %2340 = vmatmul.mubr.f32.gmra.mrb[0].mxu0 %v2143
        %v2341 = vpop.f32.mrb[0].mxu0
        %v2342 = vadd.f32 0.0, %v2341
        %v2343 = vpop.f32.mrb[0].mxu0
        %2344 = vmatprep.mubr.f32.mxu0 0.0
        %2345 = vmatmul.mubr.f32.gmra.mrb[0].mxu0 %v2146
        %v2346 = vpop.f32.mrb[0].mxu0
        %v2347 = vadd.f32 0.0, %v2346
        %v2348 = vpop.f32.mrb[0].mxu0
        %2349 = vmatprep.mubr.f32.mxu0 0.0
        %2350 = vmatmul.mubr.f32.gmra.mrb[0].mxu0 %v2149
        %v2351 = vpop.f32.mrb[0].mxu0
        %v2352 = vadd.f32 0.0, %v2351
        %v2353 = vpop.f32.mrb[0].mxu0
        %2354 = vmatprep.mubr.f32.mxu0 0.0
        %2355 = vmatmul.mubr.f32.gmra.mrb[0].mxu0 %v2152
        %v2356 = vpop.f32.mrb[0].mxu0
        %v2357 = vadd.f32 0.0, %v2356
        %v2358 = vpop.f32.mrb[0].mxu0
        %2359 = vmatprep.mubr.f32.mxu0 0.0
        %2360 = vmatmul.mubr.f32.gmra.mrb[0].mxu0 %v2155
        %v2361 = vpop.f32.mrb[0].mxu0
        %v2362 = vadd.f32 0.0, %v2361
        %v2363 = vpop.f32.mrb[0].mxu0
        %2364 = vmatprep.mubr.f32.mxu0 0.0
        %2365 = vmatmul.mubr.f32.gmra.mrb[0].mxu0 %v2158
        %v2366 = vpop.f32.mrb[0].mxu0
        %v2367 = vadd.f32 0.0, %v2366
        %v2368 = vpop.f32.mrb[0].mxu0
        %2369 = vmatprep.mubr.f32.mxu0 0.0
        %2370 = vmatmul.mubr.f32.gmra.mrb[0].mxu0 %v2161
        %v2371 = vpop.f32.mrb[0].mxu0
        %v2372 = vadd.f32 0.0, %v2371
        %v2373 = vpop.f32.mrb[0].mxu0
        %2374 = vmatprep.mubr.f32.mxu0 0.0
        %2375 = vmatmul.mubr.f32.gmra.mrb[0].mxu0 %v2164
        %v2376 = vpop.f32.mrb[0].mxu0
        %v2377 = vadd.f32 0.0, %v2376
        %v2378 = vpop.f32.mrb[0].mxu0
        %2379 = vmatprep.mubr.f32.mxu0 0.0
        %2380 = vmatmul.mubr.f32.gmra.mrb[0].mxu0 %v2167
        %v2381 = vpop.f32.mrb[0].mxu0
        %v2382 = vadd.f32 0.0, %v2381
        %v2383 = vpop.f32.mrb[0].mxu0
        %2384 = vmatprep.mubr.f32.mxu0 0.0
        %2385 = vmatmul.mubr.f32.gmra.mrb[0].mxu0 %v2170
        %v2386 = vpop.f32.mrb[0].mxu0
        %v2387 = vadd.f32 0.0, %v2386
        %v2388 = vpop.f32.mrb[0].mxu0
        %2389 = vmatprep.mubr.f32.mxu0 0.0
        %2390 = vmatmul.mubr.f32.gmra.mrb[0].mxu0 %v2173
        %v2391 = vpop.f32.mrb[0].mxu0
        %v2392 = vadd.f32 0.0, %v2391
        %v2393 = vpop.f32.mrb[0].mxu0
        %2394 = vmatprep.mubr.f32.mxu0 0.0
        %2395 = vmatmul.mubr.f32.gmra.mrb[0].mxu0 %v2176
        %v2396 = vpop.f32.mrb[0].mxu0
        %v2397 = vadd.f32 0.0, %v2396
        %v2398 = vpop.f32.mrb[0].mxu0
        %2399 = vmatprep.mubr.f32.mxu0 0.0
        %2400 = vmatmul.mubr.f32.gmra.mrb[0].mxu0 %v2179
        %v2401 = vpop.f32.mrb[0].mxu0
        %v2402 = vadd.f32 0.0, %v2401
        %v2403 = vpop.f32.mrb[0].mxu0
        %2404 = vmatprep.mubr.f32.mxu0 0.0
        %2405 = vmatmul.mubr.f32.gmra.mrb[0].mxu0 %v2182
        %v2406 = vpop.f32.mrb[0].mxu0
        %v2407 = vadd.f32 0.0, %v2406
        %v2408 = vpop.f32.mrb[0].mxu0
        %2409 = vmatprep.mubr.f32.mxu0 0.0
        %2410 = vmatmul.mubr.f32.gmra.mrb[0].mxu0 %v2185
        %v2411 = vpop.f32.mrb[0].mxu0
        %v2412 = vadd.f32 0.0, %v2411
        %v2413 = vpop.f32.mrb[0].mxu0
        %2414 = vdwg.mxu0
        %v2415 = vadd.f32 %v2025, %v2257
        %v2416 = vadd.f32 %v2026, %v2262
        %v2417 = vadd.f32 %v2027, %v2267
        %v2418 = vadd.f32 %v2028, %v2272
        %v2419 = vadd.f32 %v2029, %v2277
        %v2420 = vadd.f32 %v2030, %v2282
        %v2421 = vadd.f32 %v2031, %v2287
        %v2422 = vadd.f32 %v2032, %v2292
        %v2423 = vadd.f32 %v2033, %v2297
        %v2424 = vadd.f32 %v2034, %v2302
        %v2425 = vadd.f32 %v2035, %v2307
        %v2426 = vadd.f32 %v2036, %v2312
        %v2427 = vadd.f32 %v2037, %v2317
        %v2428 = vadd.f32 %v2038, %v2322
        %v2429 = vadd.f32 %v2039, %v2327
        %v2430 = vadd.f32 %v2040, %v2332
        %v2431 = vadd.f32 %v2041, %v2337
        %v2432 = vadd.f32 %v2042, %v2342
        %v2433 = vadd.f32 %v2043, %v2347
        %v2434 = vadd.f32 %v2044, %v2352
        %v2435 = vadd.f32 %v2045, %v2357
        %v2436 = vadd.f32 %v2046, %v2362
        %v2437 = vadd.f32 %v2047, %v2367
        %v2438 = vadd.f32 %v2048, %v2372
        %v2439 = vadd.f32 %v2049, %v2377
        %v2440 = vadd.f32 %v2050, %v2382
        %v2441 = vadd.f32 %v2051, %v2387
        %v2442 = vadd.f32 %v2052, %v2392
        %v2443 = vadd.f32 %v2053, %v2397
        %v2444 = vadd.f32 %v2054, %v2402
        %v2445 = vadd.f32 %v2055, %v2407
        %v2446 = vadd.f32 %v2056, %v2412
        %s2447 = scalar_lea.vmem %s168, 48
        %v2448 = vld [vmem:[%s2447] sm:$0xff]
        %v2449 = vld [vmem:[%s2447 + $0x8] sm:$0xff]
        %v2450 = vld [vmem:[%s2447 + $0x18] sm:$0xff]
        %v2451 = vld [vmem:[%s2447 + $0x20] sm:$0xff]
        %v2452 = vld [vmem:[%s2447 + $0x30] sm:$0xff]
        %v2453 = vld [vmem:[%s2447 + $0x38] sm:$0xff]
        %v2454 = vld [vmem:[%s2447 + $0x48] sm:$0xff]
        %v2455 = vld [vmem:[%s2447 + $0x50] sm:$0xff]
        %v2456 = vld [vmem:[%s2447 + $0x60] sm:$0xff]
        %v2457 = vld [vmem:[%s2447 + $0x68] sm:$0xff]
        %v2458 = vld [vmem:[%s2447 + $0x78] sm:$0xff]
        %v2459 = vld [vmem:[%s2447 + $0x80] sm:$0xff]
        %v2460 = vld [vmem:[%s2447 + $0x90] sm:$0xff]
        %v2461 = vld [vmem:[%s2447 + $0x98] sm:$0xff]
        %v2462 = vld [vmem:[%s2447 + $0xa8] sm:$0xff]
        %v2463 = vld [vmem:[%s2447 + $0xb0] sm:$0xff]
        %v2464 = vld [vmem:[%s2447 + $0xc0] sm:$0xff]
        %v2465 = vld [vmem:[%s2447 + $0xc8] sm:$0xff]
        %v2466 = vld [vmem:[%s2447 + $0xd8] sm:$0xff]
        %v2467 = vld [vmem:[%s2447 + $0xe0] sm:$0xff]
        %v2468 = vld [vmem:[%s2447 + $0xf0] sm:$0xff]
        %v2469 = vld [vmem:[%s2447 + $0xf8] sm:$0xff]
        %v2470 = vld [vmem:[%s2447 + $0x108] sm:$0xff]
        %v2471 = vld [vmem:[%s2447 + $0x110] sm:$0xff]
        %v2472 = vld [vmem:[%s2447 + $0x120] sm:$0xff]
        %v2473 = vld [vmem:[%s2447 + $0x128] sm:$0xff]
        %v2474 = vld [vmem:[%s2447 + $0x138] sm:$0xff]
        %v2475 = vld [vmem:[%s2447 + $0x140] sm:$0xff]
        %v2476 = vld [vmem:[%s2447 + $0x150] sm:$0xff]
        %v2477 = vld [vmem:[%s2447 + $0x158] sm:$0xff]
        %v2478 = vld [vmem:[%s2447 + $0x168] sm:$0xff]
        %v2479 = vld [vmem:[%s2447 + $0x170] sm:$0xff]
        %s2480 = scalar_lea.vmem %s1, 24
        %v2481 = vld [vmem:[%s2480] sm:$0xf]
        %v2483 = vsel %vm236, %v2448, 0
        %v2486 = vsel %vm236, %v2449, 0
        %v2489 = vsel %vm236, %v2450, 0
        %v2492 = vsel %vm236, %v2451, 0
        %v2495 = vsel %vm236, %v2452, 0
        %v2498 = vsel %vm236, %v2453, 0
        %v2501 = vsel %vm236, %v2454, 0
        %v2504 = vsel %vm236, %v2455, 0
        %v2507 = vsel %vm236, %v2456, 0
        %v2510 = vsel %vm236, %v2457, 0
        %v2513 = vsel %vm236, %v2458, 0
        %v2516 = vsel %vm236, %v2459, 0
        %v2519 = vsel %vm236, %v2460, 0
        %v2522 = vsel %vm236, %v2461, 0
        %v2525 = vsel %vm236, %v2462, 0
        %v2528 = vsel %vm236, %v2463, 0
        %v2531 = vsel %vm236, %v2464, 0
        %v2534 = vsel %vm236, %v2465, 0
        %v2537 = vsel %vm236, %v2466, 0
        %v2540 = vsel %vm236, %v2467, 0
        %v2543 = vsel %vm236, %v2468, 0
        %v2546 = vsel %vm236, %v2469, 0
        %v2549 = vsel %vm236, %v2470, 0
        %v2552 = vsel %vm236, %v2471, 0
        %v2555 = vsel %vm236, %v2472, 0
        %v2558 = vsel %vm236, %v2473, 0
        %v2561 = vsel %vm236, %v2474, 0
        %v2564 = vsel %vm236, %v2475, 0
        %v2567 = vsel %vm236, %v2476, 0
        %v2570 = vsel %vm236, %v2477, 0
        %v2573 = vsel %vm236, %v2478, 0
        %v2576 = vsel %vm236, %v2479, 0
        %v2579 = vsel %vm333, %v2481, 0
        %2581 = vmatprep.subr.mxu0 0.0
        %2582 = vmatpush1.msra.mxu0 %v2579
        %2583 = vmatprep.subr.mxu0 0.0
        %2584 = vmatpush1.msra.mxu0 0.0
        %2585 = vmatprep.subr.mxu0 0.0
        %2586 = vmatpush1.msra.mxu0 0.0
        %2587 = vmatprep.subr.mxu0 0.0
        %2588 = vmatpush1.msra.mxu0 0.0
        %2589 = vmatprep.subr.mxu0 0.0
        %2590 = vmatpush1.msra.mxu0 0.0
        %2591 = vmatprep.subr.mxu0 0.0
        %2592 = vmatpush1.msra.mxu0 0.0
        %2593 = vmatprep.subr.mxu0 0.0
        %2594 = vmatpush1.msra.mxu0 0.0
        %2595 = vmatprep.subr.mxu0 0.0
        %2596 = vmatpush1.msra.mxu0 0.0
        %2597 = vmatprep.subr.mxu0 0.0
        %2598 = vmatpush1.msra.mxu0 0.0
        %2599 = vmatprep.subr.mxu0 0.0
        %2600 = vmatpush1.msra.mxu0 0.0
        %2601 = vmatprep.subr.mxu0 0.0
        %2602 = vmatpush1.msra.mxu0 0.0
        %2603 = vmatprep.subr.mxu0 0.0
        %2604 = vmatpush1.msra.mxu0 0.0
        %2605 = vmatprep.subr.mxu0 0.0
        %2606 = vmatpush1.msra.mxu0 0.0
        %2607 = vmatprep.subr.mxu0 0.0
        %2608 = vmatpush1.msra.mxu0 0.0
        %2609 = vmatprep.subr.mxu0 0.0
        %2610 = vmatpush1.msra.mxu0 0.0
        %2611 = vmatprep.subr.mxu0 0.0
        %2612 = vmatpush1.msra.mxu0 0.0
        %2613 = vmatprep.subr.mxu0 0.0
        %2614 = vmatpush1.msra.mxu0 0.0
        %2615 = vmatprep.subr.mxu0 0.0
        %2616 = vmatpush1.msra.mxu0 0.0
        %2617 = vmatprep.subr.mxu0 0.0
        %2618 = vmatpush1.msra.mxu0 0.0
        %2619 = vmatprep.subr.mxu0 0.0
        %2620 = vmatpush1.msra.mxu0 0.0
        %2621 = vmatprep.subr.mxu0 0.0
        %2622 = vmatpush1.msra.mxu0 0.0
        %2623 = vmatprep.subr.mxu0 0.0
        %2624 = vmatpush1.msra.mxu0 0.0
        %2625 = vmatprep.subr.mxu0 0.0
        %2626 = vmatpush1.msra.mxu0 0.0
        %2627 = vmatprep.subr.mxu0 0.0
        %2628 = vmatpush1.msra.mxu0 0.0
        %2629 = vmatprep.subr.mxu0 0.0
        %2630 = vmatpush1.msra.mxu0 0.0
        %2631 = vmatprep.subr.mxu0 0.0
        %2632 = vmatpush1.msra.mxu0 0.0
        %2633 = vmatprep.subr.mxu0 0.0
        %2634 = vmatpush1.msra.mxu0 0.0
        %2635 = vmatprep.subr.mxu0 0.0
        %2636 = vmatpush1.msra.mxu0 0.0
        %2637 = vmatprep.subr.mxu0 0.0
        %2638 = vmatpush1.msra.mxu0 0.0
        %2639 = vmatprep.subr.mxu0 0.0
        %2640 = vmatpush1.msra.mxu0 0.0
        %2641 = vmatprep.subr.mxu0 0.0
        %2642 = vmatpush1.msra.mxu0 0.0
        %2643 = vmatprep.subr.mxu0 0.0
        %2644 = vmatpush1.msra.mxu0 0.0
        %2645 = vmatprep.mubr.f32.mxu0 0.0
        %2646 = vmatmul.mubr.f32.gmra.mrb[0].mxu0 %v2483
        %v2647 = vpop.f32.mrb[0].mxu0
        %v2648 = vadd.f32 0.0, %v2647
        %v2649 = vpop.f32.mrb[0].mxu0
        %2650 = vmatprep.mubr.f32.mxu0 0.0
        %2651 = vmatmul.mubr.f32.gmra.mrb[0].mxu0 %v2486
        %v2652 = vpop.f32.mrb[0].mxu0
        %v2653 = vadd.f32 0.0, %v2652
        %v2654 = vpop.f32.mrb[0].mxu0
        %2655 = vmatprep.mubr.f32.mxu0 0.0
        %2656 = vmatmul.mubr.f32.gmra.mrb[0].mxu0 %v2489
        %v2657 = vpop.f32.mrb[0].mxu0
        %v2658 = vadd.f32 0.0, %v2657
        %v2659 = vpop.f32.mrb[0].mxu0
        %2660 = vmatprep.mubr.f32.mxu0 0.0
        %2661 = vmatmul.mubr.f32.gmra.mrb[0].mxu0 %v2492
        %v2662 = vpop.f32.mrb[0].mxu0
        %v2663 = vadd.f32 0.0, %v2662
        %v2664 = vpop.f32.mrb[0].mxu0
        %2665 = vmatprep.mubr.f32.mxu0 0.0
        %2666 = vmatmul.mubr.f32.gmra.mrb[0].mxu0 %v2495
        %v2667 = vpop.f32.mrb[0].mxu0
        %v2668 = vadd.f32 0.0, %v2667
        %v2669 = vpop.f32.mrb[0].mxu0
        %2670 = vmatprep.mubr.f32.mxu0 0.0
        %2671 = vmatmul.mubr.f32.gmra.mrb[0].mxu0 %v2498
        %v2672 = vpop.f32.mrb[0].mxu0
        %v2673 = vadd.f32 0.0, %v2672
        %v2674 = vpop.f32.mrb[0].mxu0
        %2675 = vmatprep.mubr.f32.mxu0 0.0
        %2676 = vmatmul.mubr.f32.gmra.mrb[0].mxu0 %v2501
        %v2677 = vpop.f32.mrb[0].mxu0
        %v2678 = vadd.f32 0.0, %v2677
        %v2679 = vpop.f32.mrb[0].mxu0
        %2680 = vmatprep.mubr.f32.mxu0 0.0
        %2681 = vmatmul.mubr.f32.gmra.mrb[0].mxu0 %v2504
        %v2682 = vpop.f32.mrb[0].mxu0
        %v2683 = vadd.f32 0.0, %v2682
        %v2684 = vpop.f32.mrb[0].mxu0
        %2685 = vmatprep.mubr.f32.mxu0 0.0
        %2686 = vmatmul.mubr.f32.gmra.mrb[0].mxu0 %v2507
        %v2687 = vpop.f32.mrb[0].mxu0
        %v2688 = vadd.f32 0.0, %v2687
        %v2689 = vpop.f32.mrb[0].mxu0
        %2690 = vmatprep.mubr.f32.mxu0 0.0
        %2691 = vmatmul.mubr.f32.gmra.mrb[0].mxu0 %v2510
        %v2692 = vpop.f32.mrb[0].mxu0
        %v2693 = vadd.f32 0.0, %v2692
        %v2694 = vpop.f32.mrb[0].mxu0
        %2695 = vmatprep.mubr.f32.mxu0 0.0
        %2696 = vmatmul.mubr.f32.gmra.mrb[0].mxu0 %v2513
        %v2697 = vpop.f32.mrb[0].mxu0
        %v2698 = vadd.f32 0.0, %v2697
        %v2699 = vpop.f32.mrb[0].mxu0
        %2700 = vmatprep.mubr.f32.mxu0 0.0
        %2701 = vmatmul.mubr.f32.gmra.mrb[0].mxu0 %v2516
        %v2702 = vpop.f32.mrb[0].mxu0
        %v2703 = vadd.f32 0.0, %v2702
        %v2704 = vpop.f32.mrb[0].mxu0
        %2705 = vmatprep.mubr.f32.mxu0 0.0
        %2706 = vmatmul.mubr.f32.gmra.mrb[0].mxu0 %v2519
        %v2707 = vpop.f32.mrb[0].mxu0
        %v2708 = vadd.f32 0.0, %v2707
        %v2709 = vpop.f32.mrb[0].mxu0
        %2710 = vmatprep.mubr.f32.mxu0 0.0
        %2711 = vmatmul.mubr.f32.gmra.mrb[0].mxu0 %v2522
        %v2712 = vpop.f32.mrb[0].mxu0
        %v2713 = vadd.f32 0.0, %v2712
        %v2714 = vpop.f32.mrb[0].mxu0
        %2715 = vmatprep.mubr.f32.mxu0 0.0
        %2716 = vmatmul.mubr.f32.gmra.mrb[0].mxu0 %v2525
        %v2717 = vpop.f32.mrb[0].mxu0
        %v2718 = vadd.f32 0.0, %v2717
        %v2719 = vpop.f32.mrb[0].mxu0
        %2720 = vmatprep.mubr.f32.mxu0 0.0
        %2721 = vmatmul.mubr.f32.gmra.mrb[0].mxu0 %v2528
        %v2722 = vpop.f32.mrb[0].mxu0
        %v2723 = vadd.f32 0.0, %v2722
        %v2724 = vpop.f32.mrb[0].mxu0
        %2725 = vmatprep.mubr.f32.mxu0 0.0
        %2726 = vmatmul.mubr.f32.gmra.mrb[0].mxu0 %v2531
        %v2727 = vpop.f32.mrb[0].mxu0
        %v2728 = vadd.f32 0.0, %v2727
        %v2729 = vpop.f32.mrb[0].mxu0
        %2730 = vmatprep.mubr.f32.mxu0 0.0
        %2731 = vmatmul.mubr.f32.gmra.mrb[0].mxu0 %v2534
        %v2732 = vpop.f32.mrb[0].mxu0
        %v2733 = vadd.f32 0.0, %v2732
        %v2734 = vpop.f32.mrb[0].mxu0
        %2735 = vmatprep.mubr.f32.mxu0 0.0
        %2736 = vmatmul.mubr.f32.gmra.mrb[0].mxu0 %v2537
        %v2737 = vpop.f32.mrb[0].mxu0
        %v2738 = vadd.f32 0.0, %v2737
        %v2739 = vpop.f32.mrb[0].mxu0
        %2740 = vmatprep.mubr.f32.mxu0 0.0
        %2741 = vmatmul.mubr.f32.gmra.mrb[0].mxu0 %v2540
        %v2742 = vpop.f32.mrb[0].mxu0
        %v2743 = vadd.f32 0.0, %v2742
        %v2744 = vpop.f32.mrb[0].mxu0
        %2745 = vmatprep.mubr.f32.mxu0 0.0
        %2746 = vmatmul.mubr.f32.gmra.mrb[0].mxu0 %v2543
        %v2747 = vpop.f32.mrb[0].mxu0
        %v2748 = vadd.f32 0.0, %v2747
        %v2749 = vpop.f32.mrb[0].mxu0
        %2750 = vmatprep.mubr.f32.mxu0 0.0
        %2751 = vmatmul.mubr.f32.gmra.mrb[0].mxu0 %v2546
        %v2752 = vpop.f32.mrb[0].mxu0
        %v2753 = vadd.f32 0.0, %v2752
        %v2754 = vpop.f32.mrb[0].mxu0
        %2755 = vmatprep.mubr.f32.mxu0 0.0
        %2756 = vmatmul.mubr.f32.gmra.mrb[0].mxu0 %v2549
        %v2757 = vpop.f32.mrb[0].mxu0
        %v2758 = vadd.f32 0.0, %v2757
        %v2759 = vpop.f32.mrb[0].mxu0
        %2760 = vmatprep.mubr.f32.mxu0 0.0
        %2761 = vmatmul.mubr.f32.gmra.mrb[0].mxu0 %v2552
        %v2762 = vpop.f32.mrb[0].mxu0
        %v2763 = vadd.f32 0.0, %v2762
        %v2764 = vpop.f32.mrb[0].mxu0
        %2765 = vmatprep.mubr.f32.mxu0 0.0
        %2766 = vmatmul.mubr.f32.gmra.mrb[0].mxu0 %v2555
        %v2767 = vpop.f32.mrb[0].mxu0
        %v2768 = vadd.f32 0.0, %v2767
        %v2769 = vpop.f32.mrb[0].mxu0
        %2770 = vmatprep.mubr.f32.mxu0 0.0
        %2771 = vmatmul.mubr.f32.gmra.mrb[0].mxu0 %v2558
        %v2772 = vpop.f32.mrb[0].mxu0
        %v2773 = vadd.f32 0.0, %v2772
        %v2774 = vpop.f32.mrb[0].mxu0
        %2775 = vmatprep.mubr.f32.mxu0 0.0
        %2776 = vmatmul.mubr.f32.gmra.mrb[0].mxu0 %v2561
        %v2777 = vpop.f32.mrb[0].mxu0
        %v2778 = vadd.f32 0.0, %v2777
        %v2779 = vpop.f32.mrb[0].mxu0
        %2780 = vmatprep.mubr.f32.mxu0 0.0
        %2781 = vmatmul.mubr.f32.gmra.mrb[0].mxu0 %v2564
        %v2782 = vpop.f32.mrb[0].mxu0
        %v2783 = vadd.f32 0.0, %v2782
        %v2784 = vpop.f32.mrb[0].mxu0
        %2785 = vmatprep.mubr.f32.mxu0 0.0
        %2786 = vmatmul.mubr.f32.gmra.mrb[0].mxu0 %v2567
        %v2787 = vpop.f32.mrb[0].mxu0
        %v2788 = vadd.f32 0.0, %v2787
        %v2789 = vpop.f32.mrb[0].mxu0
        %2790 = vmatprep.mubr.f32.mxu0 0.0
        %2791 = vmatmul.mubr.f32.gmra.mrb[0].mxu0 %v2570
        %v2792 = vpop.f32.mrb[0].mxu0
        %v2793 = vadd.f32 0.0, %v2792
        %v2794 = vpop.f32.mrb[0].mxu0
        %2795 = vmatprep.mubr.f32.mxu0 0.0
        %2796 = vmatmul.mubr.f32.gmra.mrb[0].mxu0 %v2573
        %v2797 = vpop.f32.mrb[0].mxu0
        %v2798 = vadd.f32 0.0, %v2797
        %v2799 = vpop.f32.mrb[0].mxu0
        %2800 = vmatprep.mubr.f32.mxu0 0.0
        %2801 = vmatmul.mubr.f32.gmra.mrb[0].mxu0 %v2576
        %v2802 = vpop.f32.mrb[0].mxu0
        %v2803 = vadd.f32 0.0, %v2802
        %v2804 = vpop.f32.mrb[0].mxu0
        %2805 = vdwg.mxu0
        %v2806 = vadd.f32 %v2415, %v2648
        %v2807 = vadd.f32 %v2416, %v2653
        %v2808 = vadd.f32 %v2417, %v2658
        %v2809 = vadd.f32 %v2418, %v2663
        %v2810 = vadd.f32 %v2419, %v2668
        %v2811 = vadd.f32 %v2420, %v2673
        %v2812 = vadd.f32 %v2421, %v2678
        %v2813 = vadd.f32 %v2422, %v2683
        %v2814 = vadd.f32 %v2423, %v2688
        %v2815 = vadd.f32 %v2424, %v2693
        %v2816 = vadd.f32 %v2425, %v2698
        %v2817 = vadd.f32 %v2426, %v2703
        %v2818 = vadd.f32 %v2427, %v2708
        %v2819 = vadd.f32 %v2428, %v2713
        %v2820 = vadd.f32 %v2429, %v2718
        %v2821 = vadd.f32 %v2430, %v2723
        %v2822 = vadd.f32 %v2431, %v2728
        %v2823 = vadd.f32 %v2432, %v2733
        %v2824 = vadd.f32 %v2433, %v2738
        %v2825 = vadd.f32 %v2434, %v2743
        %v2826 = vadd.f32 %v2435, %v2748
        %v2827 = vadd.f32 %v2436, %v2753
        %v2828 = vadd.f32 %v2437, %v2758
        %v2829 = vadd.f32 %v2438, %v2763
        %v2830 = vadd.f32 %v2439, %v2768
        %v2831 = vadd.f32 %v2440, %v2773
        %v2832 = vadd.f32 %v2441, %v2778
        %v2833 = vadd.f32 %v2442, %v2783
        %v2834 = vadd.f32 %v2443, %v2788
        %v2835 = vadd.f32 %v2444, %v2793
        %v2836 = vadd.f32 %v2445, %v2798
        %v2837 = vadd.f32 %v2446, %v2803
        %v2838 = vld [vmem:[%s2447 + $0x1] sm:$0xff]
        %v2839 = vld [vmem:[%s2447 + $0x9] sm:$0xff]
        %v2840 = vld [vmem:[%s2447 + $0x19] sm:$0xff]
        %v2841 = vld [vmem:[%s2447 + $0x21] sm:$0xff]
        %v2842 = vld [vmem:[%s2447 + $0x31] sm:$0xff]
        %v2843 = vld [vmem:[%s2447 + $0x39] sm:$0xff]
        %v2844 = vld [vmem:[%s2447 + $0x49] sm:$0xff]
        %v2845 = vld [vmem:[%s2447 + $0x51] sm:$0xff]
        %v2846 = vld [vmem:[%s2447 + $0x61] sm:$0xff]
        %v2847 = vld [vmem:[%s2447 + $0x69] sm:$0xff]
        %v2848 = vld [vmem:[%s2447 + $0x79] sm:$0xff]
        %v2849 = vld [vmem:[%s2447 + $0x81] sm:$0xff]
        %v2850 = vld [vmem:[%s2447 + $0x91] sm:$0xff]
        %v2851 = vld [vmem:[%s2447 + $0x99] sm:$0xff]
        %v2852 = vld [vmem:[%s2447 + $0xa9] sm:$0xff]
        %v2853 = vld [vmem:[%s2447 + $0xb1] sm:$0xff]
        %v2854 = vld [vmem:[%s2447 + $0xc1] sm:$0xff]
        %v2855 = vld [vmem:[%s2447 + $0xc9] sm:$0xff]
        %v2856 = vld [vmem:[%s2447 + $0xd9] sm:$0xff]
        %v2857 = vld [vmem:[%s2447 + $0xe1] sm:$0xff]
        %v2858 = vld [vmem:[%s2447 + $0xf1] sm:$0xff]
        %v2859 = vld [vmem:[%s2447 + $0xf9] sm:$0xff]
        %v2860 = vld [vmem:[%s2447 + $0x109] sm:$0xff]
        %v2861 = vld [vmem:[%s2447 + $0x111] sm:$0xff]
        %v2862 = vld [vmem:[%s2447 + $0x121] sm:$0xff]
        %v2863 = vld [vmem:[%s2447 + $0x129] sm:$0xff]
        %v2864 = vld [vmem:[%s2447 + $0x139] sm:$0xff]
        %v2865 = vld [vmem:[%s2447 + $0x141] sm:$0xff]
        %v2866 = vld [vmem:[%s2447 + $0x151] sm:$0xff]
        %v2867 = vld [vmem:[%s2447 + $0x159] sm:$0xff]
        %v2868 = vld [vmem:[%s2447 + $0x169] sm:$0xff]
        %v2869 = vld [vmem:[%s2447 + $0x171] sm:$0xff]
        %s2870 = scalar_lea.vmem %s1, 28
        %v2871 = vld [vmem:[%s2870] sm:$0xf]
        %v2873 = vsel %vm236, %v2838, 0
        %v2876 = vsel %vm236, %v2839, 0
        %v2879 = vsel %vm236, %v2840, 0
        %v2882 = vsel %vm236, %v2841, 0
        %v2885 = vsel %vm236, %v2842, 0
        %v2888 = vsel %vm236, %v2843, 0
        %v2891 = vsel %vm236, %v2844, 0
        %v2894 = vsel %vm236, %v2845, 0
        %v2897 = vsel %vm236, %v2846, 0
        %v2900 = vsel %vm236, %v2847, 0
        %v2903 = vsel %vm236, %v2848, 0
        %v2906 = vsel %vm236, %v2849, 0
        %v2909 = vsel %vm236, %v2850, 0
        %v2912 = vsel %vm236, %v2851, 0
        %v2915 = vsel %vm236, %v2852, 0
        %v2918 = vsel %vm236, %v2853, 0
        %v2921 = vsel %vm236, %v2854, 0
        %v2924 = vsel %vm236, %v2855, 0
        %v2927 = vsel %vm236, %v2856, 0
        %v2930 = vsel %vm236, %v2857, 0
        %v2933 = vsel %vm236, %v2858, 0
        %v2936 = vsel %vm236, %v2859, 0
        %v2939 = vsel %vm236, %v2860, 0
        %v2942 = vsel %vm236, %v2861, 0
        %v2945 = vsel %vm236, %v2862, 0
        %v2948 = vsel %vm236, %v2863, 0
        %v2951 = vsel %vm236, %v2864, 0
        %v2954 = vsel %vm236, %v2865, 0
        %v2957 = vsel %vm236, %v2866, 0
        %v2960 = vsel %vm236, %v2867, 0
        %v2963 = vsel %vm236, %v2868, 0
        %v2966 = vsel %vm236, %v2869, 0
        %v2969 = vsel %vm333, %v2871, 0
        %2971 = vmatprep.subr.mxu0 0.0
        %2972 = vmatpush1.msra.mxu0 %v2969
        %2973 = vmatprep.subr.mxu0 0.0
        %2974 = vmatpush1.msra.mxu0 0.0
        %2975 = vmatprep.subr.mxu0 0.0
        %2976 = vmatpush1.msra.mxu0 0.0
        %2977 = vmatprep.subr.mxu0 0.0
        %2978 = vmatpush1.msra.mxu0 0.0
        %2979 = vmatprep.subr.mxu0 0.0
        %2980 = vmatpush1.msra.mxu0 0.0
        %2981 = vmatprep.subr.mxu0 0.0
        %2982 = vmatpush1.msra.mxu0 0.0
        %2983 = vmatprep.subr.mxu0 0.0
        %2984 = vmatpush1.msra.mxu0 0.0
        %2985 = vmatprep.subr.mxu0 0.0
        %2986 = vmatpush1.msra.mxu0 0.0
        %2987 = vmatprep.subr.mxu0 0.0
        %2988 = vmatpush1.msra.mxu0 0.0
        %2989 = vmatprep.subr.mxu0 0.0
        %2990 = vmatpush1.msra.mxu0 0.0
        %2991 = vmatprep.subr.mxu0 0.0
        %2992 = vmatpush1.msra.mxu0 0.0
        %2993 = vmatprep.subr.mxu0 0.0
        %2994 = vmatpush1.msra.mxu0 0.0
        %2995 = vmatprep.subr.mxu0 0.0
        %2996 = vmatpush1.msra.mxu0 0.0
        %2997 = vmatprep.subr.mxu0 0.0
        %2998 = vmatpush1.msra.mxu0 0.0
        %2999 = vmatprep.subr.mxu0 0.0
        %3000 = vmatpush1.msra.mxu0 0.0
        %3001 = vmatprep.subr.mxu0 0.0
        %3002 = vmatpush1.msra.mxu0 0.0
        %3003 = vmatprep.subr.mxu0 0.0
        %3004 = vmatpush1.msra.mxu0 0.0
        %3005 = vmatprep.subr.mxu0 0.0
        %3006 = vmatpush1.msra.mxu0 0.0
        %3007 = vmatprep.subr.mxu0 0.0
        %3008 = vmatpush1.msra.mxu0 0.0
        %3009 = vmatprep.subr.mxu0 0.0
        %3010 = vmatpush1.msra.mxu0 0.0
        %3011 = vmatprep.subr.mxu0 0.0
        %3012 = vmatpush1.msra.mxu0 0.0
        %3013 = vmatprep.subr.mxu0 0.0
        %3014 = vmatpush1.msra.mxu0 0.0
        %3015 = vmatprep.subr.mxu0 0.0
        %3016 = vmatpush1.msra.mxu0 0.0
        %3017 = vmatprep.subr.mxu0 0.0
        %3018 = vmatpush1.msra.mxu0 0.0
        %3019 = vmatprep.subr.mxu0 0.0
        %3020 = vmatpush1.msra.mxu0 0.0
        %3021 = vmatprep.subr.mxu0 0.0
        %3022 = vmatpush1.msra.mxu0 0.0
        %3023 = vmatprep.subr.mxu0 0.0
        %3024 = vmatpush1.msra.mxu0 0.0
        %3025 = vmatprep.subr.mxu0 0.0
        %3026 = vmatpush1.msra.mxu0 0.0
        %3027 = vmatprep.subr.mxu0 0.0
        %3028 = vmatpush1.msra.mxu0 0.0
        %3029 = vmatprep.subr.mxu0 0.0
        %3030 = vmatpush1.msra.mxu0 0.0
        %3031 = vmatprep.subr.mxu0 0.0
        %3032 = vmatpush1.msra.mxu0 0.0
        %3033 = vmatprep.subr.mxu0 0.0
        %3034 = vmatpush1.msra.mxu0 0.0
        %3035 = vmatprep.mubr.f32.mxu0 0.0
        %3036 = vmatmul.mubr.f32.gmra.mrb[0].mxu0 %v2873
        %v3037 = vpop.f32.mrb[0].mxu0
        %v3038 = vadd.f32 0.0, %v3037
        %v3039 = vpop.f32.mrb[0].mxu0
        %3040 = vmatprep.mubr.f32.mxu0 0.0
        %3041 = vmatmul.mubr.f32.gmra.mrb[0].mxu0 %v2876
        %v3042 = vpop.f32.mrb[0].mxu0
        %v3043 = vadd.f32 0.0, %v3042
        %v3044 = vpop.f32.mrb[0].mxu0
        %3045 = vmatprep.mubr.f32.mxu0 0.0
        %3046 = vmatmul.mubr.f32.gmra.mrb[0].mxu0 %v2879
        %v3047 = vpop.f32.mrb[0].mxu0
        %v3048 = vadd.f32 0.0, %v3047
        %v3049 = vpop.f32.mrb[0].mxu0
        %3050 = vmatprep.mubr.f32.mxu0 0.0
        %3051 = vmatmul.mubr.f32.gmra.mrb[0].mxu0 %v2882
        %v3052 = vpop.f32.mrb[0].mxu0
        %v3053 = vadd.f32 0.0, %v3052
        %v3054 = vpop.f32.mrb[0].mxu0
        %3055 = vmatprep.mubr.f32.mxu0 0.0
        %3056 = vmatmul.mubr.f32.gmra.mrb[0].mxu0 %v2885
        %v3057 = vpop.f32.mrb[0].mxu0
        %v3058 = vadd.f32 0.0, %v3057
        %v3059 = vpop.f32.mrb[0].mxu0
        %3060 = vmatprep.mubr.f32.mxu0 0.0
        %3061 = vmatmul.mubr.f32.gmra.mrb[0].mxu0 %v2888
        %v3062 = vpop.f32.mrb[0].mxu0
        %v3063 = vadd.f32 0.0, %v3062
        %v3064 = vpop.f32.mrb[0].mxu0
        %3065 = vmatprep.mubr.f32.mxu0 0.0
        %3066 = vmatmul.mubr.f32.gmra.mrb[0].mxu0 %v2891
        %v3067 = vpop.f32.mrb[0].mxu0
        %v3068 = vadd.f32 0.0, %v3067
        %v3069 = vpop.f32.mrb[0].mxu0
        %3070 = vmatprep.mubr.f32.mxu0 0.0
        %3071 = vmatmul.mubr.f32.gmra.mrb[0].mxu0 %v2894
        %v3072 = vpop.f32.mrb[0].mxu0
        %v3073 = vadd.f32 0.0, %v3072
        %v3074 = vpop.f32.mrb[0].mxu0
        %3075 = vmatprep.mubr.f32.mxu0 0.0
        %3076 = vmatmul.mubr.f32.gmra.mrb[0].mxu0 %v2897
        %v3077 = vpop.f32.mrb[0].mxu0
        %v3078 = vadd.f32 0.0, %v3077
        %v3079 = vpop.f32.mrb[0].mxu0
        %3080 = vmatprep.mubr.f32.mxu0 0.0
        %3081 = vmatmul.mubr.f32.gmra.mrb[0].mxu0 %v2900
        %v3082 = vpop.f32.mrb[0].mxu0
        %v3083 = vadd.f32 0.0, %v3082
        %v3084 = vpop.f32.mrb[0].mxu0
        %3085 = vmatprep.mubr.f32.mxu0 0.0
        %3086 = vmatmul.mubr.f32.gmra.mrb[0].mxu0 %v2903
        %v3087 = vpop.f32.mrb[0].mxu0
        %v3088 = vadd.f32 0.0, %v3087
        %v3089 = vpop.f32.mrb[0].mxu0
        %3090 = vmatprep.mubr.f32.mxu0 0.0
        %3091 = vmatmul.mubr.f32.gmra.mrb[0].mxu0 %v2906
        %v3092 = vpop.f32.mrb[0].mxu0
        %v3093 = vadd.f32 0.0, %v3092
        %v3094 = vpop.f32.mrb[0].mxu0
        %3095 = vmatprep.mubr.f32.mxu0 0.0
        %3096 = vmatmul.mubr.f32.gmra.mrb[0].mxu0 %v2909
        %v3097 = vpop.f32.mrb[0].mxu0
        %v3098 = vadd.f32 0.0, %v3097
        %v3099 = vpop.f32.mrb[0].mxu0
        %3100 = vmatprep.mubr.f32.mxu0 0.0
        %3101 = vmatmul.mubr.f32.gmra.mrb[0].mxu0 %v2912
        %v3102 = vpop.f32.mrb[0].mxu0
        %v3103 = vadd.f32 0.0, %v3102
        %v3104 = vpop.f32.mrb[0].mxu0
        %3105 = vmatprep.mubr.f32.mxu0 0.0
        %3106 = vmatmul.mubr.f32.gmra.mrb[0].mxu0 %v2915
        %v3107 = vpop.f32.mrb[0].mxu0
        %v3108 = vadd.f32 0.0, %v3107
        %v3109 = vpop.f32.mrb[0].mxu0
        %3110 = vmatprep.mubr.f32.mxu0 0.0
        %3111 = vmatmul.mubr.f32.gmra.mrb[0].mxu0 %v2918
        %v3112 = vpop.f32.mrb[0].mxu0
        %v3113 = vadd.f32 0.0, %v3112
        %v3114 = vpop.f32.mrb[0].mxu0
        %3115 = vmatprep.mubr.f32.mxu0 0.0
        %3116 = vmatmul.mubr.f32.gmra.mrb[0].mxu0 %v2921
        %v3117 = vpop.f32.mrb[0].mxu0
        %v3118 = vadd.f32 0.0, %v3117
        %v3119 = vpop.f32.mrb[0].mxu0
        %3120 = vmatprep.mubr.f32.mxu0 0.0
        %3121 = vmatmul.mubr.f32.gmra.mrb[0].mxu0 %v2924
        %v3122 = vpop.f32.mrb[0].mxu0
        %v3123 = vadd.f32 0.0, %v3122
        %v3124 = vpop.f32.mrb[0].mxu0
        %3125 = vmatprep.mubr.f32.mxu0 0.0
        %3126 = vmatmul.mubr.f32.gmra.mrb[0].mxu0 %v2927
        %v3127 = vpop.f32.mrb[0].mxu0
        %v3128 = vadd.f32 0.0, %v3127
        %v3129 = vpop.f32.mrb[0].mxu0
        %3130 = vmatprep.mubr.f32.mxu0 0.0
        %3131 = vmatmul.mubr.f32.gmra.mrb[0].mxu0 %v2930
        %v3132 = vpop.f32.mrb[0].mxu0
        %v3133 = vadd.f32 0.0, %v3132
        %v3134 = vpop.f32.mrb[0].mxu0
        %3135 = vmatprep.mubr.f32.mxu0 0.0
        %3136 = vmatmul.mubr.f32.gmra.mrb[0].mxu0 %v2933
        %v3137 = vpop.f32.mrb[0].mxu0
        %v3138 = vadd.f32 0.0, %v3137
        %v3139 = vpop.f32.mrb[0].mxu0
        %3140 = vmatprep.mubr.f32.mxu0 0.0
        %3141 = vmatmul.mubr.f32.gmra.mrb[0].mxu0 %v2936
        %v3142 = vpop.f32.mrb[0].mxu0
        %v3143 = vadd.f32 0.0, %v3142
        %v3144 = vpop.f32.mrb[0].mxu0
        %3145 = vmatprep.mubr.f32.mxu0 0.0
        %3146 = vmatmul.mubr.f32.gmra.mrb[0].mxu0 %v2939
        %v3147 = vpop.f32.mrb[0].mxu0
        %v3148 = vadd.f32 0.0, %v3147
        %v3149 = vpop.f32.mrb[0].mxu0
        %3150 = vmatprep.mubr.f32.mxu0 0.0
        %3151 = vmatmul.mubr.f32.gmra.mrb[0].mxu0 %v2942
        %v3152 = vpop.f32.mrb[0].mxu0
        %v3153 = vadd.f32 0.0, %v3152
        %v3154 = vpop.f32.mrb[0].mxu0
        %3155 = vmatprep.mubr.f32.mxu0 0.0
        %3156 = vmatmul.mubr.f32.gmra.mrb[0].mxu0 %v2945
        %v3157 = vpop.f32.mrb[0].mxu0
        %v3158 = vadd.f32 0.0, %v3157
        %v3159 = vpop.f32.mrb[0].mxu0
        %3160 = vmatprep.mubr.f32.mxu0 0.0
        %3161 = vmatmul.mubr.f32.gmra.mrb[0].mxu0 %v2948
        %v3162 = vpop.f32.mrb[0].mxu0
        %v3163 = vadd.f32 0.0, %v3162
        %v3164 = vpop.f32.mrb[0].mxu0
        %3165 = vmatprep.mubr.f32.mxu0 0.0
        %3166 = vmatmul.mubr.f32.gmra.mrb[0].mxu0 %v2951
        %v3167 = vpop.f32.mrb[0].mxu0
        %v3168 = vadd.f32 0.0, %v3167
        %v3169 = vpop.f32.mrb[0].mxu0
        %3170 = vmatprep.mubr.f32.mxu0 0.0
        %3171 = vmatmul.mubr.f32.gmra.mrb[0].mxu0 %v2954
        %v3172 = vpop.f32.mrb[0].mxu0
        %v3173 = vadd.f32 0.0, %v3172
        %v3174 = vpop.f32.mrb[0].mxu0
        %3175 = vmatprep.mubr.f32.mxu0 0.0
        %3176 = vmatmul.mubr.f32.gmra.mrb[0].mxu0 %v2957
        %v3177 = vpop.f32.mrb[0].mxu0
        %v3178 = vadd.f32 0.0, %v3177
        %v3179 = vpop.f32.mrb[0].mxu0
        %3180 = vmatprep.mubr.f32.mxu0 0.0
        %3181 = vmatmul.mubr.f32.gmra.mrb[0].mxu0 %v2960
        %v3182 = vpop.f32.mrb[0].mxu0
        %v3183 = vadd.f32 0.0, %v3182
        %v3184 = vpop.f32.mrb[0].mxu0
        %3185 = vmatprep.mubr.f32.mxu0 0.0
        %3186 = vmatmul.mubr.f32.gmra.mrb[0].mxu0 %v2963
        %v3187 = vpop.f32.mrb[0].mxu0
        %v3188 = vadd.f32 0.0, %v3187
        %v3189 = vpop.f32.mrb[0].mxu0
        %3190 = vmatprep.mubr.f32.mxu0 0.0
        %3191 = vmatmul.mubr.f32.gmra.mrb[0].mxu0 %v2966
        %v3192 = vpop.f32.mrb[0].mxu0
        %v3193 = vadd.f32 0.0, %v3192
        %v3194 = vpop.f32.mrb[0].mxu0
        %3195 = vdwg.mxu0
        %v3196 = vadd.f32 %v2806, %v3038
        %v3197 = vadd.f32 %v2807, %v3043
        %v3198 = vadd.f32 %v2808, %v3048
        %v3199 = vadd.f32 %v2809, %v3053
        %v3200 = vadd.f32 %v2810, %v3058
        %v3201 = vadd.f32 %v2811, %v3063
        %v3202 = vadd.f32 %v2812, %v3068
        %v3203 = vadd.f32 %v2813, %v3073
        %v3204 = vadd.f32 %v2814, %v3078
        %v3205 = vadd.f32 %v2815, %v3083
        %v3206 = vadd.f32 %v2816, %v3088
        %v3207 = vadd.f32 %v2817, %v3093
        %v3208 = vadd.f32 %v2818, %v3098
        %v3209 = vadd.f32 %v2819, %v3103
        %v3210 = vadd.f32 %v2820, %v3108
        %v3211 = vadd.f32 %v2821, %v3113
        %v3212 = vadd.f32 %v2822, %v3118
        %v3213 = vadd.f32 %v2823, %v3123
        %v3214 = vadd.f32 %v2824, %v3128
        %v3215 = vadd.f32 %v2825, %v3133
        %v3216 = vadd.f32 %v2826, %v3138
        %v3217 = vadd.f32 %v2827, %v3143
        %v3218 = vadd.f32 %v2828, %v3148
        %v3219 = vadd.f32 %v2829, %v3153
        %v3220 = vadd.f32 %v2830, %v3158
        %v3221 = vadd.f32 %v2831, %v3163
        %v3222 = vadd.f32 %v2832, %v3168
        %v3223 = vadd.f32 %v2833, %v3173
        %v3224 = vadd.f32 %v2834, %v3178
        %v3225 = vadd.f32 %v2835, %v3183
        %v3226 = vadd.f32 %v2836, %v3188
        %v3227 = vadd.f32 %v2837, %v3193
        %v3228 = vld [vmem:[%s2447 + $0x2] sm:$0xff]
        %v3229 = vld [vmem:[%s2447 + $0xa] sm:$0xff]
        %v3230 = vld [vmem:[%s2447 + $0x1a] sm:$0xff]
        %v3231 = vld [vmem:[%s2447 + $0x22] sm:$0xff]
        %v3232 = vld [vmem:[%s2447 + $0x32] sm:$0xff]
        %v3233 = vld [vmem:[%s2447 + $0x3a] sm:$0xff]
        %v3234 = vld [vmem:[%s2447 + $0x4a] sm:$0xff]
        %v3235 = vld [vmem:[%s2447 + $0x52] sm:$0xff]
        %v3236 = vld [vmem:[%s2447 + $0x62] sm:$0xff]
        %v3237 = vld [vmem:[%s2447 + $0x6a] sm:$0xff]
        %v3238 = vld [vmem:[%s2447 + $0x7a] sm:$0xff]
        %v3239 = vld [vmem:[%s2447 + $0x82] sm:$0xff]
        %v3240 = vld [vmem:[%s2447 + $0x92] sm:$0xff]
        %v3241 = vld [vmem:[%s2447 + $0x9a] sm:$0xff]
        %v3242 = vld [vmem:[%s2447 + $0xaa] sm:$0xff]
        %v3243 = vld [vmem:[%s2447 + $0xb2] sm:$0xff]
        %v3244 = vld [vmem:[%s2447 + $0xc2] sm:$0xff]
        %v3245 = vld [vmem:[%s2447 + $0xca] sm:$0xff]
        %v3246 = vld [vmem:[%s2447 + $0xda] sm:$0xff]
        %v3247 = vld [vmem:[%s2447 + $0xe2] sm:$0xff]
        %v3248 = vld [vmem:[%s2447 + $0xf2] sm:$0xff]
        %v3249 = vld [vmem:[%s2447 + $0xfa] sm:$0xff]
        %v3250 = vld [vmem:[%s2447 + $0x10a] sm:$0xff]
        %v3251 = vld [vmem:[%s2447 + $0x112] sm:$0xff]
        %v3252 = vld [vmem:[%s2447 + $0x122] sm:$0xff]
        %v3253 = vld [vmem:[%s2447 + $0x12a] sm:$0xff]
        %v3254 = vld [vmem:[%s2447 + $0x13a] sm:$0xff]
        %v3255 = vld [vmem:[%s2447 + $0x142] sm:$0xff]
        %v3256 = vld [vmem:[%s2447 + $0x152] sm:$0xff]
        %v3257 = vld [vmem:[%s2447 + $0x15a] sm:$0xff]
        %v3258 = vld [vmem:[%s2447 + $0x16a] sm:$0xff]
        %v3259 = vld [vmem:[%s2447 + $0x172] sm:$0xff]
        %s3260 = scalar_lea.vmem %s1, 32
        %v3261 = vld [vmem:[%s3260] sm:$0xf]
        %v3263 = vsel %vm236, %v3228, 0
        %v3266 = vsel %vm236, %v3229, 0
        %v3269 = vsel %vm236, %v3230, 0
        %v3272 = vsel %vm236, %v3231, 0
        %v3275 = vsel %vm236, %v3232, 0
        %v3278 = vsel %vm236, %v3233, 0
        %v3281 = vsel %vm236, %v3234, 0
        %v3284 = vsel %vm236, %v3235, 0
        %v3287 = vsel %vm236, %v3236, 0
        %v3290 = vsel %vm236, %v3237, 0
        %v3293 = vsel %vm236, %v3238, 0
        %v3296 = vsel %vm236, %v3239, 0
        %v3299 = vsel %vm236, %v3240, 0
        %v3302 = vsel %vm236, %v3241, 0
        %v3305 = vsel %vm236, %v3242, 0
        %v3308 = vsel %vm236, %v3243, 0
        %v3311 = vsel %vm236, %v3244, 0
        %v3314 = vsel %vm236, %v3245, 0
        %v3317 = vsel %vm236, %v3246, 0
        %v3320 = vsel %vm236, %v3247, 0
        %v3323 = vsel %vm236, %v3248, 0
        %v3326 = vsel %vm236, %v3249, 0
        %v3329 = vsel %vm236, %v3250, 0
        %v3332 = vsel %vm236, %v3251, 0
        %v3335 = vsel %vm236, %v3252, 0
        %v3338 = vsel %vm236, %v3253, 0
        %v3341 = vsel %vm236, %v3254, 0
        %v3344 = vsel %vm236, %v3255, 0
        %v3347 = vsel %vm236, %v3256, 0
        %v3350 = vsel %vm236, %v3257, 0
        %v3353 = vsel %vm236, %v3258, 0
        %v3356 = vsel %vm236, %v3259, 0
        %v3359 = vsel %vm333, %v3261, 0
        %3361 = vmatprep.subr.mxu0 0.0
        %3362 = vmatpush1.msra.mxu0 %v3359
        %3363 = vmatprep.subr.mxu0 0.0
        %3364 = vmatpush1.msra.mxu0 0.0
        %3365 = vmatprep.subr.mxu0 0.0
        %3366 = vmatpush1.msra.mxu0 0.0
        %3367 = vmatprep.subr.mxu0 0.0
        %3368 = vmatpush1.msra.mxu0 0.0
        %3369 = vmatprep.subr.mxu0 0.0
        %3370 = vmatpush1.msra.mxu0 0.0
        %3371 = vmatprep.subr.mxu0 0.0
        %3372 = vmatpush1.msra.mxu0 0.0
        %3373 = vmatprep.subr.mxu0 0.0
        %3374 = vmatpush1.msra.mxu0 0.0
        %3375 = vmatprep.subr.mxu0 0.0
        %3376 = vmatpush1.msra.mxu0 0.0
        %3377 = vmatprep.subr.mxu0 0.0
        %3378 = vmatpush1.msra.mxu0 0.0
        %3379 = vmatprep.subr.mxu0 0.0
        %3380 = vmatpush1.msra.mxu0 0.0
        %3381 = vmatprep.subr.mxu0 0.0
        %3382 = vmatpush1.msra.mxu0 0.0
        %3383 = vmatprep.subr.mxu0 0.0
        %3384 = vmatpush1.msra.mxu0 0.0
        %3385 = vmatprep.subr.mxu0 0.0
        %3386 = vmatpush1.msra.mxu0 0.0
        %3387 = vmatprep.subr.mxu0 0.0
        %3388 = vmatpush1.msra.mxu0 0.0
        %3389 = vmatprep.subr.mxu0 0.0
        %3390 = vmatpush1.msra.mxu0 0.0
        %3391 = vmatprep.subr.mxu0 0.0
        %3392 = vmatpush1.msra.mxu0 0.0
        %3393 = vmatprep.subr.mxu0 0.0
        %3394 = vmatpush1.msra.mxu0 0.0
        %3395 = vmatprep.subr.mxu0 0.0
        %3396 = vmatpush1.msra.mxu0 0.0
        %3397 = vmatprep.subr.mxu0 0.0
        %3398 = vmatpush1.msra.mxu0 0.0
        %3399 = vmatprep.subr.mxu0 0.0
        %3400 = vmatpush1.msra.mxu0 0.0
        %3401 = vmatprep.subr.mxu0 0.0
        %3402 = vmatpush1.msra.mxu0 0.0
        %3403 = vmatprep.subr.mxu0 0.0
        %3404 = vmatpush1.msra.mxu0 0.0
        %3405 = vmatprep.subr.mxu0 0.0
        %3406 = vmatpush1.msra.mxu0 0.0
        %3407 = vmatprep.subr.mxu0 0.0
        %3408 = vmatpush1.msra.mxu0 0.0
        %3409 = vmatprep.subr.mxu0 0.0
        %3410 = vmatpush1.msra.mxu0 0.0
        %3411 = vmatprep.subr.mxu0 0.0
        %3412 = vmatpush1.msra.mxu0 0.0
        %3413 = vmatprep.subr.mxu0 0.0
        %3414 = vmatpush1.msra.mxu0 0.0
        %3415 = vmatprep.subr.mxu0 0.0
        %3416 = vmatpush1.msra.mxu0 0.0
        %3417 = vmatprep.subr.mxu0 0.0
        %3418 = vmatpush1.msra.mxu0 0.0
        %3419 = vmatprep.subr.mxu0 0.0
        %3420 = vmatpush1.msra.mxu0 0.0
        %3421 = vmatprep.subr.mxu0 0.0
        %3422 = vmatpush1.msra.mxu0 0.0
        %3423 = vmatprep.subr.mxu0 0.0
        %3424 = vmatpush1.msra.mxu0 0.0
        %3425 = vmatprep.mubr.f32.mxu0 0.0
        %3426 = vmatmul.mubr.f32.gmra.mrb[0].mxu0 %v3263
        %v3427 = vpop.f32.mrb[0].mxu0
        %v3428 = vadd.f32 0.0, %v3427
        %v3429 = vpop.f32.mrb[0].mxu0
        %3430 = vmatprep.mubr.f32.mxu0 0.0
        %3431 = vmatmul.mubr.f32.gmra.mrb[0].mxu0 %v3266
        %v3432 = vpop.f32.mrb[0].mxu0
        %v3433 = vadd.f32 0.0, %v3432
        %v3434 = vpop.f32.mrb[0].mxu0
        %3435 = vmatprep.mubr.f32.mxu0 0.0
        %3436 = vmatmul.mubr.f32.gmra.mrb[0].mxu0 %v3269
        %v3437 = vpop.f32.mrb[0].mxu0
        %v3438 = vadd.f32 0.0, %v3437
        %v3439 = vpop.f32.mrb[0].mxu0
        %3440 = vmatprep.mubr.f32.mxu0 0.0
        %3441 = vmatmul.mubr.f32.gmra.mrb[0].mxu0 %v3272
        %v3442 = vpop.f32.mrb[0].mxu0
        %v3443 = vadd.f32 0.0, %v3442
        %v3444 = vpop.f32.mrb[0].mxu0
        %3445 = vmatprep.mubr.f32.mxu0 0.0
        %3446 = vmatmul.mubr.f32.gmra.mrb[0].mxu0 %v3275
        %v3447 = vpop.f32.mrb[0].mxu0
        %v3448 = vadd.f32 0.0, %v3447
        %v3449 = vpop.f32.mrb[0].mxu0
        %3450 = vmatprep.mubr.f32.mxu0 0.0
        %3451 = vmatmul.mubr.f32.gmra.mrb[0].mxu0 %v3278
        %v3452 = vpop.f32.mrb[0].mxu0
        %v3453 = vadd.f32 0.0, %v3452
        %v3454 = vpop.f32.mrb[0].mxu0
        %3455 = vmatprep.mubr.f32.mxu0 0.0
        %3456 = vmatmul.mubr.f32.gmra.mrb[0].mxu0 %v3281
        %v3457 = vpop.f32.mrb[0].mxu0
        %v3458 = vadd.f32 0.0, %v3457
        %v3459 = vpop.f32.mrb[0].mxu0
        %3460 = vmatprep.mubr.f32.mxu0 0.0
        %3461 = vmatmul.mubr.f32.gmra.mrb[0].mxu0 %v3284
        %v3462 = vpop.f32.mrb[0].mxu0
        %v3463 = vadd.f32 0.0, %v3462
        %v3464 = vpop.f32.mrb[0].mxu0
        %3465 = vmatprep.mubr.f32.mxu0 0.0
        %3466 = vmatmul.mubr.f32.gmra.mrb[0].mxu0 %v3287
        %v3467 = vpop.f32.mrb[0].mxu0
        %v3468 = vadd.f32 0.0, %v3467
        %v3469 = vpop.f32.mrb[0].mxu0
        %3470 = vmatprep.mubr.f32.mxu0 0.0
        %3471 = vmatmul.mubr.f32.gmra.mrb[0].mxu0 %v3290
        %v3472 = vpop.f32.mrb[0].mxu0
        %v3473 = vadd.f32 0.0, %v3472
        %v3474 = vpop.f32.mrb[0].mxu0
        %3475 = vmatprep.mubr.f32.mxu0 0.0
        %3476 = vmatmul.mubr.f32.gmra.mrb[0].mxu0 %v3293
        %v3477 = vpop.f32.mrb[0].mxu0
        %v3478 = vadd.f32 0.0, %v3477
        %v3479 = vpop.f32.mrb[0].mxu0
        %3480 = vmatprep.mubr.f32.mxu0 0.0
        %3481 = vmatmul.mubr.f32.gmra.mrb[0].mxu0 %v3296
        %v3482 = vpop.f32.mrb[0].mxu0
        %v3483 = vadd.f32 0.0, %v3482
        %v3484 = vpop.f32.mrb[0].mxu0
        %3485 = vmatprep.mubr.f32.mxu0 0.0
        %3486 = vmatmul.mubr.f32.gmra.mrb[0].mxu0 %v3299
        %v3487 = vpop.f32.mrb[0].mxu0
        %v3488 = vadd.f32 0.0, %v3487
        %v3489 = vpop.f32.mrb[0].mxu0
        %3490 = vmatprep.mubr.f32.mxu0 0.0
        %3491 = vmatmul.mubr.f32.gmra.mrb[0].mxu0 %v3302
        %v3492 = vpop.f32.mrb[0].mxu0
        %v3493 = vadd.f32 0.0, %v3492
        %v3494 = vpop.f32.mrb[0].mxu0
        %3495 = vmatprep.mubr.f32.mxu0 0.0
        %3496 = vmatmul.mubr.f32.gmra.mrb[0].mxu0 %v3305
        %v3497 = vpop.f32.mrb[0].mxu0
        %v3498 = vadd.f32 0.0, %v3497
        %v3499 = vpop.f32.mrb[0].mxu0
        %3500 = vmatprep.mubr.f32.mxu0 0.0
        %3501 = vmatmul.mubr.f32.gmra.mrb[0].mxu0 %v3308
        %v3502 = vpop.f32.mrb[0].mxu0
        %v3503 = vadd.f32 0.0, %v3502
        %v3504 = vpop.f32.mrb[0].mxu0
        %3505 = vmatprep.mubr.f32.mxu0 0.0
        %3506 = vmatmul.mubr.f32.gmra.mrb[0].mxu0 %v3311
        %v3507 = vpop.f32.mrb[0].mxu0
        %v3508 = vadd.f32 0.0, %v3507
        %v3509 = vpop.f32.mrb[0].mxu0
        %3510 = vmatprep.mubr.f32.mxu0 0.0
        %3511 = vmatmul.mubr.f32.gmra.mrb[0].mxu0 %v3314
        %v3512 = vpop.f32.mrb[0].mxu0
        %v3513 = vadd.f32 0.0, %v3512
        %v3514 = vpop.f32.mrb[0].mxu0
        %3515 = vmatprep.mubr.f32.mxu0 0.0
        %3516 = vmatmul.mubr.f32.gmra.mrb[0].mxu0 %v3317
        %v3517 = vpop.f32.mrb[0].mxu0
        %v3518 = vadd.f32 0.0, %v3517
        %v3519 = vpop.f32.mrb[0].mxu0
        %3520 = vmatprep.mubr.f32.mxu0 0.0
        %3521 = vmatmul.mubr.f32.gmra.mrb[0].mxu0 %v3320
        %v3522 = vpop.f32.mrb[0].mxu0
        %v3523 = vadd.f32 0.0, %v3522
        %v3524 = vpop.f32.mrb[0].mxu0
        %3525 = vmatprep.mubr.f32.mxu0 0.0
        %3526 = vmatmul.mubr.f32.gmra.mrb[0].mxu0 %v3323
        %v3527 = vpop.f32.mrb[0].mxu0
        %v3528 = vadd.f32 0.0, %v3527
        %v3529 = vpop.f32.mrb[0].mxu0
        %3530 = vmatprep.mubr.f32.mxu0 0.0
        %3531 = vmatmul.mubr.f32.gmra.mrb[0].mxu0 %v3326
        %v3532 = vpop.f32.mrb[0].mxu0
        %v3533 = vadd.f32 0.0, %v3532
        %v3534 = vpop.f32.mrb[0].mxu0
        %3535 = vmatprep.mubr.f32.mxu0 0.0
        %3536 = vmatmul.mubr.f32.gmra.mrb[0].mxu0 %v3329
        %v3537 = vpop.f32.mrb[0].mxu0
        %v3538 = vadd.f32 0.0, %v3537
        %v3539 = vpop.f32.mrb[0].mxu0
        %3540 = vmatprep.mubr.f32.mxu0 0.0
        %3541 = vmatmul.mubr.f32.gmra.mrb[0].mxu0 %v3332
        %v3542 = vpop.f32.mrb[0].mxu0
        %v3543 = vadd.f32 0.0, %v3542
        %v3544 = vpop.f32.mrb[0].mxu0
        %3545 = vmatprep.mubr.f32.mxu0 0.0
        %3546 = vmatmul.mubr.f32.gmra.mrb[0].mxu0 %v3335
        %v3547 = vpop.f32.mrb[0].mxu0
        %v3548 = vadd.f32 0.0, %v3547
        %v3549 = vpop.f32.mrb[0].mxu0
        %3550 = vmatprep.mubr.f32.mxu0 0.0
        %3551 = vmatmul.mubr.f32.gmra.mrb[0].mxu0 %v3338
        %v3552 = vpop.f32.mrb[0].mxu0
        %v3553 = vadd.f32 0.0, %v3552
        %v3554 = vpop.f32.mrb[0].mxu0
        %3555 = vmatprep.mubr.f32.mxu0 0.0
        %3556 = vmatmul.mubr.f32.gmra.mrb[0].mxu0 %v3341
        %v3557 = vpop.f32.mrb[0].mxu0
        %v3558 = vadd.f32 0.0, %v3557
        %v3559 = vpop.f32.mrb[0].mxu0
        %3560 = vmatprep.mubr.f32.mxu0 0.0
        %3561 = vmatmul.mubr.f32.gmra.mrb[0].mxu0 %v3344
        %v3562 = vpop.f32.mrb[0].mxu0
        %v3563 = vadd.f32 0.0, %v3562
        %v3564 = vpop.f32.mrb[0].mxu0
        %3565 = vmatprep.mubr.f32.mxu0 0.0
        %3566 = vmatmul.mubr.f32.gmra.mrb[0].mxu0 %v3347
        %v3567 = vpop.f32.mrb[0].mxu0
        %v3568 = vadd.f32 0.0, %v3567
        %v3569 = vpop.f32.mrb[0].mxu0
        %3570 = vmatprep.mubr.f32.mxu0 0.0
        %3571 = vmatmul.mubr.f32.gmra.mrb[0].mxu0 %v3350
        %v3572 = vpop.f32.mrb[0].mxu0
        %v3573 = vadd.f32 0.0, %v3572
        %v3574 = vpop.f32.mrb[0].mxu0
        %3575 = vmatprep.mubr.f32.mxu0 0.0
        %3576 = vmatmul.mubr.f32.gmra.mrb[0].mxu0 %v3353
        %v3577 = vpop.f32.mrb[0].mxu0
        %v3578 = vadd.f32 0.0, %v3577
        %v3579 = vpop.f32.mrb[0].mxu0
        %3580 = vmatprep.mubr.f32.mxu0 0.0
        %3581 = vmatmul.mubr.f32.gmra.mrb[0].mxu0 %v3356
        %v3582 = vpop.f32.mrb[0].mxu0
        %v3583 = vadd.f32 0.0, %v3582
        %v3584 = vpop.f32.mrb[0].mxu0
        %3585 = vdwg.mxu0
        %v3586 = vadd.f32 %v3196, %v3428
        %v3587 = vadd.f32 %v3197, %v3433
        %v3588 = vadd.f32 %v3198, %v3438
        %v3589 = vadd.f32 %v3199, %v3443
        %v3590 = vadd.f32 %v3200, %v3448
        %v3591 = vadd.f32 %v3201, %v3453
        %v3592 = vadd.f32 %v3202, %v3458
        %v3593 = vadd.f32 %v3203, %v3463
        %v3594 = vadd.f32 %v3204, %v3468
        %v3595 = vadd.f32 %v3205, %v3473
        %v3596 = vadd.f32 %v3206, %v3478
        %v3597 = vadd.f32 %v3207, %v3483
        %v3598 = vadd.f32 %v3208, %v3488
        %v3599 = vadd.f32 %v3209, %v3493
        %v3600 = vadd.f32 %v3210, %v3498
        %v3601 = vadd.f32 %v3211, %v3503
        %v3602 = vadd.f32 %v3212, %v3508
        %v3603 = vadd.f32 %v3213, %v3513
        %v3604 = vadd.f32 %v3214, %v3518
        %v3605 = vadd.f32 %v3215, %v3523
        %v3606 = vadd.f32 %v3216, %v3528
        %v3607 = vadd.f32 %v3217, %v3533
        %v3608 = vadd.f32 %v3218, %v3538
        %v3609 = vadd.f32 %v3219, %v3543
        %v3610 = vadd.f32 %v3220, %v3548
        %v3611 = vadd.f32 %v3221, %v3553
        %v3612 = vadd.f32 %v3222, %v3558
        %v3613 = vadd.f32 %v3223, %v3563
        %v3614 = vadd.f32 %v3224, %v3568
        %v3615 = vadd.f32 %v3225, %v3573
        %v3616 = vadd.f32 %v3226, %v3578
        %v3617 = vadd.f32 %v3227, %v3583
        %v3618 = vld [vmem:[%s2] sm:$0x1]
        %v3620 = vlaneseq
        %v3621 = vshrl.u32 %v3620, 7
        %v3622 = vsub.s32 0, %v3621
        %v3623 = vrot.slane %v3618, %v3622
        %v3625 = vadd.f32 %v3586, %v3623
        %v3626 = vadd.f32 %v3587, %v3623
        %v3627 = vadd.f32 %v3588, %v3623
        %v3628 = vadd.f32 %v3589, %v3623
        %v3629 = vadd.f32 %v3590, %v3623
        %v3630 = vadd.f32 %v3591, %v3623
        %v3631 = vadd.f32 %v3592, %v3623
        %v3632 = vadd.f32 %v3593, %v3623
        %v3633 = vadd.f32 %v3594, %v3623
        %v3634 = vadd.f32 %v3595, %v3623
        %v3635 = vadd.f32 %v3596, %v3623
        %v3636 = vadd.f32 %v3597, %v3623
        %v3637 = vadd.f32 %v3598, %v3623
        %v3638 = vadd.f32 %v3599, %v3623
        %v3639 = vadd.f32 %v3600, %v3623
        %v3640 = vadd.f32 %v3601, %v3623
        %v3641 = vadd.f32 %v3602, %v3623
        %v3642 = vadd.f32 %v3603, %v3623
        %v3643 = vadd.f32 %v3604, %v3623
        %v3644 = vadd.f32 %v3605, %v3623
        %v3645 = vadd.f32 %v3606, %v3623
        %v3646 = vadd.f32 %v3607, %v3623
        %v3647 = vadd.f32 %v3608, %v3623
        %v3648 = vadd.f32 %v3609, %v3623
        %v3649 = vadd.f32 %v3610, %v3623
        %v3650 = vadd.f32 %v3611, %v3623
        %v3651 = vadd.f32 %v3612, %v3623
        %v3652 = vadd.f32 %v3613, %v3623
        %v3653 = vadd.f32 %v3614, %v3623
        %v3654 = vadd.f32 %v3615, %v3623
        %v3655 = vadd.f32 %v3616, %v3623
        %v3656 = vadd.f32 %v3617, %v3623
        %v3657 = vmax.f32 %v3625, 0.0
        %v3658 = vmax.f32 %v3626, 0.0
        %v3659 = vmax.f32 %v3627, 0.0
        %v3660 = vmax.f32 %v3628, 0.0
        %v3661 = vmax.f32 %v3629, 0.0
        %v3662 = vmax.f32 %v3630, 0.0
        %v3663 = vmax.f32 %v3631, 0.0
        %v3664 = vmax.f32 %v3632, 0.0
        %v3665 = vmax.f32 %v3633, 0.0
        %v3666 = vmax.f32 %v3634, 0.0
        %v3667 = vmax.f32 %v3635, 0.0
        %v3668 = vmax.f32 %v3636, 0.0
        %v3669 = vmax.f32 %v3637, 0.0
        %v3670 = vmax.f32 %v3638, 0.0
        %v3671 = vmax.f32 %v3639, 0.0
        %v3672 = vmax.f32 %v3640, 0.0
        %v3673 = vmax.f32 %v3641, 0.0
        %v3674 = vmax.f32 %v3642, 0.0
        %v3675 = vmax.f32 %v3643, 0.0
        %v3676 = vmax.f32 %v3644, 0.0
        %v3677 = vmax.f32 %v3645, 0.0
        %v3678 = vmax.f32 %v3646, 0.0
        %v3679 = vmax.f32 %v3647, 0.0
        %v3680 = vmax.f32 %v3648, 0.0
        %v3681 = vmax.f32 %v3649, 0.0
        %v3682 = vmax.f32 %v3650, 0.0
        %v3683 = vmax.f32 %v3651, 0.0
        %v3684 = vmax.f32 %v3652, 0.0
        %v3685 = vmax.f32 %v3653, 0.0
        %v3686 = vmax.f32 %v3654, 0.0
        %v3687 = vmax.f32 %v3655, 0.0
        %v3688 = vmax.f32 %v3656, 0.0
        %vm3689 = vcmask 64512
        %3690 = vst.msk [vmem:[#allocation2] sm:$0xff] %vm3689, %v3657
        %3691 = vst.msk [vmem:[#allocation2 + $0x8] sm:$0xff] %vm3689, %v3658
        %3692 = vst.msk [vmem:[#allocation2 + $0x10] sm:$0xff] %vm3689, %v3659
        %3693 = vst.msk [vmem:[#allocation2 + $0x18] sm:$0xff] %vm3689, %v3660
        %3694 = vst.msk [vmem:[#allocation2 + $0x20] sm:$0xff] %vm3689, %v3661
        %3695 = vst.msk [vmem:[#allocation2 + $0x28] sm:$0xff] %vm3689, %v3662
        %3696 = vst.msk [vmem:[#allocation2 + $0x30] sm:$0xff] %vm3689, %v3663
        %3697 = vst.msk [vmem:[#allocation2 + $0x38] sm:$0xff] %vm3689, %v3664
        %3698 = vst.msk [vmem:[#allocation2 + $0x40] sm:$0xff] %vm3689, %v3665
        %3699 = vst.msk [vmem:[#allocation2 + $0x48] sm:$0xff] %vm3689, %v3666
        %3700 = vst.msk [vmem:[#allocation2 + $0x50] sm:$0xff] %vm3689, %v3667
        %3701 = vst.msk [vmem:[#allocation2 + $0x58] sm:$0xff] %vm3689, %v3668
        %3702 = vst.msk [vmem:[#allocation2 + $0x60] sm:$0xff] %vm3689, %v3669
        %3703 = vst.msk [vmem:[#allocation2 + $0x68] sm:$0xff] %vm3689, %v3670
        %3704 = vst.msk [vmem:[#allocation2 + $0x70] sm:$0xff] %vm3689, %v3671
        %3705 = vst.msk [vmem:[#allocation2 + $0x78] sm:$0xff] %vm3689, %v3672
        %3706 = vst.msk [vmem:[#allocation2 + $0x80] sm:$0xff] %vm3689, %v3673
        %3707 = vst.msk [vmem:[#allocation2 + $0x88] sm:$0xff] %vm3689, %v3674
        %3708 = vst.msk [vmem:[#allocation2 + $0x90] sm:$0xff] %vm3689, %v3675
        %3709 = vst.msk [vmem:[#allocation2 + $0x98] sm:$0xff] %vm3689, %v3676
        %3710 = vst.msk [vmem:[#allocation2 + $0xa0] sm:$0xff] %vm3689, %v3677
        %3711 = vst.msk [vmem:[#allocation2 + $0xa8] sm:$0xff] %vm3689, %v3678
        %3712 = vst.msk [vmem:[#allocation2 + $0xb0] sm:$0xff] %vm3689, %v3679
        %3713 = vst.msk [vmem:[#allocation2 + $0xb8] sm:$0xff] %vm3689, %v3680
        %3714 = vst.msk [vmem:[#allocation2 + $0xc0] sm:$0xff] %vm3689, %v3681
        %3715 = vst.msk [vmem:[#allocation2 + $0xc8] sm:$0xff] %vm3689, %v3682
        %3716 = vst.msk [vmem:[#allocation2 + $0xd0] sm:$0xff] %vm3689, %v3683
        %3717 = vst.msk [vmem:[#allocation2 + $0xd8] sm:$0xff] %vm3689, %v3684
        %3718 = vst.msk [vmem:[#allocation2 + $0xe0] sm:$0xff] %vm3689, %v3685
        %3719 = vst.msk [vmem:[#allocation2 + $0xe8] sm:$0xff] %vm3689, %v3686
        %3720 = vst.msk [vmem:[#allocation2 + $0xf0] sm:$0xff] %vm3689, %v3687
        %3721 = vst.msk [vmem:[#allocation2 + $0xf8] sm:$0xff] %vm3689, %v3688
        %v3722 = vld [vmem:[#allocation2] ss:$2 sm:$0xff]
        %s3723 = scalar_lea.vmem [#allocation2], 16
        %v3724 = vld [vmem:[%s3723] ss:$2 sm:$0xff]
        %s3725 = scalar_lea.vmem [#allocation2], 32
        %v3726 = vld [vmem:[%s3725] ss:$2 sm:$0xff]
        %s3727 = scalar_lea.vmem [#allocation2], 48
        %v3728 = vld [vmem:[%s3727] ss:$2 sm:$0xff]
        %s3729 = scalar_lea.vmem [#allocation2], 64
        %v3730 = vld [vmem:[%s3729] ss:$2 sm:$0xff]
        %s3731 = scalar_lea.vmem [#allocation2], 80
        %v3732 = vld [vmem:[%s3731] ss:$2 sm:$0xff]
        %s3733 = scalar_lea.vmem [#allocation2], 96
        %v3734 = vld [vmem:[%s3733] ss:$2 sm:$0xff]
        %s3735 = scalar_lea.vmem [#allocation2], 112
        %v3736 = vld [vmem:[%s3735] ss:$2 sm:$0xff]
        %s3737 = scalar_lea.vmem [#allocation2], 128
        %v3738 = vld [vmem:[%s3737] ss:$2 sm:$0xff]
        %s3739 = scalar_lea.vmem [#allocation2], 144
        %v3740 = vld [vmem:[%s3739] ss:$2 sm:$0xff]
        %s3741 = scalar_lea.vmem [#allocation2], 160
        %v3742 = vld [vmem:[%s3741] ss:$2 sm:$0xff]
        %s3743 = scalar_lea.vmem [#allocation2], 176
        %v3744 = vld [vmem:[%s3743] ss:$2 sm:$0xff]
        %s3745 = scalar_lea.vmem [#allocation2], 192
        %v3746 = vld [vmem:[%s3745] ss:$2 sm:$0xff]
        %s3747 = scalar_lea.vmem [#allocation2], 208
        %v3748 = vld [vmem:[%s3747] ss:$2 sm:$0xff]
        %s3749 = scalar_lea.vmem [#allocation2], 224
        %v3750 = vld [vmem:[%s3749] ss:$2 sm:$0xff]
        %s3751 = scalar_lea.vmem [#allocation2], 240
        %v3752 = vld [vmem:[%s3751] ss:$2 sm:$0xff]
        %s3753 = scalar_lea.vmem [#allocation2], 1
        %v3754 = vld [vmem:[%s3753] ss:$2 sm:$0xff]
        %s3755 = scalar_lea.vmem [#allocation2], 17
        %v3756 = vld [vmem:[%s3755] ss:$2 sm:$0xff]
        %s3757 = scalar_lea.vmem [#allocation2], 33
        %v3758 = vld [vmem:[%s3757] ss:$2 sm:$0xff]
        %s3759 = scalar_lea.vmem [#allocation2], 49
        %v3760 = vld [vmem:[%s3759] ss:$2 sm:$0xff]
        %s3761 = scalar_lea.vmem [#allocation2], 65
        %v3762 = vld [vmem:[%s3761] ss:$2 sm:$0xff]
        %s3763 = scalar_lea.vmem [#allocation2], 81
        %v3764 = vld [vmem:[%s3763] ss:$2 sm:$0xff]
        %s3765 = scalar_lea.vmem [#allocation2], 97
        %v3766 = vld [vmem:[%s3765] ss:$2 sm:$0xff]
        %s3767 = scalar_lea.vmem [#allocation2], 113
        %v3768 = vld [vmem:[%s3767] ss:$2 sm:$0xff]
        %s3769 = scalar_lea.vmem [#allocation2], 129
        %v3770 = vld [vmem:[%s3769] ss:$2 sm:$0xff]
        %s3771 = scalar_lea.vmem [#allocation2], 145
        %v3772 = vld [vmem:[%s3771] ss:$2 sm:$0xff]
        %s3773 = scalar_lea.vmem [#allocation2], 161
        %v3774 = vld [vmem:[%s3773] ss:$2 sm:$0xff]
        %s3775 = scalar_lea.vmem [#allocation2], 177
        %v3776 = vld [vmem:[%s3775] ss:$2 sm:$0xff]
        %s3777 = scalar_lea.vmem [#allocation2], 193
        %v3778 = vld [vmem:[%s3777] ss:$2 sm:$0xff]
        %s3779 = scalar_lea.vmem [#allocation2], 209
        %v3780 = vld [vmem:[%s3779] ss:$2 sm:$0xff]
        %s3781 = scalar_lea.vmem [#allocation2], 225
        %v3782 = vld [vmem:[%s3781] ss:$2 sm:$0xff]
        %s3783 = scalar_lea.vmem [#allocation2], 241
        %v3784 = vld [vmem:[%s3783] ss:$2 sm:$0xff]
        %v3785 = vmax.f32 %v3722, %v3754
        %v3786 = vmax.f32 %v3724, %v3756
        %v3787 = vmax.f32 %v3726, %v3758
        %v3788 = vmax.f32 %v3728, %v3760
        %v3789 = vmax.f32 %v3730, %v3762
        %v3790 = vmax.f32 %v3732, %v3764
        %v3791 = vmax.f32 %v3734, %v3766
        %v3792 = vmax.f32 %v3736, %v3768
        %v3793 = vmax.f32 %v3738, %v3770
        %v3794 = vmax.f32 %v3740, %v3772
        %v3795 = vmax.f32 %v3742, %v3774
        %v3796 = vmax.f32 %v3744, %v3776
        %v3797 = vmax.f32 %v3746, %v3778
        %v3798 = vmax.f32 %v3748, %v3780
        %v3799 = vmax.f32 %v3750, %v3782
        %v3800 = vmax.f32 %v3752, %v3784
        %v3801 = vmax.f32 %v3785, %v3786
        %v3802 = vmax.f32 %v3787, %v3788
        %v3803 = vmax.f32 %v3789, %v3790
        %v3804 = vmax.f32 %v3791, %v3792
        %v3805 = vmax.f32 %v3793, %v3794
        %v3806 = vmax.f32 %v3795, %v3796
        %v3807 = vmax.f32 %v3797, %v3798
        %v3808 = vmax.f32 %v3799, %v3800
        %3809 = vst.msk [vmem:[%s163] sm:$0xff] %vm3689, %v3801
        %3810 = vst.msk [vmem:[%s163 + $0x8] sm:$0xff] %vm3689, %v3802
        %3811 = vst.msk [vmem:[%s163 + $0x10] sm:$0xff] %vm3689, %v3803
        %3812 = vst.msk [vmem:[%s163 + $0x18] sm:$0xff] %vm3689, %v3804
        %3813 = vst.msk [vmem:[%s163 + $0x20] sm:$0xff] %vm3689, %v3805
        %3814 = vst.msk [vmem:[%s163 + $0x28] sm:$0xff] %vm3689, %v3806
        %3815 = vst.msk [vmem:[%s163 + $0x30] sm:$0xff] %vm3689, %v3807
        %3816 = vst.msk [vmem:[%s163 + $0x38] sm:$0xff] %vm3689, %v3808
        %s3817 = sand.u32 %s93, 1
        %s3818 = scalar_lea.sflag [#allocation4], %s3817
        %s3819 = sand.u32 %s93, 1
        %s3820 = smul.addr %s3819, 64
        %s3821 = scalar_lea.vmem [#allocation3], %s3820
        // Predicated region
        $region33: #{tpu_custom_call.1} parent=31 // pred_check
          %p3822 = pneg %p103
        $region34: #{tpu_custom_call.1} parent=31 // pred_check_branch
          %3824 = sbr.rel (%p3822) target = $region36
        $region35: #{tpu_custom_call.1} parent=31 // pred_region
          %s3826 = ssub.s32 1024, 1024
          %3827 = vsyncadd %s3818, %s3826
          %s3828 = smul.addr %s17, 8
          %s3829 = smul.addr %s3828, 128
          %s3830 = scalar_lea.hbm %s3, %s3829
          %s3831 = sshll.u32 %s3821, 4
          %s3832 = int_to_ptr.vmem [resolvable:$true] %s3831
          %3837 = dma.vmem_to_hbm [thread:$0]  %s3832, 1024, %s3830, %s3818, 128, 128, 8
        $region36: #{tpu_custom_call.1} parent=31 // pred_fallthru
          _
      $region32: #{tpu_custom_call.1} parent=5 // pred_fallthru
        _
      %p3838 = scmp.le.s32.totalorder 2, %s12
      // Predicated region
      $region37: #{tpu_custom_call.1} parent=5 // pred_check
        %p3839 = pneg %p3838
      $region38: #{tpu_custom_call.1} parent=5 // pred_check_branch
        %3841 = sbr.rel (%p3839) target = $region40
      $region39: #{tpu_custom_call.1} parent=5 // pred_region
        %s3842 = ssub.s32 %s12, 2
        // Predicated region
        $region41: #{tpu_custom_call.1} parent=39 // pred_check
          %p3843 = pneg %p109
        $region42: #{tpu_custom_call.1} parent=39 // pred_check_branch
          %3845 = sbr.rel (%p3843) target = $region44
        $region43: #{tpu_custom_call.1} parent=39 // pred_region
          %s3846 = sand.u32 %s94, 1
          %s3847 = scalar_lea.sflag [#allocation4], %s3846
          %s3848 = sand.u32 %s94, 1
          %s3849 = smul.addr %s3848, 64
          %s3850 = scalar_lea.vmem [#allocation3], %s3849
          %3851 = dma.done %s3847, 1024
        $region44: #{tpu_custom_call.1} parent=39 // pred_fallthru
          _
      $region40: #{tpu_custom_call.1} parent=5 // pred_fallthru
        _
    $region6: #{tpu_custom_call.1} parent=1 // loop_footer
      %s16 = sadd.s32 1, %s12
    $region7: #{tpu_custom_call.1} parent=1 // loop_footer_branch
      %11 = sbr.rel target = $region3
    $region8: #{tpu_custom_call.1} parent=1 // loop_exit
      _
    %3852 = vsyncpa [#allocation4], 1
    %s3853 = scalar_lea.sflag [#allocation4], 1
    %3854 = vsyncpa %s3853, 1

</llo_original>
